<compile_context>
chip_gen: v7x
topology: tpu7x:2x2x1
jax: 0.10.0
libtpu: 0.0.40
codegen_flags: <defaults>
</compile_context>

<pallas_src>
import math

import jax
import jax.numpy as jnp
from jax.experimental import pallas as pl
from jax.experimental.pallas import tpu as pltpu

# ------------------- small synthetic config (lane-dense dims) ---------------
BATCH = 2
AUDIO_LEN = 90
CONV0_CH, CONV0_K, CONV0_STRIDE = 128, 10, 5     # real: 512 ch, 7 conv layers
CONV1_CH, CONV1_K, CONV1_STRIDE = 128, 3, 2
HIDDEN = 128                                     # real: 768
NUM_HEADS = 4
HEAD_DIM = HIDDEN // NUM_HEADS
INTERMEDIATE = 256                               # real: 3072
NUM_LAYERS = 2                                   # real: 12
POS_CONV_KERNEL = 4                              # real: 128
POS_CONV_GROUPS = 4                              # real: 16
CLS_HIDDEN = 256
NUM_CLASSES = 2
LANES = 128
LN_EPS = 1e-5

T0 = (AUDIO_LEN - CONV0_K) // CONV0_STRIDE + 1   # 17
T = (T0 - CONV1_K) // CONV1_STRIDE + 1           # 8
CONV0_KPAD = 16                                  # pad conv0 K (10) -> 8-aligned


# --------------------------- in-kernel helpers -------------------------------
def _bf16_dot(a, b):
    """MXU matmul: bf16 operands, f32 accumulation."""
    return jnp.dot(a.astype(jnp.bfloat16), b.astype(jnp.bfloat16),
                   preferred_element_type=jnp.float32)


def _gelu(x):
    return jax.nn.gelu(x, approximate=True)


def _layernorm(x, g, b):
    mu = jnp.mean(x, axis=-1, keepdims=True)
    var = jnp.mean(jnp.square(x - mu), axis=-1, keepdims=True)
    return (x - mu) * jax.lax.rsqrt(var + LN_EPS) * g + b


# ------------------------------- kernels -------------------------------------
def _conv0_kernel(cols_ref, w_ref, g_ref, b_ref, o_ref):
    """conv0 (im2col matmul, bias-free) + GroupNorm(groups=C) over time + GELU.

    Channels stay on lanes; the GroupNorm reduction runs over the sublane
    (time) axis — no transposes, no HBM round-trips."""
    y = _bf16_dot(cols_ref[0], w_ref[...])                       # [T0, C]
    mu = jnp.mean(y, axis=0, keepdims=True)                      # per channel over time
    var = jnp.mean(jnp.square(y - mu), axis=0, keepdims=True)
    y = (y - mu) * jax.lax.rsqrt(var + LN_EPS) * g_ref[...] + b_ref[...]
    o_ref[0] = _gelu(y)


def _embed_kernel(cols_ref, wc_ref, fpg_ref, fpb_ref, wfp_ref, bfp_ref,
                  wpos_ref, bpos_ref, elg_ref, elb_ref, o_ref):
    """conv1+GELU -> feature projection (LN, Linear) -> grouped positional conv
    (block-diagonal taps, pad k//2, trim last) + GELU + residual -> encoder LN."""
    x = _gelu(_bf16_dot(cols_ref[0], wc_ref[...]))               # [T, C] conv1 + GELU
    x = _layernorm(x, fpg_ref[...], fpb_ref[...])                # feature-proj LN
    h = _bf16_dot(x, wfp_ref[...]) + bfp_ref[...]                # Linear(C, H)

    # positional conv: zero-pad time by k//2 each side, sum over 4 taps of a
    # block-diagonal [H, H] weight (grouped conv folded), keep first T steps.
    zpad = jnp.zeros((POS_CONV_KERNEL // 2, HIDDEN), jnp.float32)
    hp = jnp.concatenate([zpad, h, zpad], axis=0)                # [T + 4, H]
    pos = None
    for k in range(POS_CONV_KERNEL):
        contrib = _bf16_dot(hp[k:k + T, :], wpos_ref[k])
        pos = contrib if pos is None else pos + contrib
    h = h + _gelu(pos + bpos_ref[...])

    o_ref[0] = _layernorm(h, elg_ref[...], elb_ref[...])         # encoder entry LN


def _encoder_kernel(h_ref, wqkv_ref, bqkv_ref, wo_ref, bo_ref, l1g_ref, l1b_ref,
                    win_ref, bin_ref, wout_ref, bout_ref, l2g_ref, l2b_ref,
                    w1_ref, b1_ref, w2_ref, b2_ref, o_ref):
    """Whole post-norm encoder stack + mean-pool + classifier head, one batch
    element per grid step, all intermediates resident in VMEM/vregs."""
    x = h_ref[0]                                                 # [T, H]
    scale = 1.0 / math.sqrt(HEAD_DIM)
    for l in range(NUM_LAYERS):
        qkv = _bf16_dot(x, wqkv_ref[l]) + bqkv_ref[l]            # fused QKV [T, 3H]
        heads = []
        for hh in range(NUM_HEADS):
            q = qkv[:, hh * HEAD_DIM:(hh + 1) * HEAD_DIM]
            k = qkv[:, HIDDEN + hh * HEAD_DIM:HIDDEN + (hh + 1) * HEAD_DIM]
            v = qkv[:, 2 * HIDDEN + hh * HEAD_DIM:2 * HIDDEN + (hh + 1) * HEAD_DIM]
            s = jax.lax.dot_general(
                q.astype(jnp.bfloat16), k.astype(jnp.bfloat16),
                (((1,), (1,)), ((), ())),
                preferred_element_type=jnp.float32) * scale      # [T, T]
            m = jnp.max(s, axis=-1, keepdims=True)
            p = jnp.exp(s - m)
            p = p * pl.reciprocal(jnp.sum(p, axis=-1, keepdims=True), approx=True)
            heads.append(_bf16_dot(p, v))                        # [T, DH]
        ctx = jnp.concatenate(heads, axis=-1)                    # [T, H]
        attn = _bf16_dot(ctx, wo_ref[l]) + bo_ref[l]
        x = _layernorm(x + attn, l1g_ref[l], l1b_ref[l])         # post-norm
        ff = _gelu(_bf16_dot(x, win_ref[l]) + bin_ref[l])
        ff = _bf16_dot(ff, wout_ref[l]) + bout_ref[l]
        x = _layernorm(x + ff, l2g_ref[l], l2b_ref[l])

    # mean pool over time + classifier head (dropouts are identity in eval)
    pooled = jnp.sum(x, axis=0, keepdims=True) * (1.0 / T)       # [1, H]
    z = jnp.maximum(_bf16_dot(pooled, w1_ref[...]) + b1_ref[...], 0.0)
    logits = _bf16_dot(z, w2_ref[...]) + b2_ref[...]             # [1, 128] lane-dense
    o_ref[0] = jnp.broadcast_to(logits, (T, LANES))              # wrapper slices row 0


# ------------------------------- wrappers -------------------------------------
_PARALLEL = pltpu.CompilerParams(dimension_semantics=("parallel",))


def _im2col_1d(x, kernel, stride):
    """x: [B, T, C] -> [B, T_out, kernel * C] (XLA glue)."""
    B, Tin, C = x.shape
    t_out = (Tin - kernel) // stride + 1
    idx = jnp.arange(t_out)[:, None] * stride + jnp.arange(kernel)[None, :]
    return x[:, idx, :].reshape(B, t_out, kernel * C)


def conv0_block(cols0, pk):
    B = cols0.shape[0]
    return pl.pallas_call(
        _conv0_kernel,
        out_shape=jax.ShapeDtypeStruct((B, T0, CONV0_CH), jnp.float32),
        grid=(B,),
        in_specs=[pl.BlockSpec((1, T0, CONV0_KPAD), lambda i: (i, 0, 0)),
                  pl.BlockSpec((CONV0_KPAD, CONV0_CH), lambda i: (0, 0)),
                  pl.BlockSpec((1, CONV0_CH), lambda i: (0, 0)),
                  pl.BlockSpec((1, CONV0_CH), lambda i: (0, 0))],
        out_specs=pl.BlockSpec((1, T0, CONV0_CH), lambda i: (i, 0, 0)),
        compiler_params=_PARALLEL,
    )(cols0, pk["conv0_w"], pk["conv0_gn_g"], pk["conv0_gn_b"])


def embed_block(cols1, pk):
    B = cols1.shape[0]
    kc = CONV1_K * CONV0_CH
    return pl.pallas_call(
        _embed_kernel,
        out_shape=jax.ShapeDtypeStruct((B, T, HIDDEN), jnp.float32),
        grid=(B,),
        in_specs=[pl.BlockSpec((1, T, kc), lambda i: (i, 0, 0)),
                  pl.BlockSpec((kc, CONV1_CH), lambda i: (0, 0)),
                  pl.BlockSpec((1, CONV1_CH), lambda i: (0, 0)),
                  pl.BlockSpec((1, CONV1_CH), lambda i: (0, 0)),
                  pl.BlockSpec((CONV1_CH, HIDDEN), lambda i: (0, 0)),
                  pl.BlockSpec((1, HIDDEN), lambda i: (0, 0)),
                  pl.BlockSpec((POS_CONV_KERNEL, HIDDEN, HIDDEN), lambda i: (0, 0, 0)),
                  pl.BlockSpec((1, HIDDEN), lambda i: (0, 0)),
                  pl.BlockSpec((1, HIDDEN), lambda i: (0, 0)),
                  pl.BlockSpec((1, HIDDEN), lambda i: (0, 0))],
        out_specs=pl.BlockSpec((1, T, HIDDEN), lambda i: (i, 0, 0)),
        compiler_params=_PARALLEL,
    )(cols1, pk["conv1_w"], pk["fp_ln_g"], pk["fp_ln_b"], pk["fp_w"], pk["fp_b"],
      pk["pos_w"], pk["pos_b"], pk["enc_ln_g"], pk["enc_ln_b"])


def encoder_block(h, pk):
    B = h.shape[0]
    L = NUM_LAYERS

    def full(shape):  # weight blocks: whole array, constant index map
        return pl.BlockSpec(shape, lambda i, _n=len(shape): (0,) * _n)

    out = pl.pallas_call(
        _encoder_kernel,
        out_shape=jax.ShapeDtypeStruct((B, T, LANES), jnp.float32),
        grid=(B,),
        in_specs=[pl.BlockSpec((1, T, HIDDEN), lambda i: (i, 0, 0)),
                  full((L, HIDDEN, 3 * HIDDEN)), full((L, 1, 3 * HIDDEN)),
                  full((L, HIDDEN, HIDDEN)), full((L, 1, HIDDEN)),
                  full((L, 1, HIDDEN)), full((L, 1, HIDDEN)),
                  full((L, HIDDEN, INTERMEDIATE)), full((L, 1, INTERMEDIATE)),
                  full((L, INTERMEDIATE, HIDDEN)), full((L, 1, HIDDEN)),
                  full((L, 1, HIDDEN)), full((L, 1, HIDDEN)),
                  full((HIDDEN, CLS_HIDDEN)), full((1, CLS_HIDDEN)),
                  full((CLS_HIDDEN, LANES)), full((1, LANES))],
        out_specs=pl.BlockSpec((1, T, LANES), lambda i: (i, 0, 0)),
        compiler_params=_PARALLEL,
    )(h, pk["wqkv"], pk["bqkv"], pk["wo"], pk["bo"], pk["ln1_g"], pk["ln1_b"],
      pk["w_in"], pk["b_in"], pk["w_out"], pk["b_out"], pk["ln2_g"], pk["ln2_b"],
      pk["cls_w1"], pk["cls_b1"], pk["cls_w2"], pk["cls_b2"])
    return out[:, 0, :NUM_CLASSES]


def wav2vec2_classifier_forward(wave, pk):
    """wave: [B, AUDIO_LEN] float32 audio -> logits [B, NUM_CLASSES]."""
    cols0 = _im2col_1d(wave[:, :, None], CONV0_K, CONV0_STRIDE)        # [B, T0, 10]
    cols0 = jnp.pad(cols0, ((0, 0), (0, 0), (0, CONV0_KPAD - CONV0_K)))
    y0 = conv0_block(cols0, pk)                                        # [B, T0, 128]
    cols1 = _im2col_1d(y0, CONV1_K, CONV1_STRIDE)                      # [B, T, 384]
    h = embed_block(cols1, pk)                                         # [B, T, H]
    return encoder_block(h, pk)                                        # [B, 2]


# --------------------------- deterministic params -----------------------------
def init_params(key):
    def nrm(k, shape, scale=0.05):
        return scale * jax.random.normal(k, shape, jnp.float32)

    keys = iter(jax.random.split(key, 64))
    cg = HIDDEN // POS_CONV_GROUPS
    p = {
        "conv0": {"w": nrm(next(keys), (CONV0_K, CONV0_CH)),           # conv_bias=False
                  "gn_g": jnp.ones((CONV0_CH,), jnp.float32),
                  "gn_b": jnp.zeros((CONV0_CH,), jnp.float32)},
        "conv1": {"w": nrm(next(keys), (CONV1_K * CONV0_CH, CONV1_CH))},
        "fp": {"ln_g": jnp.ones((CONV1_CH,), jnp.float32),
               "ln_b": jnp.zeros((CONV1_CH,), jnp.float32),
               "w": nrm(next(keys), (CONV1_CH, HIDDEN)),
               "b": jnp.zeros((HIDDEN,), jnp.float32)},
        "pos_conv": {"w": nrm(next(keys), (POS_CONV_GROUPS, POS_CONV_KERNEL, cg, cg)),
                     "b": jnp.zeros((POS_CONV_GROUPS, cg), jnp.float32)},
        "enc_ln_g": jnp.ones((HIDDEN,), jnp.float32),
        "enc_ln_b": jnp.zeros((HIDDEN,), jnp.float32),
        "cls": {"w1": nrm(next(keys), (HIDDEN, CLS_HIDDEN)),
                "b1": jnp.zeros((CLS_HIDDEN,), jnp.float32),
                "w2": nrm(next(keys), (CLS_HIDDEN, NUM_CLASSES)),
                "b2": jnp.zeros((NUM_CLASSES,), jnp.float32)},
    }
    layers = []
    for _ in range(NUM_LAYERS):
        layers.append({
            "wq": nrm(next(keys), (HIDDEN, HIDDEN)), "bq": jnp.zeros((HIDDEN,), jnp.float32),
            "wk": nrm(next(keys), (HIDDEN, HIDDEN)), "bk": jnp.zeros((HIDDEN,), jnp.float32),
            "wv": nrm(next(keys), (HIDDEN, HIDDEN)), "bv": jnp.zeros((HIDDEN,), jnp.float32),
            "wo": nrm(next(keys), (HIDDEN, HIDDEN)), "bo": jnp.zeros((HIDDEN,), jnp.float32),
            "ln1_g": jnp.ones((HIDDEN,), jnp.float32), "ln1_b": jnp.zeros((HIDDEN,), jnp.float32),
            "w_in": nrm(next(keys), (HIDDEN, INTERMEDIATE)),
            "b_in": jnp.zeros((INTERMEDIATE,), jnp.float32),
            "w_out": nrm(next(keys), (INTERMEDIATE, HIDDEN)),
            "b_out": jnp.zeros((HIDDEN,), jnp.float32),
            "ln2_g": jnp.ones((HIDDEN,), jnp.float32), "ln2_b": jnp.zeros((HIDDEN,), jnp.float32),
        })
    p["layers"] = layers
    return p


def pack_params(p):
    """Fold checkpoint-style params into kernel-ready layout: fused QKV,
    block-diagonal pos-conv taps, stacked per-layer weights, bf16 MXU operands,
    lane-padded (128) classifier output weights."""
    bf = lambda x: x.astype(jnp.bfloat16)
    cg = HIDDEN // POS_CONV_GROUPS
    L = NUM_LAYERS

    pos_w = jnp.zeros((POS_CONV_KERNEL, HIDDEN, HIDDEN), jnp.float32)
    for g in range(POS_CONV_GROUPS):
        pos_w = pos_w.at[:, g * cg:(g + 1) * cg, g * cg:(g + 1) * cg].set(
            p["pos_conv"]["w"][g])

    def stack(name):
        return jnp.stack([p["layers"][l][name] for l in range(L)])

    wqkv = jnp.stack([jnp.concatenate(
        [p["layers"][l]["wq"], p["layers"][l]["wk"], p["layers"][l]["wv"]], axis=1)
        for l in range(L)])
    bqkv = jnp.stack([jnp.concatenate(
        [p["layers"][l]["bq"], p["layers"][l]["bk"], p["layers"][l]["bv"]])
        for l in range(L)])

    return {
        "conv0_w": bf(jnp.pad(p["conv0"]["w"], ((0, CONV0_KPAD - CONV0_K), (0, 0)))),
        "conv0_gn_g": p["conv0"]["gn_g"].reshape(1, CONV0_CH),
        "conv0_gn_b": p["conv0"]["gn_b"].reshape(1, CONV0_CH),
        "conv1_w": bf(p["conv1"]["w"]),
        "fp_ln_g": p["fp"]["ln_g"].reshape(1, CONV1_CH),
        "fp_ln_b": p["fp"]["ln_b"].reshape(1, CONV1_CH),
        "fp_w": bf(p["fp"]["w"]),
        "fp_b": p["fp"]["b"].reshape(1, HIDDEN),
        "pos_w": bf(pos_w),
        "pos_b": p["pos_conv"]["b"].reshape(1, HIDDEN),
        "enc_ln_g": p["enc_ln_g"].reshape(1, HIDDEN),
        "enc_ln_b": p["enc_ln_b"].reshape(1, HIDDEN),
        "wqkv": bf(wqkv),
        "bqkv": bqkv.reshape(L, 1, 3 * HIDDEN),
        "wo": bf(stack("wo")),
        "bo": stack("bo").reshape(L, 1, HIDDEN),
        "ln1_g": stack("ln1_g").reshape(L, 1, HIDDEN),
        "ln1_b": stack("ln1_b").reshape(L, 1, HIDDEN),
        "w_in": bf(stack("w_in")),
        "b_in": stack("b_in").reshape(L, 1, INTERMEDIATE),
        "w_out": bf(stack("w_out")),
        "b_out": stack("b_out").reshape(L, 1, HIDDEN),
        "ln2_g": stack("ln2_g").reshape(L, 1, HIDDEN),
        "ln2_b": stack("ln2_b").reshape(L, 1, HIDDEN),
        "cls_w1": bf(p["cls"]["w1"]),
        "cls_b1": p["cls"]["b1"].reshape(1, CLS_HIDDEN),
        "cls_w2": bf(jnp.pad(p["cls"]["w2"], ((0, 0), (0, LANES - NUM_CLASSES)))),
        "cls_b2": jnp.pad(p["cls"]["b2"], (0, LANES - NUM_CLASSES)).reshape(1, LANES),
    }


if __name__ == "__main__":
    key = jax.random.PRNGKey(0)
    pkey, xkey = jax.random.split(key)
    packed = pack_params(init_params(pkey))
    input_values = jax.random.normal(xkey, (BATCH, AUDIO_LEN), jnp.float32)
    logits = jax.jit(wav2vec2_classifier_forward)(input_values, packed)
    jax.block_until_ready(logits)
    assert logits.shape == (BATCH, NUM_CLASSES)
    assert bool(jnp.all(jnp.isfinite(logits)))
    print("KERNEL_OK")
</pallas_src>

<mosaic_0001>
module attributes {stable_mosaic.version = 11 : i64} {
  func.func @_conv0_kernel(%arg0: i32, %arg1: memref<1x17x16xf32, #tpu.memory_space<vmem>>, %arg2: memref<16x128xbf16, #tpu.memory_space<vmem>>, %arg3: memref<1x128xf32, #tpu.memory_space<vmem>>, %arg4: memref<1x128xf32, #tpu.memory_space<vmem>>, %arg5: memref<1x17x128xf32, #tpu.memory_space<vmem>>) attributes {dimension_semantics = [#tpu.dimension_semantics<parallel>], iteration_bounds = array<i64: 2>, scalar_prefetch = 0 : i64, scratch_operands = 0 : i64, tpu.core_type = #tpu.core_type<tc>, window_params = [{transform_indices = @transform_0, window_bounds = array<i64: 1, 17, 16>}, {pipeline_mode = #tpu.pipeline_mode<synchronous>, transform_indices = @transform_1, window_bounds = array<i64: 16, 128>}, {pipeline_mode = #tpu.pipeline_mode<synchronous>, transform_indices = @transform_2, window_bounds = array<i64: 1, 128>}, {pipeline_mode = #tpu.pipeline_mode<synchronous>, transform_indices = @transform_3, window_bounds = array<i64: 1, 128>}, {transform_indices = @transform_4, window_bounds = array<i64: 1, 17, 128>}]} {
    %c0 = arith.constant 0 : index
    %c0_0 = arith.constant 0 : index
    %c0_1 = arith.constant 0 : index
    %0 = vector.load %arg1[%c0, %c0_0, %c0_1] : memref<1x17x16xf32, #tpu.memory_space<vmem>>, vector<1x17x16xf32>
    %1 = vector.shape_cast %0 : vector<1x17x16xf32> to vector<17x16xf32>
    %c0_2 = arith.constant 0 : index
    %c0_3 = arith.constant 0 : index
    %2 = vector.load %arg2[%c0_2, %c0_3] : memref<16x128xbf16, #tpu.memory_space<vmem>>, vector<16x128xbf16>
    %3 = arith.truncf %1 : vector<17x16xf32> to vector<17x16xbf16>
    %cst = arith.constant dense<0.000000e+00> : vector<17x128xf32>
    %4 = tpu.matmul %3, %2, %cst {dimension_numbers = #tpu.dot_dimension_numbers<[1], [0], [0], [1], [0, 0, 1, 1], [], []>} : vector<17x16xbf16>, vector<16x128xbf16>, vector<17x128xf32> -> vector<17x128xf32>
    %cst_4 = arith.constant dense<0.000000e+00> : vector<128xf32>
    %5 = vector.multi_reduction <add>, %4, %cst_4 [0] : vector<17x128xf32> to vector<128xf32>
    %6 = vector.shape_cast %5 : vector<128xf32> to vector<1x128xf32>
    %cst_5 = arith.constant 1.700000e+01 : f32
    %7 = vector.broadcast %cst_5 : f32 to vector<1x128xf32>
    %8 = arith.divf %6, %7 : vector<1x128xf32>
    %9 = vector.broadcast %8 : vector<1x128xf32> to vector<17x128xf32>
    %10 = arith.subf %4, %9 : vector<17x128xf32>
    %11 = arith.mulf %10, %10 : vector<17x128xf32>
    %cst_6 = arith.constant dense<0.000000e+00> : vector<128xf32>
    %12 = vector.multi_reduction <add>, %11, %cst_6 [0] : vector<17x128xf32> to vector<128xf32>
    %13 = vector.shape_cast %12 : vector<128xf32> to vector<1x128xf32>
    %cst_7 = arith.constant 1.700000e+01 : f32
    %14 = vector.broadcast %cst_7 : f32 to vector<1x128xf32>
    %15 = arith.divf %13, %14 : vector<1x128xf32>
    %16 = vector.broadcast %8 : vector<1x128xf32> to vector<17x128xf32>
    %17 = arith.subf %4, %16 : vector<17x128xf32>
    %cst_8 = arith.constant 9.99999974E-6 : f32
    %18 = vector.broadcast %cst_8 : f32 to vector<1x128xf32>
    %19 = arith.addf %15, %18 : vector<1x128xf32>
    %20 = math.rsqrt %19 : vector<1x128xf32>
    %21 = vector.broadcast %20 : vector<1x128xf32> to vector<17x128xf32>
    %22 = arith.mulf %17, %21 : vector<17x128xf32>
    %c0_9 = arith.constant 0 : index
    %c0_10 = arith.constant 0 : index
    %23 = vector.load %arg3[%c0_9, %c0_10] : memref<1x128xf32, #tpu.memory_space<vmem>>, vector<1x128xf32>
    %24 = vector.broadcast %23 : vector<1x128xf32> to vector<17x128xf32>
    %25 = arith.mulf %22, %24 : vector<17x128xf32>
    %c0_11 = arith.constant 0 : index
    %c0_12 = arith.constant 0 : index
    %26 = vector.load %arg4[%c0_11, %c0_12] : memref<1x128xf32, #tpu.memory_space<vmem>>, vector<1x128xf32>
    %27 = vector.broadcast %26 : vector<1x128xf32> to vector<17x128xf32>
    %28 = arith.addf %25, %27 : vector<17x128xf32>
    %29 = arith.mulf %28, %28 : vector<17x128xf32>
    %30 = arith.mulf %28, %29 : vector<17x128xf32>
    %cst_13 = arith.constant 4.471500e-02 : f32
    %31 = vector.broadcast %cst_13 : f32 to vector<17x128xf32>
    %32 = arith.mulf %31, %30 : vector<17x128xf32>
    %33 = arith.addf %28, %32 : vector<17x128xf32>
    %cst_14 = arith.constant 0.797884583 : f32
    %34 = vector.broadcast %cst_14 : f32 to vector<17x128xf32>
    %35 = arith.mulf %34, %33 : vector<17x128xf32>
    %36 = math.tanh %35 : vector<17x128xf32>
    %cst_15 = arith.constant 1.000000e+00 : f32
    %37 = vector.broadcast %cst_15 : f32 to vector<17x128xf32>
    %38 = arith.addf %37, %36 : vector<17x128xf32>
    %cst_16 = arith.constant 5.000000e-01 : f32
    %39 = vector.broadcast %cst_16 : f32 to vector<17x128xf32>
    %40 = arith.mulf %39, %38 : vector<17x128xf32>
    %41 = arith.mulf %28, %40 : vector<17x128xf32>
    %c0_17 = arith.constant 0 : index
    %c0_18 = arith.constant 0 : index
    %c0_19 = arith.constant 0 : index
    %42 = vector.load %arg5[%c0_17, %c0_18, %c0_19] : memref<1x17x128xf32, #tpu.memory_space<vmem>>, vector<1x17x128xf32>
    %43 = vector.shape_cast %42 : vector<1x17x128xf32> to vector<17x128xf32>
    %44 = vector.shape_cast %41 : vector<17x128xf32> to vector<1x17x128xf32>
    tpu.vector_store %arg5[%c0_17, %c0_18, %c0_19], %44 {strides = array<i32>} : memref<1x17x128xf32, #tpu.memory_space<vmem>>, vector<1x17x128xf32>,
    return
  }
  func.func @transform_0(%arg0: i32) -> (i32, i32, i32) {
    %c0_i32 = arith.constant 0 : i32
    %c0_i32_0 = arith.constant 0 : i32
    %c0_i32_1 = arith.constant 0 : i32
    return %arg0, %c0_i32, %c0_i32_0 : i32, i32, i32
  }
  func.func @transform_1(%arg0: i32) -> (i32, i32) {
    %c0_i32 = arith.constant 0 : i32
    %c0_i32_0 = arith.constant 0 : i32
    %c0_i32_1 = arith.constant 0 : i32
    return %c0_i32, %c0_i32_0 : i32, i32
  }
  func.func @transform_2(%arg0: i32) -> (i32, i32) {
    %c0_i32 = arith.constant 0 : i32
    %c0_i32_0 = arith.constant 0 : i32
    %c0_i32_1 = arith.constant 0 : i32
    return %c0_i32, %c0_i32_0 : i32, i32
  }
  func.func @transform_3(%arg0: i32) -> (i32, i32) {
    %c0_i32 = arith.constant 0 : i32
    %c0_i32_0 = arith.constant 0 : i32
    %c0_i32_1 = arith.constant 0 : i32
    return %c0_i32, %c0_i32_0 : i32, i32
  }
  func.func @transform_4(%arg0: i32) -> (i32, i32, i32) {
    %c0_i32 = arith.constant 0 : i32
    %c0_i32_0 = arith.constant 0 : i32
    %c0_i32_1 = arith.constant 0 : i32
    return %arg0, %c0_i32, %c0_i32_0 : i32, i32, i32
  }
}

module attributes {stable_mosaic.version = 11 : i64} {
  func.func @_embed_kernel(%arg0: i32, %arg1: memref<1x8x384xf32, #tpu.memory_space<vmem>>, %arg2: memref<384x128xbf16, #tpu.memory_space<vmem>>, %arg3: memref<1x128xf32, #tpu.memory_space<vmem>>, %arg4: memref<1x128xf32, #tpu.memory_space<vmem>>, %arg5: memref<128x128xbf16, #tpu.memory_space<vmem>>, %arg6: memref<1x128xf32, #tpu.memory_space<vmem>>, %arg7: memref<4x128x128xbf16, #tpu.memory_space<vmem>>, %arg8: memref<1x128xf32, #tpu.memory_space<vmem>>, %arg9: memref<1x128xf32, #tpu.memory_space<vmem>>, %arg10: memref<1x128xf32, #tpu.memory_space<vmem>>, %arg11: memref<1x8x128xf32, #tpu.memory_space<vmem>>) attributes {dimension_semantics = [#tpu.dimension_semantics<parallel>], iteration_bounds = array<i64: 2>, scalar_prefetch = 0 : i64, scratch_operands = 0 : i64, tpu.core_type = #tpu.core_type<tc>, window_params = [{transform_indices = @transform_0, window_bounds = array<i64: 1, 8, 384>}, {pipeline_mode = #tpu.pipeline_mode<synchronous>, transform_indices = @transform_1, window_bounds = array<i64: 384, 128>}, {pipeline_mode = #tpu.pipeline_mode<synchronous>, transform_indices = @transform_2, window_bounds = array<i64: 1, 128>}, {pipeline_mode = #tpu.pipeline_mode<synchronous>, transform_indices = @transform_3, window_bounds = array<i64: 1, 128>}, {pipeline_mode = #tpu.pipeline_mode<synchronous>, transform_indices = @transform_4, window_bounds = array<i64: 128, 128>}, {pipeline_mode = #tpu.pipeline_mode<synchronous>, transform_indices = @transform_5, window_bounds = array<i64: 1, 128>}, {pipeline_mode = #tpu.pipeline_mode<synchronous>, transform_indices = @transform_6, window_bounds = array<i64: 4, 128, 128>}, {pipeline_mode = #tpu.pipeline_mode<synchronous>, transform_indices = @transform_7, window_bounds = array<i64: 1, 128>}, {pipeline_mode = #tpu.pipeline_mode<synchronous>, transform_indices = @transform_8, window_bounds = array<i64: 1, 128>}, {pipeline_mode = #tpu.pipeline_mode<synchronous>, transform_indices = @transform_9, window_bounds = array<i64: 1, 128>}, {transform_indices = @transform_10, window_bounds = array<i64: 1, 8, 128>}]} {
    %c0 = arith.constant 0 : index
    %c0_0 = arith.constant 0 : index
    %c0_1 = arith.constant 0 : index
    %0 = vector.load %arg1[%c0, %c0_0, %c0_1] : memref<1x8x384xf32, #tpu.memory_space<vmem>>, vector<1x8x384xf32>
    %1 = vector.shape_cast %0 : vector<1x8x384xf32> to vector<8x384xf32>
    %c0_2 = arith.constant 0 : index
    %c0_3 = arith.constant 0 : index
    %2 = vector.load %arg2[%c0_2, %c0_3] : memref<384x128xbf16, #tpu.memory_space<vmem>>, vector<384x128xbf16>
    %3 = arith.truncf %1 : vector<8x384xf32> to vector<8x384xbf16>
    %cst = arith.constant dense<0.000000e+00> : vector<8x128xf32>
    %4 = tpu.matmul %3, %2, %cst {dimension_numbers = #tpu.dot_dimension_numbers<[1], [0], [0], [1], [0, 0, 1, 1], [], []>} : vector<8x384xbf16>, vector<384x128xbf16>, vector<8x128xf32> -> vector<8x128xf32>
    %5 = arith.mulf %4, %4 : vector<8x128xf32>
    %6 = arith.mulf %4, %5 : vector<8x128xf32>
    %cst_4 = arith.constant 4.471500e-02 : f32
    %7 = vector.broadcast %cst_4 : f32 to vector<8x128xf32>
    %8 = arith.mulf %7, %6 : vector<8x128xf32>
    %9 = arith.addf %4, %8 : vector<8x128xf32>
    %cst_5 = arith.constant 0.797884583 : f32
    %10 = vector.broadcast %cst_5 : f32 to vector<8x128xf32>
    %11 = arith.mulf %10, %9 : vector<8x128xf32>
    %12 = math.tanh %11 : vector<8x128xf32>
    %cst_6 = arith.constant 1.000000e+00 : f32
    %13 = vector.broadcast %cst_6 : f32 to vector<8x128xf32>
    %14 = arith.addf %13, %12 : vector<8x128xf32>
    %cst_7 = arith.constant 5.000000e-01 : f32
    %15 = vector.broadcast %cst_7 : f32 to vector<8x128xf32>
    %16 = arith.mulf %15, %14 : vector<8x128xf32>
    %17 = arith.mulf %4, %16 : vector<8x128xf32>
    %c0_8 = arith.constant 0 : index
    %c0_9 = arith.constant 0 : index
    %18 = vector.load %arg3[%c0_8, %c0_9] : memref<1x128xf32, #tpu.memory_space<vmem>>, vector<1x128xf32>
    %c0_10 = arith.constant 0 : index
    %c0_11 = arith.constant 0 : index
    %19 = vector.load %arg4[%c0_10, %c0_11] : memref<1x128xf32, #tpu.memory_space<vmem>>, vector<1x128xf32>
    %cst_12 = arith.constant dense<0.000000e+00> : vector<8xf32>
    %20 = vector.multi_reduction <add>, %17, %cst_12 [1] : vector<8x128xf32> to vector<8xf32>
    %21 = vector.shape_cast %20 : vector<8xf32> to vector<8x1xf32>
    %cst_13 = arith.constant 1.280000e+02 : f32
    %22 = vector.broadcast %cst_13 : f32 to vector<8x1xf32>
    %23 = arith.divf %21, %22 : vector<8x1xf32>
    %24 = vector.broadcast %23 : vector<8x1xf32> to vector<8x128xf32>
    %25 = arith.subf %17, %24 : vector<8x128xf32>
    %26 = arith.mulf %25, %25 : vector<8x128xf32>
    %cst_14 = arith.constant dense<0.000000e+00> : vector<8xf32>
    %27 = vector.multi_reduction <add>, %26, %cst_14 [1] : vector<8x128xf32> to vector<8xf32>
    %28 = vector.shape_cast %27 : vector<8xf32> to vector<8x1xf32>
    %cst_15 = arith.constant 1.280000e+02 : f32
    %29 = vector.broadcast %cst_15 : f32 to vector<8x1xf32>
    %30 = arith.divf %28, %29 : vector<8x1xf32>
    %31 = vector.broadcast %23 : vector<8x1xf32> to vector<8x128xf32>
    %32 = arith.subf %17, %31 : vector<8x128xf32>
    %cst_16 = arith.constant 9.99999974E-6 : f32
    %33 = vector.broadcast %cst_16 : f32 to vector<8x1xf32>
    %34 = arith.addf %30, %33 : vector<8x1xf32>
    %35 = math.rsqrt %34 : vector<8x1xf32>
    %36 = vector.broadcast %35 : vector<8x1xf32> to vector<8x128xf32>
    %37 = arith.mulf %32, %36 : vector<8x128xf32>
    %38 = vector.broadcast %18 : vector<1x128xf32> to vector<8x128xf32>
    %39 = arith.mulf %37, %38 : vector<8x128xf32>
    %40 = vector.broadcast %19 : vector<1x128xf32> to vector<8x128xf32>
    %41 = arith.addf %39, %40 : vector<8x128xf32>
    %c0_17 = arith.constant 0 : index
    %c0_18 = arith.constant 0 : index
    %42 = vector.load %arg5[%c0_17, %c0_18] : memref<128x128xbf16, #tpu.memory_space<vmem>>, vector<128x128xbf16>
    %43 = arith.truncf %41 : vector<8x128xf32> to vector<8x128xbf16>
    %cst_19 = arith.constant dense<0.000000e+00> : vector<8x128xf32>
    %44 = tpu.matmul %43, %42, %cst_19 {dimension_numbers = #tpu.dot_dimension_numbers<[1], [0], [0], [1], [0, 0, 1, 1], [], []>} : vector<8x128xbf16>, vector<128x128xbf16>, vector<8x128xf32> -> vector<8x128xf32>
    %c0_20 = arith.constant 0 : index
    %c0_21 = arith.constant 0 : index
    %45 = vector.load %arg6[%c0_20, %c0_21] : memref<1x128xf32, #tpu.memory_space<vmem>>, vector<1x128xf32>
    %46 = vector.broadcast %45 : vector<1x128xf32> to vector<8x128xf32>
    %47 = arith.addf %44, %46 : vector<8x128xf32>
    %cst_22 = arith.constant 0.000000e+00 : f32
    %48 = vector.broadcast %cst_22 : f32 to vector<2x128xf32>
    %49 = tpu.concatenate %48, %47, %48 in 0 : vector<2x128xf32>, vector<8x128xf32>, vector<2x128xf32> -> vector<12x128xf32>
    %50 = vector.extract_strided_slice %49 {offsets = [0, 0], sizes = [8, 128], strides = [1, 1]} : vector<12x128xf32> to vector<8x128xf32>
    %c0_23 = arith.constant 0 : index
    %c0_24 = arith.constant 0 : index
    %c0_25 = arith.constant 0 : index
    %51 = vector.load %arg7[%c0_23, %c0_24, %c0_25] : memref<4x128x128xbf16, #tpu.memory_space<vmem>>, vector<1x128x128xbf16>
    %52 = vector.shape_cast %51 : vector<1x128x128xbf16> to vector<128x128xbf16>
    %53 = arith.truncf %50 : vector<8x128xf32> to vector<8x128xbf16>
    %cst_26 = arith.constant dense<0.000000e+00> : vector<8x128xf32>
    %54 = tpu.matmul %53, %52, %cst_26 {dimension_numbers = #tpu.dot_dimension_numbers<[1], [0], [0], [1], [0, 0, 1, 1], [], []>} : vector<8x128xbf16>, vector<128x128xbf16>, vector<8x128xf32> -> vector<8x128xf32>
    %55 = vector.extract_strided_slice %49 {offsets = [1, 0], sizes = [8, 128], strides = [1, 1]} : vector<12x128xf32> to vector<8x128xf32>
    %c1 = arith.constant 1 : index
    %c0_27 = arith.constant 0 : index
    %c0_28 = arith.constant 0 : index
    %56 = vector.load %arg7[%c1, %c0_27, %c0_28] : memref<4x128x128xbf16, #tpu.memory_space<vmem>>, vector<1x128x128xbf16>
    %57 = vector.shape_cast %56 : vector<1x128x128xbf16> to vector<128x128xbf16>
    %58 = arith.truncf %55 : vector<8x128xf32> to vector<8x128xbf16>
    %cst_29 = arith.constant dense<0.000000e+00> : vector<8x128xf32>
    %59 = tpu.matmul %58, %57, %cst_29 {dimension_numbers = #tpu.dot_dimension_numbers<[1], [0], [0], [1], [0, 0, 1, 1], [], []>} : vector<8x128xbf16>, vector<128x128xbf16>, vector<8x128xf32> -> vector<8x128xf32>
    %60 = arith.addf %54, %59 : vector<8x128xf32>
    %61 = vector.extract_strided_slice %49 {offsets = [2, 0], sizes = [8, 128], strides = [1, 1]} : vector<12x128xf32> to vector<8x128xf32>
    %c2 = arith.constant 2 : index
    %c0_30 = arith.constant 0 : index
    %c0_31 = arith.constant 0 : index
    %62 = vector.load %arg7[%c2, %c0_30, %c0_31] : memref<4x128x128xbf16, #tpu.memory_space<vmem>>, vector<1x128x128xbf16>
    %63 = vector.shape_cast %62 : vector<1x128x128xbf16> to vector<128x128xbf16>
    %64 = arith.truncf %61 : vector<8x128xf32> to vector<8x128xbf16>
    %cst_32 = arith.constant dense<0.000000e+00> : vector<8x128xf32>
    %65 = tpu.matmul %64, %63, %cst_32 {dimension_numbers = #tpu.dot_dimension_numbers<[1], [0], [0], [1], [0, 0, 1, 1], [], []>} : vector<8x128xbf16>, vector<128x128xbf16>, vector<8x128xf32> -> vector<8x128xf32>
    %66 = arith.addf %60, %65 : vector<8x128xf32>
    %67 = vector.extract_strided_slice %49 {offsets = [3, 0], sizes = [8, 128], strides = [1, 1]} : vector<12x128xf32> to vector<8x128xf32>
    %c3 = arith.constant 3 : index
    %c0_33 = arith.constant 0 : index
    %c0_34 = arith.constant 0 : index
    %68 = vector.load %arg7[%c3, %c0_33, %c0_34] : memref<4x128x128xbf16, #tpu.memory_space<vmem>>, vector<1x128x128xbf16>
    %69 = vector.shape_cast %68 : vector<1x128x128xbf16> to vector<128x128xbf16>
    %70 = arith.truncf %67 : vector<8x128xf32> to vector<8x128xbf16>
    %cst_35 = arith.constant dense<0.000000e+00> : vector<8x128xf32>
    %71 = tpu.matmul %70, %69, %cst_35 {dimension_numbers = #tpu.dot_dimension_numbers<[1], [0], [0], [1], [0, 0, 1, 1], [], []>} : vector<8x128xbf16>, vector<128x128xbf16>, vector<8x128xf32> -> vector<8x128xf32>
    %72 = arith.addf %66, %71 : vector<8x128xf32>
    %c0_36 = arith.constant 0 : index
    %c0_37 = arith.constant 0 : index
    %73 = vector.load %arg8[%c0_36, %c0_37] : memref<1x128xf32, #tpu.memory_space<vmem>>, vector<1x128xf32>
    %74 = vector.broadcast %73 : vector<1x128xf32> to vector<8x128xf32>
    %75 = arith.addf %72, %74 : vector<8x128xf32>
    %76 = arith.mulf %75, %75 : vector<8x128xf32>
    %77 = arith.mulf %75, %76 : vector<8x128xf32>
    %cst_38 = arith.constant 4.471500e-02 : f32
    %78 = vector.broadcast %cst_38 : f32 to vector<8x128xf32>
    %79 = arith.mulf %78, %77 : vector<8x128xf32>
    %80 = arith.addf %75, %79 : vector<8x128xf32>
    %cst_39 = arith.constant 0.797884583 : f32
    %81 = vector.broadcast %cst_39 : f32 to vector<8x128xf32>
    %82 = arith.mulf %81, %80 : vector<8x128xf32>
    %83 = math.tanh %82 : vector<8x128xf32>
    %cst_40 = arith.constant 1.000000e+00 : f32
    %84 = vector.broadcast %cst_40 : f32 to vector<8x128xf32>
    %85 = arith.addf %84, %83 : vector<8x128xf32>
    %cst_41 = arith.constant 5.000000e-01 : f32
    %86 = vector.broadcast %cst_41 : f32 to vector<8x128xf32>
    %87 = arith.mulf %86, %85 : vector<8x128xf32>
    %88 = arith.mulf %75, %87 : vector<8x128xf32>
    %89 = arith.addf %47, %88 : vector<8x128xf32>
    %c0_42 = arith.constant 0 : index
    %c0_43 = arith.constant 0 : index
    %90 = vector.load %arg9[%c0_42, %c0_43] : memref<1x128xf32, #tpu.memory_space<vmem>>, vector<1x128xf32>
    %c0_44 = arith.constant 0 : index
    %c0_45 = arith.constant 0 : index
    %91 = vector.load %arg10[%c0_44, %c0_45] : memref<1x128xf32, #tpu.memory_space<vmem>>, vector<1x128xf32>
    %cst_46 = arith.constant dense<0.000000e+00> : vector<8xf32>
    %92 = vector.multi_reduction <add>, %89, %cst_46 [1] : vector<8x128xf32> to vector<8xf32>
    %93 = vector.shape_cast %92 : vector<8xf32> to vector<8x1xf32>
    %cst_47 = arith.constant 1.280000e+02 : f32
    %94 = vector.broadcast %cst_47 : f32 to vector<8x1xf32>
    %95 = arith.divf %93, %94 : vector<8x1xf32>
    %96 = vector.broadcast %95 : vector<8x1xf32> to vector<8x128xf32>
    %97 = arith.subf %89, %96 : vector<8x128xf32>
    %98 = arith.mulf %97, %97 : vector<8x128xf32>
    %cst_48 = arith.constant dense<0.000000e+00> : vector<8xf32>
    %99 = vector.multi_reduction <add>, %98, %cst_48 [1] : vector<8x128xf32> to vector<8xf32>
    %100 = vector.shape_cast %99 : vector<8xf32> to vector<8x1xf32>
    %cst_49 = arith.constant 1.280000e+02 : f32
    %101 = vector.broadcast %cst_49 : f32 to vector<8x1xf32>
    %102 = arith.divf %100, %101 : vector<8x1xf32>
    %103 = vector.broadcast %95 : vector<8x1xf32> to vector<8x128xf32>
    %104 = arith.subf %89, %103 : vector<8x128xf32>
    %cst_50 = arith.constant 9.99999974E-6 : f32
    %105 = vector.broadcast %cst_50 : f32 to vector<8x1xf32>
    %106 = arith.addf %102, %105 : vector<8x1xf32>
    %107 = math.rsqrt %106 : vector<8x1xf32>
    %108 = vector.broadcast %107 : vector<8x1xf32> to vector<8x128xf32>
    %109 = arith.mulf %104, %108 : vector<8x128xf32>
    %110 = vector.broadcast %90 : vector<1x128xf32> to vector<8x128xf32>
    %111 = arith.mulf %109, %110 : vector<8x128xf32>
    %112 = vector.broadcast %91 : vector<1x128xf32> to vector<8x128xf32>
    %113 = arith.addf %111, %112 : vector<8x128xf32>
    %c0_51 = arith.constant 0 : index
    %c0_52 = arith.constant 0 : index
    %c0_53 = arith.constant 0 : index
    %114 = vector.load %arg11[%c0_51, %c0_52, %c0_53] : memref<1x8x128xf32, #tpu.memory_space<vmem>>, vector<1x8x128xf32>
    %115 = vector.shape_cast %114 : vector<1x8x128xf32> to vector<8x128xf32>
    %116 = vector.shape_cast %113 : vector<8x128xf32> to vector<1x8x128xf32>
    tpu.vector_store %arg11[%c0_51, %c0_52, %c0_53], %116 {strides = array<i32>} : memref<1x8x128xf32, #tpu.memory_space<vmem>>, vector<1x8x128xf32>,
    return
  }
  func.func @transform_0(%arg0: i32) -> (i32, i32, i32) {
    %c0_i32 = arith.constant 0 : i32
    %c0_i32_0 = arith.constant 0 : i32
    %c0_i32_1 = arith.constant 0 : i32
    return %arg0, %c0_i32, %c0_i32_0 : i32, i32, i32
  }
  func.func @transform_1(%arg0: i32) -> (i32, i32) {
    %c0_i32 = arith.constant 0 : i32
    %c0_i32_0 = arith.constant 0 : i32
    %c0_i32_1 = arith.constant 0 : i32
    return %c0_i32, %c0_i32_0 : i32, i32
  }
  func.func @transform_2(%arg0: i32) -> (i32, i32) {
    %c0_i32 = arith.constant 0 : i32
    %c0_i32_0 = arith.constant 0 : i32
    %c0_i32_1 = arith.constant 0 : i32
    return %c0_i32, %c0_i32_0 : i32, i32
  }
  func.func @transform_3(%arg0: i32) -> (i32, i32) {
    %c0_i32 = arith.constant 0 : i32
    %c0_i32_0 = arith.constant 0 : i32
    %c0_i32_1 = arith.constant 0 : i32
    return %c0_i32, %c0_i32_0 : i32, i32
  }
  func.func @transform_4(%arg0: i32) -> (i32, i32) {
    %c0_i32 = arith.constant 0 : i32
    %c0_i32_0 = arith.constant 0 : i32
    %c0_i32_1 = arith.constant 0 : i32
    return %c0_i32, %c0_i32_0 : i32, i32
  }
  func.func @transform_5(%arg0: i32) -> (i32, i32) {
    %c0_i32 = arith.constant 0 : i32
    %c0_i32_0 = arith.constant 0 : i32
    %c0_i32_1 = arith.constant 0 : i32
    return %c0_i32, %c0_i32_0 : i32, i32
  }
  func.func @transform_6(%arg0: i32) -> (i32, i32, i32) {
    %c0_i32 = arith.constant 0 : i32
    %c0_i32_0 = arith.constant 0 : i32
    %c0_i32_1 = arith.constant 0 : i32
    %c0_i32_2 = arith.constant 0 : i32
    return %c0_i32, %c0_i32_0, %c0_i32_1 : i32, i32, i32
  }
  func.func @transform_7(%arg0: i32) -> (i32, i32) {
    %c0_i32 = arith.constant 0 : i32
    %c0_i32_0 = arith.constant 0 : i32
    %c0_i32_1 = arith.constant 0 : i32
    return %c0_i32, %c0_i32_0 : i32, i32
  }
  func.func @transform_8(%arg0: i32) -> (i32, i32) {
    %c0_i32 = arith.constant 0 : i32
    %c0_i32_0 = arith.constant 0 : i32
    %c0_i32_1 = arith.constant 0 : i32
    return %c0_i32, %c0_i32_0 : i32, i32
  }
  func.func @transform_9(%arg0: i32) -> (i32, i32) {
    %c0_i32 = arith.constant 0 : i32
    %c0_i32_0 = arith.constant 0 : i32
    %c0_i32_1 = arith.constant 0 : i32
    return %c0_i32, %c0_i32_0 : i32, i32
  }
  func.func @transform_10(%arg0: i32) -> (i32, i32, i32) {
    %c0_i32 = arith.constant 0 : i32
    %c0_i32_0 = arith.constant 0 : i32
    %c0_i32_1 = arith.constant 0 : i32
    return %arg0, %c0_i32, %c0_i32_0 : i32, i32, i32
  }
}

module attributes {stable_mosaic.version = 11 : i64} {
  func.func @_encoder_kernel(%arg0: i32, %arg1: memref<1x8x128xf32, #tpu.memory_space<vmem>>, %arg2: memref<2x128x384xbf16, #tpu.memory_space<vmem>>, %arg3: memref<2x1x384xf32, #tpu.memory_space<vmem>>, %arg4: memref<2x128x128xbf16, #tpu.memory_space<vmem>>, %arg5: memref<2x1x128xf32, #tpu.memory_space<vmem>>, %arg6: memref<2x1x128xf32, #tpu.memory_space<vmem>>, %arg7: memref<2x1x128xf32, #tpu.memory_space<vmem>>, %arg8: memref<2x128x256xbf16, #tpu.memory_space<vmem>>, %arg9: memref<2x1x256xf32, #tpu.memory_space<vmem>>, %arg10: memref<2x256x128xbf16, #tpu.memory_space<vmem>>, %arg11: memref<2x1x128xf32, #tpu.memory_space<vmem>>, %arg12: memref<2x1x128xf32, #tpu.memory_space<vmem>>, %arg13: memref<2x1x128xf32, #tpu.memory_space<vmem>>, %arg14: memref<128x256xbf16, #tpu.memory_space<vmem>>, %arg15: memref<1x256xf32, #tpu.memory_space<vmem>>, %arg16: memref<256x128xbf16, #tpu.memory_space<vmem>>, %arg17: memref<1x128xf32, #tpu.memory_space<vmem>>, %arg18: memref<1x8x128xf32, #tpu.memory_space<vmem>>) attributes {dimension_semantics = [#tpu.dimension_semantics<parallel>], iteration_bounds = array<i64: 2>, scalar_prefetch = 0 : i64, scratch_operands = 0 : i64, tpu.core_type = #tpu.core_type<tc>, window_params = [{transform_indices = @transform_0, window_bounds = array<i64: 1, 8, 128>}, {pipeline_mode = #tpu.pipeline_mode<synchronous>, transform_indices = @transform_1, window_bounds = array<i64: 2, 128, 384>}, {pipeline_mode = #tpu.pipeline_mode<synchronous>, transform_indices = @transform_2, window_bounds = array<i64: 2, 1, 384>}, {pipeline_mode = #tpu.pipeline_mode<synchronous>, transform_indices = @transform_3, window_bounds = array<i64: 2, 128, 128>}, {pipeline_mode = #tpu.pipeline_mode<synchronous>, transform_indices = @transform_4, window_bounds = array<i64: 2, 1, 128>}, {pipeline_mode = #tpu.pipeline_mode<synchronous>, transform_indices = @transform_5, window_bounds = array<i64: 2, 1, 128>}, {pipeline_mode = #tpu.pipeline_mode<synchronous>, transform_indices = @transform_6, window_bounds = array<i64: 2, 1, 128>}, {pipeline_mode = #tpu.pipeline_mode<synchronous>, transform_indices = @transform_7, window_bounds = array<i64: 2, 128, 256>}, {pipeline_mode = #tpu.pipeline_mode<synchronous>, transform_indices = @transform_8, window_bounds = array<i64: 2, 1, 256>}, {pipeline_mode = #tpu.pipeline_mode<synchronous>, transform_indices = @transform_9, window_bounds = array<i64: 2, 256, 128>}, {pipeline_mode = #tpu.pipeline_mode<synchronous>, transform_indices = @transform_10, window_bounds = array<i64: 2, 1, 128>}, {pipeline_mode = #tpu.pipeline_mode<synchronous>, transform_indices = @transform_11, window_bounds = array<i64: 2, 1, 128>}, {pipeline_mode = #tpu.pipeline_mode<synchronous>, transform_indices = @transform_12, window_bounds = array<i64: 2, 1, 128>}, {pipeline_mode = #tpu.pipeline_mode<synchronous>, transform_indices = @transform_13, window_bounds = array<i64: 128, 256>}, {pipeline_mode = #tpu.pipeline_mode<synchronous>, transform_indices = @transform_14, window_bounds = array<i64: 1, 256>}, {pipeline_mode = #tpu.pipeline_mode<synchronous>, transform_indices = @transform_15, window_bounds = array<i64: 256, 128>}, {pipeline_mode = #tpu.pipeline_mode<synchronous>, transform_indices = @transform_16, window_bounds = array<i64: 1, 128>}, {transform_indices = @transform_17, window_bounds = array<i64: 1, 8, 128>}]} {
    %c0 = arith.constant 0 : index
    %c0_0 = arith.constant 0 : index
    %c0_1 = arith.constant 0 : index
    %0 = vector.load %arg1[%c0, %c0_0, %c0_1] : memref<1x8x128xf32, #tpu.memory_space<vmem>>, vector<1x8x128xf32>
    %1 = vector.shape_cast %0 : vector<1x8x128xf32> to vector<8x128xf32>
    %c0_2 = arith.constant 0 : index
    %c0_3 = arith.constant 0 : index
    %c0_4 = arith.constant 0 : index
    %2 = vector.load %arg2[%c0_2, %c0_3, %c0_4] : memref<2x128x384xbf16, #tpu.memory_space<vmem>>, vector<1x128x384xbf16>
    %3 = vector.shape_cast %2 : vector<1x128x384xbf16> to vector<128x384xbf16>
    %4 = arith.truncf %1 : vector<8x128xf32> to vector<8x128xbf16>
    %cst = arith.constant dense<0.000000e+00> : vector<8x384xf32>
    %5 = tpu.matmul %4, %3, %cst {dimension_numbers = #tpu.dot_dimension_numbers<[1], [0], [0], [1], [0, 0, 1, 1], [], []>} : vector<8x128xbf16>, vector<128x384xbf16>, vector<8x384xf32> -> vector<8x384xf32>
    %c0_5 = arith.constant 0 : index
    %c0_6 = arith.constant 0 : index
    %c0_7 = arith.constant 0 : index
    %6 = vector.load %arg3[%c0_5, %c0_6, %c0_7] : memref<2x1x384xf32, #tpu.memory_space<vmem>>, vector<1x1x384xf32>
    %7 = vector.shape_cast %6 : vector<1x1x384xf32> to vector<1x384xf32>
    %8 = vector.broadcast %7 : vector<1x384xf32> to vector<8x384xf32>
    %9 = arith.addf %5, %8 : vector<8x384xf32>
    %10 = vector.extract_strided_slice %9 {offsets = [0, 0], sizes = [8, 32], strides = [1, 1]} : vector<8x384xf32> to vector<8x32xf32>
    %11 = vector.extract_strided_slice %9 {offsets = [0, 128], sizes = [8, 32], strides = [1, 1]} : vector<8x384xf32> to vector<8x32xf32>
    %12 = vector.extract_strided_slice %9 {offsets = [0, 256], sizes = [8, 32], strides = [1, 1]} : vector<8x384xf32> to vector<8x32xf32>
    %13 = arith.truncf %10 : vector<8x32xf32> to vector<8x32xbf16>
    %14 = arith.truncf %11 : vector<8x32xf32> to vector<8x32xbf16>
    %cst_8 = arith.constant dense<0.000000e+00> : vector<8x8xf32>
    %15 = tpu.matmul %13, %14, %cst_8 {dimension_numbers = #tpu.dot_dimension_numbers<[1], [1], [0], [0], [0, 0, 1, 0], [], []>} : vector<8x32xbf16>, vector<8x32xbf16>, vector<8x8xf32> -> vector<8x8xf32>
    %cst_9 = arith.constant 0.176776692 : f32
    %16 = vector.broadcast %cst_9 : f32 to vector<8x8xf32>
    %17 = arith.mulf %15, %16 : vector<8x8xf32>
    %cst_10 = arith.constant dense<0xFF800000> : vector<8xf32>
    %18 = vector.multi_reduction <maximumf>, %17, %cst_10 [1] : vector<8x8xf32> to vector<8xf32>
    %19 = vector.shape_cast %18 : vector<8xf32> to vector<8x1xf32>
    %20 = vector.broadcast %19 : vector<8x1xf32> to vector<8x8xf32>
    %21 = arith.subf %17, %20 : vector<8x8xf32>
    %22 = math.exp %21 : vector<8x8xf32>
    %cst_11 = arith.constant dense<0.000000e+00> : vector<8xf32>
    %23 = vector.multi_reduction <add>, %22, %cst_11 [1] : vector<8x8xf32> to vector<8xf32>
    %24 = vector.shape_cast %23 : vector<8xf32> to vector<8x1xf32>
    %25 = tpu.reciprocal %24 {approx = true} : vector<8x1xf32> -> vector<8x1xf32>
    %26 = vector.broadcast %25 : vector<8x1xf32> to vector<8x8xf32>
    %27 = arith.mulf %22, %26 : vector<8x8xf32>
    %28 = arith.truncf %27 : vector<8x8xf32> to vector<8x8xbf16>
    %29 = arith.truncf %12 : vector<8x32xf32> to vector<8x32xbf16>
    %cst_12 = arith.constant dense<0.000000e+00> : vector<8x32xf32>
    %30 = tpu.matmul %28, %29, %cst_12 {dimension_numbers = #tpu.dot_dimension_numbers<[1], [0], [0], [1], [0, 0, 1, 1], [], []>} : vector<8x8xbf16>, vector<8x32xbf16>, vector<8x32xf32> -> vector<8x32xf32>
    %31 = vector.extract_strided_slice %9 {offsets = [0, 32], sizes = [8, 32], strides = [1, 1]} : vector<8x384xf32> to vector<8x32xf32>
    %32 = vector.extract_strided_slice %9 {offsets = [0, 160], sizes = [8, 32], strides = [1, 1]} : vector<8x384xf32> to vector<8x32xf32>
    %33 = vector.extract_strided_slice %9 {offsets = [0, 288], sizes = [8, 32], strides = [1, 1]} : vector<8x384xf32> to vector<8x32xf32>
    %34 = arith.truncf %31 : vector<8x32xf32> to vector<8x32xbf16>
    %35 = arith.truncf %32 : vector<8x32xf32> to vector<8x32xbf16>
    %cst_13 = arith.constant dense<0.000000e+00> : vector<8x8xf32>
    %36 = tpu.matmul %34, %35, %cst_13 {dimension_numbers = #tpu.dot_dimension_numbers<[1], [1], [0], [0], [0, 0, 1, 0], [], []>} : vector<8x32xbf16>, vector<8x32xbf16>, vector<8x8xf32> -> vector<8x8xf32>
    %cst_14 = arith.constant 0.176776692 : f32
    %37 = vector.broadcast %cst_14 : f32 to vector<8x8xf32>
    %38 = arith.mulf %36, %37 : vector<8x8xf32>
    %cst_15 = arith.constant dense<0xFF800000> : vector<8xf32>
    %39 = vector.multi_reduction <maximumf>, %38, %cst_15 [1] : vector<8x8xf32> to vector<8xf32>
    %40 = vector.shape_cast %39 : vector<8xf32> to vector<8x1xf32>
    %41 = vector.broadcast %40 : vector<8x1xf32> to vector<8x8xf32>
    %42 = arith.subf %38, %41 : vector<8x8xf32>
    %43 = math.exp %42 : vector<8x8xf32>
    %cst_16 = arith.constant dense<0.000000e+00> : vector<8xf32>
    %44 = vector.multi_reduction <add>, %43, %cst_16 [1] : vector<8x8xf32> to vector<8xf32>
    %45 = vector.shape_cast %44 : vector<8xf32> to vector<8x1xf32>
    %46 = tpu.reciprocal %45 {approx = true} : vector<8x1xf32> -> vector<8x1xf32>
    %47 = vector.broadcast %46 : vector<8x1xf32> to vector<8x8xf32>
    %48 = arith.mulf %43, %47 : vector<8x8xf32>
    %49 = arith.truncf %48 : vector<8x8xf32> to vector<8x8xbf16>
    %50 = arith.truncf %33 : vector<8x32xf32> to vector<8x32xbf16>
    %cst_17 = arith.constant dense<0.000000e+00> : vector<8x32xf32>
    %51 = tpu.matmul %49, %50, %cst_17 {dimension_numbers = #tpu.dot_dimension_numbers<[1], [0], [0], [1], [0, 0, 1, 1], [], []>} : vector<8x8xbf16>, vector<8x32xbf16>, vector<8x32xf32> -> vector<8x32xf32>
    %52 = vector.extract_strided_slice %9 {offsets = [0, 64], sizes = [8, 32], strides = [1, 1]} : vector<8x384xf32> to vector<8x32xf32>
    %53 = vector.extract_strided_slice %9 {offsets = [0, 192], sizes = [8, 32], strides = [1, 1]} : vector<8x384xf32> to vector<8x32xf32>
    %54 = vector.extract_strided_slice %9 {offsets = [0, 320], sizes = [8, 32], strides = [1, 1]} : vector<8x384xf32> to vector<8x32xf32>
    %55 = arith.truncf %52 : vector<8x32xf32> to vector<8x32xbf16>
    %56 = arith.truncf %53 : vector<8x32xf32> to vector<8x32xbf16>
    %cst_18 = arith.constant dense<0.000000e+00> : vector<8x8xf32>
    %57 = tpu.matmul %55, %56, %cst_18 {dimension_numbers = #tpu.dot_dimension_numbers<[1], [1], [0], [0], [0, 0, 1, 0], [], []>} : vector<8x32xbf16>, vector<8x32xbf16>, vector<8x8xf32> -> vector<8x8xf32>
    %cst_19 = arith.constant 0.176776692 : f32
    %58 = vector.broadcast %cst_19 : f32 to vector<8x8xf32>
    %59 = arith.mulf %57, %58 : vector<8x8xf32>
    %cst_20 = arith.constant dense<0xFF800000> : vector<8xf32>
    %60 = vector.multi_reduction <maximumf>, %59, %cst_20 [1] : vector<8x8xf32> to vector<8xf32>
    %61 = vector.shape_cast %60 : vector<8xf32> to vector<8x1xf32>
    %62 = vector.broadcast %61 : vector<8x1xf32> to vector<8x8xf32>
    %63 = arith.subf %59, %62 : vector<8x8xf32>
    %64 = math.exp %63 : vector<8x8xf32>
    %cst_21 = arith.constant dense<0.000000e+00> : vector<8xf32>
    %65 = vector.multi_reduction <add>, %64, %cst_21 [1] : vector<8x8xf32> to vector<8xf32>
    %66 = vector.shape_cast %65 : vector<8xf32> to vector<8x1xf32>
    %67 = tpu.reciprocal %66 {approx = true} : vector<8x1xf32> -> vector<8x1xf32>
    %68 = vector.broadcast %67 : vector<8x1xf32> to vector<8x8xf32>
    %69 = arith.mulf %64, %68 : vector<8x8xf32>
    %70 = arith.truncf %69 : vector<8x8xf32> to vector<8x8xbf16>
    %71 = arith.truncf %54 : vector<8x32xf32> to vector<8x32xbf16>
    %cst_22 = arith.constant dense<0.000000e+00> : vector<8x32xf32>
    %72 = tpu.matmul %70, %71, %cst_22 {dimension_numbers = #tpu.dot_dimension_numbers<[1], [0], [0], [1], [0, 0, 1, 1], [], []>} : vector<8x8xbf16>, vector<8x32xbf16>, vector<8x32xf32> -> vector<8x32xf32>
    %73 = vector.extract_strided_slice %9 {offsets = [0, 96], sizes = [8, 32], strides = [1, 1]} : vector<8x384xf32> to vector<8x32xf32>
    %74 = vector.extract_strided_slice %9 {offsets = [0, 224], sizes = [8, 32], strides = [1, 1]} : vector<8x384xf32> to vector<8x32xf32>
    %75 = vector.extract_strided_slice %9 {offsets = [0, 352], sizes = [8, 32], strides = [1, 1]} : vector<8x384xf32> to vector<8x32xf32>
    %76 = arith.truncf %73 : vector<8x32xf32> to vector<8x32xbf16>
    %77 = arith.truncf %74 : vector<8x32xf32> to vector<8x32xbf16>
    %cst_23 = arith.constant dense<0.000000e+00> : vector<8x8xf32>
    %78 = tpu.matmul %76, %77, %cst_23 {dimension_numbers = #tpu.dot_dimension_numbers<[1], [1], [0], [0], [0, 0, 1, 0], [], []>} : vector<8x32xbf16>, vector<8x32xbf16>, vector<8x8xf32> -> vector<8x8xf32>
    %cst_24 = arith.constant 0.176776692 : f32
    %79 = vector.broadcast %cst_24 : f32 to vector<8x8xf32>
    %80 = arith.mulf %78, %79 : vector<8x8xf32>
    %cst_25 = arith.constant dense<0xFF800000> : vector<8xf32>
    %81 = vector.multi_reduction <maximumf>, %80, %cst_25 [1] : vector<8x8xf32> to vector<8xf32>
    %82 = vector.shape_cast %81 : vector<8xf32> to vector<8x1xf32>
    %83 = vector.broadcast %82 : vector<8x1xf32> to vector<8x8xf32>
    %84 = arith.subf %80, %83 : vector<8x8xf32>
    %85 = math.exp %84 : vector<8x8xf32>
    %cst_26 = arith.constant dense<0.000000e+00> : vector<8xf32>
    %86 = vector.multi_reduction <add>, %85, %cst_26 [1] : vector<8x8xf32> to vector<8xf32>
    %87 = vector.shape_cast %86 : vector<8xf32> to vector<8x1xf32>
    %88 = tpu.reciprocal %87 {approx = true} : vector<8x1xf32> -> vector<8x1xf32>
    %89 = vector.broadcast %88 : vector<8x1xf32> to vector<8x8xf32>
    %90 = arith.mulf %85, %89 : vector<8x8xf32>
    %91 = arith.truncf %90 : vector<8x8xf32> to vector<8x8xbf16>
    %92 = arith.truncf %75 : vector<8x32xf32> to vector<8x32xbf16>
    %cst_27 = arith.constant dense<0.000000e+00> : vector<8x32xf32>
    %93 = tpu.matmul %91, %92, %cst_27 {dimension_numbers = #tpu.dot_dimension_numbers<[1], [0], [0], [1], [0, 0, 1, 1], [], []>} : vector<8x8xbf16>, vector<8x32xbf16>, vector<8x32xf32> -> vector<8x32xf32>
    %94 = tpu.concatenate %30, %51, %72, %93 in 1 : vector<8x32xf32>, vector<8x32xf32>, vector<8x32xf32>, vector<8x32xf32> -> vector<8x128xf32>
    %c0_28 = arith.constant 0 : index
    %c0_29 = arith.constant 0 : index
    %c0_30 = arith.constant 0 : index
    %95 = vector.load %arg4[%c0_28, %c0_29, %c0_30] : memref<2x128x128xbf16, #tpu.memory_space<vmem>>, vector<1x128x128xbf16>
    %96 = vector.shape_cast %95 : vector<1x128x128xbf16> to vector<128x128xbf16>
    %97 = arith.truncf %94 : vector<8x128xf32> to vector<8x128xbf16>
    %cst_31 = arith.constant dense<0.000000e+00> : vector<8x128xf32>
    %98 = tpu.matmul %97, %96, %cst_31 {dimension_numbers = #tpu.dot_dimension_numbers<[1], [0], [0], [1], [0, 0, 1, 1], [], []>} : vector<8x128xbf16>, vector<128x128xbf16>, vector<8x128xf32> -> vector<8x128xf32>
    %c0_32 = arith.constant 0 : index
    %c0_33 = arith.constant 0 : index
    %c0_34 = arith.constant 0 : index
    %99 = vector.load %arg5[%c0_32, %c0_33, %c0_34] : memref<2x1x128xf32, #tpu.memory_space<vmem>>, vector<1x1x128xf32>
    %100 = vector.shape_cast %99 : vector<1x1x128xf32> to vector<1x128xf32>
    %101 = vector.broadcast %100 : vector<1x128xf32> to vector<8x128xf32>
    %102 = arith.addf %98, %101 : vector<8x128xf32>
    %103 = arith.addf %1, %102 : vector<8x128xf32>
    %c0_35 = arith.constant 0 : index
    %c0_36 = arith.constant 0 : index
    %c0_37 = arith.constant 0 : index
    %104 = vector.load %arg6[%c0_35, %c0_36, %c0_37] : memref<2x1x128xf32, #tpu.memory_space<vmem>>, vector<1x1x128xf32>
    %105 = vector.shape_cast %104 : vector<1x1x128xf32> to vector<1x128xf32>
    %c0_38 = arith.constant 0 : index
    %c0_39 = arith.constant 0 : index
    %c0_40 = arith.constant 0 : index
    %106 = vector.load %arg7[%c0_38, %c0_39, %c0_40] : memref<2x1x128xf32, #tpu.memory_space<vmem>>, vector<1x1x128xf32>
    %107 = vector.shape_cast %106 : vector<1x1x128xf32> to vector<1x128xf32>
    %cst_41 = arith.constant dense<0.000000e+00> : vector<8xf32>
    %108 = vector.multi_reduction <add>, %103, %cst_41 [1] : vector<8x128xf32> to vector<8xf32>
    %109 = vector.shape_cast %108 : vector<8xf32> to vector<8x1xf32>
    %cst_42 = arith.constant 1.280000e+02 : f32
    %110 = vector.broadcast %cst_42 : f32 to vector<8x1xf32>
    %111 = arith.divf %109, %110 : vector<8x1xf32>
    %112 = vector.broadcast %111 : vector<8x1xf32> to vector<8x128xf32>
    %113 = arith.subf %103, %112 : vector<8x128xf32>
    %114 = arith.mulf %113, %113 : vector<8x128xf32>
    %cst_43 = arith.constant dense<0.000000e+00> : vector<8xf32>
    %115 = vector.multi_reduction <add>, %114, %cst_43 [1] : vector<8x128xf32> to vector<8xf32>
    %116 = vector.shape_cast %115 : vector<8xf32> to vector<8x1xf32>
    %cst_44 = arith.constant 1.280000e+02 : f32
    %117 = vector.broadcast %cst_44 : f32 to vector<8x1xf32>
    %118 = arith.divf %116, %117 : vector<8x1xf32>
    %119 = vector.broadcast %111 : vector<8x1xf32> to vector<8x128xf32>
    %120 = arith.subf %103, %119 : vector<8x128xf32>
    %cst_45 = arith.constant 9.99999974E-6 : f32
    %121 = vector.broadcast %cst_45 : f32 to vector<8x1xf32>
    %122 = arith.addf %118, %121 : vector<8x1xf32>
    %123 = math.rsqrt %122 : vector<8x1xf32>
    %124 = vector.broadcast %123 : vector<8x1xf32> to vector<8x128xf32>
    %125 = arith.mulf %120, %124 : vector<8x128xf32>
    %126 = vector.broadcast %105 : vector<1x128xf32> to vector<8x128xf32>
    %127 = arith.mulf %125, %126 : vector<8x128xf32>
    %128 = vector.broadcast %107 : vector<1x128xf32> to vector<8x128xf32>
    %129 = arith.addf %127, %128 : vector<8x128xf32>
    %c0_46 = arith.constant 0 : index
    %c0_47 = arith.constant 0 : index
    %c0_48 = arith.constant 0 : index
    %130 = vector.load %arg8[%c0_46, %c0_47, %c0_48] : memref<2x128x256xbf16, #tpu.memory_space<vmem>>, vector<1x128x256xbf16>
    %131 = vector.shape_cast %130 : vector<1x128x256xbf16> to vector<128x256xbf16>
    %132 = arith.truncf %129 : vector<8x128xf32> to vector<8x128xbf16>
    %cst_49 = arith.constant dense<0.000000e+00> : vector<8x256xf32>
    %133 = tpu.matmul %132, %131, %cst_49 {dimension_numbers = #tpu.dot_dimension_numbers<[1], [0], [0], [1], [0, 0, 1, 1], [], []>} : vector<8x128xbf16>, vector<128x256xbf16>, vector<8x256xf32> -> vector<8x256xf32>
    %c0_50 = arith.constant 0 : index
    %c0_51 = arith.constant 0 : index
    %c0_52 = arith.constant 0 : index
    %134 = vector.load %arg9[%c0_50, %c0_51, %c0_52] : memref<2x1x256xf32, #tpu.memory_space<vmem>>, vector<1x1x256xf32>
    %135 = vector.shape_cast %134 : vector<1x1x256xf32> to vector<1x256xf32>
    %136 = vector.broadcast %135 : vector<1x256xf32> to vector<8x256xf32>
    %137 = arith.addf %133, %136 : vector<8x256xf32>
    %138 = arith.mulf %137, %137 : vector<8x256xf32>
    %139 = arith.mulf %137, %138 : vector<8x256xf32>
    %cst_53 = arith.constant 4.471500e-02 : f32
    %140 = vector.broadcast %cst_53 : f32 to vector<8x256xf32>
    %141 = arith.mulf %140, %139 : vector<8x256xf32>
    %142 = arith.addf %137, %141 : vector<8x256xf32>
    %cst_54 = arith.constant 0.797884583 : f32
    %143 = vector.broadcast %cst_54 : f32 to vector<8x256xf32>
    %144 = arith.mulf %143, %142 : vector<8x256xf32>
    %145 = math.tanh %144 : vector<8x256xf32>
    %cst_55 = arith.constant 1.000000e+00 : f32
    %146 = vector.broadcast %cst_55 : f32 to vector<8x256xf32>
    %147 = arith.addf %146, %145 : vector<8x256xf32>
    %cst_56 = arith.constant 5.000000e-01 : f32
    %148 = vector.broadcast %cst_56 : f32 to vector<8x256xf32>
    %149 = arith.mulf %148, %147 : vector<8x256xf32>
    %150 = arith.mulf %137, %149 : vector<8x256xf32>
    %c0_57 = arith.constant 0 : index
    %c0_58 = arith.constant 0 : index
    %c0_59 = arith.constant 0 : index
    %151 = vector.load %arg10[%c0_57, %c0_58, %c0_59] : memref<2x256x128xbf16, #tpu.memory_space<vmem>>, vector<1x256x128xbf16>
    %152 = vector.shape_cast %151 : vector<1x256x128xbf16> to vector<256x128xbf16>
    %153 = arith.truncf %150 : vector<8x256xf32> to vector<8x256xbf16>
    %cst_60 = arith.constant dense<0.000000e+00> : vector<8x128xf32>
    %154 = tpu.matmul %153, %152, %cst_60 {dimension_numbers = #tpu.dot_dimension_numbers<[1], [0], [0], [1], [0, 0, 1, 1], [], []>} : vector<8x256xbf16>, vector<256x128xbf16>, vector<8x128xf32> -> vector<8x128xf32>
    %c0_61 = arith.constant 0 : index
    %c0_62 = arith.constant 0 : index
    %c0_63 = arith.constant 0 : index
    %155 = vector.load %arg11[%c0_61, %c0_62, %c0_63] : memref<2x1x128xf32, #tpu.memory_space<vmem>>, vector<1x1x128xf32>
    %156 = vector.shape_cast %155 : vector<1x1x128xf32> to vector<1x128xf32>
    %157 = vector.broadcast %156 : vector<1x128xf32> to vector<8x128xf32>
    %158 = arith.addf %154, %157 : vector<8x128xf32>
    %159 = arith.addf %129, %158 : vector<8x128xf32>
    %c0_64 = arith.constant 0 : index
    %c0_65 = arith.constant 0 : index
    %c0_66 = arith.constant 0 : index
    %160 = vector.load %arg12[%c0_64, %c0_65, %c0_66] : memref<2x1x128xf32, #tpu.memory_space<vmem>>, vector<1x1x128xf32>
    %161 = vector.shape_cast %160 : vector<1x1x128xf32> to vector<1x128xf32>
    %c0_67 = arith.constant 0 : index
    %c0_68 = arith.constant 0 : index
    %c0_69 = arith.constant 0 : index
    %162 = vector.load %arg13[%c0_67, %c0_68, %c0_69] : memref<2x1x128xf32, #tpu.memory_space<vmem>>, vector<1x1x128xf32>
    %163 = vector.shape_cast %162 : vector<1x1x128xf32> to vector<1x128xf32>
    %cst_70 = arith.constant dense<0.000000e+00> : vector<8xf32>
    %164 = vector.multi_reduction <add>, %159, %cst_70 [1] : vector<8x128xf32> to vector<8xf32>
    %165 = vector.shape_cast %164 : vector<8xf32> to vector<8x1xf32>
    %cst_71 = arith.constant 1.280000e+02 : f32
    %166 = vector.broadcast %cst_71 : f32 to vector<8x1xf32>
    %167 = arith.divf %165, %166 : vector<8x1xf32>
    %168 = vector.broadcast %167 : vector<8x1xf32> to vector<8x128xf32>
    %169 = arith.subf %159, %168 : vector<8x128xf32>
    %170 = arith.mulf %169, %169 : vector<8x128xf32>
    %cst_72 = arith.constant dense<0.000000e+00> : vector<8xf32>
    %171 = vector.multi_reduction <add>, %170, %cst_72 [1] : vector<8x128xf32> to vector<8xf32>
    %172 = vector.shape_cast %171 : vector<8xf32> to vector<8x1xf32>
    %cst_73 = arith.constant 1.280000e+02 : f32
    %173 = vector.broadcast %cst_73 : f32 to vector<8x1xf32>
    %174 = arith.divf %172, %173 : vector<8x1xf32>
    %175 = vector.broadcast %167 : vector<8x1xf32> to vector<8x128xf32>
    %176 = arith.subf %159, %175 : vector<8x128xf32>
    %cst_74 = arith.constant 9.99999974E-6 : f32
    %177 = vector.broadcast %cst_74 : f32 to vector<8x1xf32>
    %178 = arith.addf %174, %177 : vector<8x1xf32>
    %179 = math.rsqrt %178 : vector<8x1xf32>
    %180 = vector.broadcast %179 : vector<8x1xf32> to vector<8x128xf32>
    %181 = arith.mulf %176, %180 : vector<8x128xf32>
    %182 = vector.broadcast %161 : vector<1x128xf32> to vector<8x128xf32>
    %183 = arith.mulf %181, %182 : vector<8x128xf32>
    %184 = vector.broadcast %163 : vector<1x128xf32> to vector<8x128xf32>
    %185 = arith.addf %183, %184 : vector<8x128xf32>
    %c1 = arith.constant 1 : index
    %c0_75 = arith.constant 0 : index
    %c0_76 = arith.constant 0 : index
    %186 = vector.load %arg2[%c1, %c0_75, %c0_76] : memref<2x128x384xbf16, #tpu.memory_space<vmem>>, vector<1x128x384xbf16>
    %187 = vector.shape_cast %186 : vector<1x128x384xbf16> to vector<128x384xbf16>
    %188 = arith.truncf %185 : vector<8x128xf32> to vector<8x128xbf16>
    %cst_77 = arith.constant dense<0.000000e+00> : vector<8x384xf32>
    %189 = tpu.matmul %188, %187, %cst_77 {dimension_numbers = #tpu.dot_dimension_numbers<[1], [0], [0], [1], [0, 0, 1, 1], [], []>} : vector<8x128xbf16>, vector<128x384xbf16>, vector<8x384xf32> -> vector<8x384xf32>
    %c1_78 = arith.constant 1 : index
    %c0_79 = arith.constant 0 : index
    %c0_80 = arith.constant 0 : index
    %190 = vector.load %arg3[%c1_78, %c0_79, %c0_80] : memref<2x1x384xf32, #tpu.memory_space<vmem>>, vector<1x1x384xf32>
    %191 = vector.shape_cast %190 : vector<1x1x384xf32> to vector<1x384xf32>
    %192 = vector.broadcast %191 : vector<1x384xf32> to vector<8x384xf32>
    %193 = arith.addf %189, %192 : vector<8x384xf32>
    %194 = vector.extract_strided_slice %193 {offsets = [0, 0], sizes = [8, 32], strides = [1, 1]} : vector<8x384xf32> to vector<8x32xf32>
    %195 = vector.extract_strided_slice %193 {offsets = [0, 128], sizes = [8, 32], strides = [1, 1]} : vector<8x384xf32> to vector<8x32xf32>
    %196 = vector.extract_strided_slice %193 {offsets = [0, 256], sizes = [8, 32], strides = [1, 1]} : vector<8x384xf32> to vector<8x32xf32>
    %197 = arith.truncf %194 : vector<8x32xf32> to vector<8x32xbf16>
    %198 = arith.truncf %195 : vector<8x32xf32> to vector<8x32xbf16>
    %cst_81 = arith.constant dense<0.000000e+00> : vector<8x8xf32>
    %199 = tpu.matmul %197, %198, %cst_81 {dimension_numbers = #tpu.dot_dimension_numbers<[1], [1], [0], [0], [0, 0, 1, 0], [], []>} : vector<8x32xbf16>, vector<8x32xbf16>, vector<8x8xf32> -> vector<8x8xf32>
    %cst_82 = arith.constant 0.176776692 : f32
    %200 = vector.broadcast %cst_82 : f32 to vector<8x8xf32>
    %201 = arith.mulf %199, %200 : vector<8x8xf32>
    %cst_83 = arith.constant dense<0xFF800000> : vector<8xf32>
    %202 = vector.multi_reduction <maximumf>, %201, %cst_83 [1] : vector<8x8xf32> to vector<8xf32>
    %203 = vector.shape_cast %202 : vector<8xf32> to vector<8x1xf32>
    %204 = vector.broadcast %203 : vector<8x1xf32> to vector<8x8xf32>
    %205 = arith.subf %201, %204 : vector<8x8xf32>
    %206 = math.exp %205 : vector<8x8xf32>
    %cst_84 = arith.constant dense<0.000000e+00> : vector<8xf32>
    %207 = vector.multi_reduction <add>, %206, %cst_84 [1] : vector<8x8xf32> to vector<8xf32>
    %208 = vector.shape_cast %207 : vector<8xf32> to vector<8x1xf32>
    %209 = tpu.reciprocal %208 {approx = true} : vector<8x1xf32> -> vector<8x1xf32>
    %210 = vector.broadcast %209 : vector<8x1xf32> to vector<8x8xf32>
    %211 = arith.mulf %206, %210 : vector<8x8xf32>
    %212 = arith.truncf %211 : vector<8x8xf32> to vector<8x8xbf16>
    %213 = arith.truncf %196 : vector<8x32xf32> to vector<8x32xbf16>
    %cst_85 = arith.constant dense<0.000000e+00> : vector<8x32xf32>
    %214 = tpu.matmul %212, %213, %cst_85 {dimension_numbers = #tpu.dot_dimension_numbers<[1], [0], [0], [1], [0, 0, 1, 1], [], []>} : vector<8x8xbf16>, vector<8x32xbf16>, vector<8x32xf32> -> vector<8x32xf32>
    %215 = vector.extract_strided_slice %193 {offsets = [0, 32], sizes = [8, 32], strides = [1, 1]} : vector<8x384xf32> to vector<8x32xf32>
    %216 = vector.extract_strided_slice %193 {offsets = [0, 160], sizes = [8, 32], strides = [1, 1]} : vector<8x384xf32> to vector<8x32xf32>
    %217 = vector.extract_strided_slice %193 {offsets = [0, 288], sizes = [8, 32], strides = [1, 1]} : vector<8x384xf32> to vector<8x32xf32>
    %218 = arith.truncf %215 : vector<8x32xf32> to vector<8x32xbf16>
    %219 = arith.truncf %216 : vector<8x32xf32> to vector<8x32xbf16>
    %cst_86 = arith.constant dense<0.000000e+00> : vector<8x8xf32>
    %220 = tpu.matmul %218, %219, %cst_86 {dimension_numbers = #tpu.dot_dimension_numbers<[1], [1], [0], [0], [0, 0, 1, 0], [], []>} : vector<8x32xbf16>, vector<8x32xbf16>, vector<8x8xf32> -> vector<8x8xf32>
    %cst_87 = arith.constant 0.176776692 : f32
    %221 = vector.broadcast %cst_87 : f32 to vector<8x8xf32>
    %222 = arith.mulf %220, %221 : vector<8x8xf32>
    %cst_88 = arith.constant dense<0xFF800000> : vector<8xf32>
    %223 = vector.multi_reduction <maximumf>, %222, %cst_88 [1] : vector<8x8xf32> to vector<8xf32>
    %224 = vector.shape_cast %223 : vector<8xf32> to vector<8x1xf32>
    %225 = vector.broadcast %224 : vector<8x1xf32> to vector<8x8xf32>
    %226 = arith.subf %222, %225 : vector<8x8xf32>
    %227 = math.exp %226 : vector<8x8xf32>
    %cst_89 = arith.constant dense<0.000000e+00> : vector<8xf32>
    %228 = vector.multi_reduction <add>, %227, %cst_89 [1] : vector<8x8xf32> to vector<8xf32>
    %229 = vector.shape_cast %228 : vector<8xf32> to vector<8x1xf32>
    %230 = tpu.reciprocal %229 {approx = true} : vector<8x1xf32> -> vector<8x1xf32>
    %231 = vector.broadcast %230 : vector<8x1xf32> to vector<8x8xf32>
    %232 = arith.mulf %227, %231 : vector<8x8xf32>
    %233 = arith.truncf %232 : vector<8x8xf32> to vector<8x8xbf16>
    %234 = arith.truncf %217 : vector<8x32xf32> to vector<8x32xbf16>
    %cst_90 = arith.constant dense<0.000000e+00> : vector<8x32xf32>
    %235 = tpu.matmul %233, %234, %cst_90 {dimension_numbers = #tpu.dot_dimension_numbers<[1], [0], [0], [1], [0, 0, 1, 1], [], []>} : vector<8x8xbf16>, vector<8x32xbf16>, vector<8x32xf32> -> vector<8x32xf32>
    %236 = vector.extract_strided_slice %193 {offsets = [0, 64], sizes = [8, 32], strides = [1, 1]} : vector<8x384xf32> to vector<8x32xf32>
    %237 = vector.extract_strided_slice %193 {offsets = [0, 192], sizes = [8, 32], strides = [1, 1]} : vector<8x384xf32> to vector<8x32xf32>
    %238 = vector.extract_strided_slice %193 {offsets = [0, 320], sizes = [8, 32], strides = [1, 1]} : vector<8x384xf32> to vector<8x32xf32>
    %239 = arith.truncf %236 : vector<8x32xf32> to vector<8x32xbf16>
    %240 = arith.truncf %237 : vector<8x32xf32> to vector<8x32xbf16>
    %cst_91 = arith.constant dense<0.000000e+00> : vector<8x8xf32>
    %241 = tpu.matmul %239, %240, %cst_91 {dimension_numbers = #tpu.dot_dimension_numbers<[1], [1], [0], [0], [0, 0, 1, 0], [], []>} : vector<8x32xbf16>, vector<8x32xbf16>, vector<8x8xf32> -> vector<8x8xf32>
    %cst_92 = arith.constant 0.176776692 : f32
    %242 = vector.broadcast %cst_92 : f32 to vector<8x8xf32>
    %243 = arith.mulf %241, %242 : vector<8x8xf32>
    %cst_93 = arith.constant dense<0xFF800000> : vector<8xf32>
    %244 = vector.multi_reduction <maximumf>, %243, %cst_93 [1] : vector<8x8xf32> to vector<8xf32>
    %245 = vector.shape_cast %244 : vector<8xf32> to vector<8x1xf32>
    %246 = vector.broadcast %245 : vector<8x1xf32> to vector<8x8xf32>
    %247 = arith.subf %243, %246 : vector<8x8xf32>
    %248 = math.exp %247 : vector<8x8xf32>
    %cst_94 = arith.constant dense<0.000000e+00> : vector<8xf32>
    %249 = vector.multi_reduction <add>, %248, %cst_94 [1] : vector<8x8xf32> to vector<8xf32>
    %250 = vector.shape_cast %249 : vector<8xf32> to vector<8x1xf32>
    %251 = tpu.reciprocal %250 {approx = true} : vector<8x1xf32> -> vector<8x1xf32>
    %252 = vector.broadcast %251 : vector<8x1xf32> to vector<8x8xf32>
    %253 = arith.mulf %248, %252 : vector<8x8xf32>
    %254 = arith.truncf %253 : vector<8x8xf32> to vector<8x8xbf16>
    %255 = arith.truncf %238 : vector<8x32xf32> to vector<8x32xbf16>
    %cst_95 = arith.constant dense<0.000000e+00> : vector<8x32xf32>
    %256 = tpu.matmul %254, %255, %cst_95 {dimension_numbers = #tpu.dot_dimension_numbers<[1], [0], [0], [1], [0, 0, 1, 1], [], []>} : vector<8x8xbf16>, vector<8x32xbf16>, vector<8x32xf32> -> vector<8x32xf32>
    %257 = vector.extract_strided_slice %193 {offsets = [0, 96], sizes = [8, 32], strides = [1, 1]} : vector<8x384xf32> to vector<8x32xf32>
    %258 = vector.extract_strided_slice %193 {offsets = [0, 224], sizes = [8, 32], strides = [1, 1]} : vector<8x384xf32> to vector<8x32xf32>
    %259 = vector.extract_strided_slice %193 {offsets = [0, 352], sizes = [8, 32], strides = [1, 1]} : vector<8x384xf32> to vector<8x32xf32>
    %260 = arith.truncf %257 : vector<8x32xf32> to vector<8x32xbf16>
    %261 = arith.truncf %258 : vector<8x32xf32> to vector<8x32xbf16>
    %cst_96 = arith.constant dense<0.000000e+00> : vector<8x8xf32>
    %262 = tpu.matmul %260, %261, %cst_96 {dimension_numbers = #tpu.dot_dimension_numbers<[1], [1], [0], [0], [0, 0, 1, 0], [], []>} : vector<8x32xbf16>, vector<8x32xbf16>, vector<8x8xf32> -> vector<8x8xf32>
    %cst_97 = arith.constant 0.176776692 : f32
    %263 = vector.broadcast %cst_97 : f32 to vector<8x8xf32>
    %264 = arith.mulf %262, %263 : vector<8x8xf32>
    %cst_98 = arith.constant dense<0xFF800000> : vector<8xf32>
    %265 = vector.multi_reduction <maximumf>, %264, %cst_98 [1] : vector<8x8xf32> to vector<8xf32>
    %266 = vector.shape_cast %265 : vector<8xf32> to vector<8x1xf32>
    %267 = vector.broadcast %266 : vector<8x1xf32> to vector<8x8xf32>
    %268 = arith.subf %264, %267 : vector<8x8xf32>
    %269 = math.exp %268 : vector<8x8xf32>
    %cst_99 = arith.constant dense<0.000000e+00> : vector<8xf32>
    %270 = vector.multi_reduction <add>, %269, %cst_99 [1] : vector<8x8xf32> to vector<8xf32>
    %271 = vector.shape_cast %270 : vector<8xf32> to vector<8x1xf32>
    %272 = tpu.reciprocal %271 {approx = true} : vector<8x1xf32> -> vector<8x1xf32>
    %273 = vector.broadcast %272 : vector<8x1xf32> to vector<8x8xf32>
    %274 = arith.mulf %269, %273 : vector<8x8xf32>
    %275 = arith.truncf %274 : vector<8x8xf32> to vector<8x8xbf16>
    %276 = arith.truncf %259 : vector<8x32xf32> to vector<8x32xbf16>
    %cst_100 = arith.constant dense<0.000000e+00> : vector<8x32xf32>
    %277 = tpu.matmul %275, %276, %cst_100 {dimension_numbers = #tpu.dot_dimension_numbers<[1], [0], [0], [1], [0, 0, 1, 1], [], []>} : vector<8x8xbf16>, vector<8x32xbf16>, vector<8x32xf32> -> vector<8x32xf32>
    %278 = tpu.concatenate %214, %235, %256, %277 in 1 : vector<8x32xf32>, vector<8x32xf32>, vector<8x32xf32>, vector<8x32xf32> -> vector<8x128xf32>
    %c1_101 = arith.constant 1 : index
    %c0_102 = arith.constant 0 : index
    %c0_103 = arith.constant 0 : index
    %279 = vector.load %arg4[%c1_101, %c0_102, %c0_103] : memref<2x128x128xbf16, #tpu.memory_space<vmem>>, vector<1x128x128xbf16>
    %280 = vector.shape_cast %279 : vector<1x128x128xbf16> to vector<128x128xbf16>
    %281 = arith.truncf %278 : vector<8x128xf32> to vector<8x128xbf16>
    %cst_104 = arith.constant dense<0.000000e+00> : vector<8x128xf32>
    %282 = tpu.matmul %281, %280, %cst_104 {dimension_numbers = #tpu.dot_dimension_numbers<[1], [0], [0], [1], [0, 0, 1, 1], [], []>} : vector<8x128xbf16>, vector<128x128xbf16>, vector<8x128xf32> -> vector<8x128xf32>
    %c1_105 = arith.constant 1 : index
    %c0_106 = arith.constant 0 : index
    %c0_107 = arith.constant 0 : index
    %283 = vector.load %arg5[%c1_105, %c0_106, %c0_107] : memref<2x1x128xf32, #tpu.memory_space<vmem>>, vector<1x1x128xf32>
    %284 = vector.shape_cast %283 : vector<1x1x128xf32> to vector<1x128xf32>
    %285 = vector.broadcast %284 : vector<1x128xf32> to vector<8x128xf32>
    %286 = arith.addf %282, %285 : vector<8x128xf32>
    %287 = arith.addf %185, %286 : vector<8x128xf32>
    %c1_108 = arith.constant 1 : index
    %c0_109 = arith.constant 0 : index
    %c0_110 = arith.constant 0 : index
    %288 = vector.load %arg6[%c1_108, %c0_109, %c0_110] : memref<2x1x128xf32, #tpu.memory_space<vmem>>, vector<1x1x128xf32>
    %289 = vector.shape_cast %288 : vector<1x1x128xf32> to vector<1x128xf32>
    %c1_111 = arith.constant 1 : index
    %c0_112 = arith.constant 0 : index
    %c0_113 = arith.constant 0 : index
    %290 = vector.load %arg7[%c1_111, %c0_112, %c0_113] : memref<2x1x128xf32, #tpu.memory_space<vmem>>, vector<1x1x128xf32>
    %291 = vector.shape_cast %290 : vector<1x1x128xf32> to vector<1x128xf32>
    %cst_114 = arith.constant dense<0.000000e+00> : vector<8xf32>
    %292 = vector.multi_reduction <add>, %287, %cst_114 [1] : vector<8x128xf32> to vector<8xf32>
    %293 = vector.shape_cast %292 : vector<8xf32> to vector<8x1xf32>
    %cst_115 = arith.constant 1.280000e+02 : f32
    %294 = vector.broadcast %cst_115 : f32 to vector<8x1xf32>
    %295 = arith.divf %293, %294 : vector<8x1xf32>
    %296 = vector.broadcast %295 : vector<8x1xf32> to vector<8x128xf32>
    %297 = arith.subf %287, %296 : vector<8x128xf32>
    %298 = arith.mulf %297, %297 : vector<8x128xf32>
    %cst_116 = arith.constant dense<0.000000e+00> : vector<8xf32>
    %299 = vector.multi_reduction <add>, %298, %cst_116 [1] : vector<8x128xf32> to vector<8xf32>
    %300 = vector.shape_cast %299 : vector<8xf32> to vector<8x1xf32>
    %cst_117 = arith.constant 1.280000e+02 : f32
    %301 = vector.broadcast %cst_117 : f32 to vector<8x1xf32>
    %302 = arith.divf %300, %301 : vector<8x1xf32>
    %303 = vector.broadcast %295 : vector<8x1xf32> to vector<8x128xf32>
    %304 = arith.subf %287, %303 : vector<8x128xf32>
    %cst_118 = arith.constant 9.99999974E-6 : f32
    %305 = vector.broadcast %cst_118 : f32 to vector<8x1xf32>
    %306 = arith.addf %302, %305 : vector<8x1xf32>
    %307 = math.rsqrt %306 : vector<8x1xf32>
    %308 = vector.broadcast %307 : vector<8x1xf32> to vector<8x128xf32>
    %309 = arith.mulf %304, %308 : vector<8x128xf32>
    %310 = vector.broadcast %289 : vector<1x128xf32> to vector<8x128xf32>
    %311 = arith.mulf %309, %310 : vector<8x128xf32>
    %312 = vector.broadcast %291 : vector<1x128xf32> to vector<8x128xf32>
    %313 = arith.addf %311, %312 : vector<8x128xf32>
    %c1_119 = arith.constant 1 : index
    %c0_120 = arith.constant 0 : index
    %c0_121 = arith.constant 0 : index
    %314 = vector.load %arg8[%c1_119, %c0_120, %c0_121] : memref<2x128x256xbf16, #tpu.memory_space<vmem>>, vector<1x128x256xbf16>
    %315 = vector.shape_cast %314 : vector<1x128x256xbf16> to vector<128x256xbf16>
    %316 = arith.truncf %313 : vector<8x128xf32> to vector<8x128xbf16>
    %cst_122 = arith.constant dense<0.000000e+00> : vector<8x256xf32>
    %317 = tpu.matmul %316, %315, %cst_122 {dimension_numbers = #tpu.dot_dimension_numbers<[1], [0], [0], [1], [0, 0, 1, 1], [], []>} : vector<8x128xbf16>, vector<128x256xbf16>, vector<8x256xf32> -> vector<8x256xf32>
    %c1_123 = arith.constant 1 : index
    %c0_124 = arith.constant 0 : index
    %c0_125 = arith.constant 0 : index
    %318 = vector.load %arg9[%c1_123, %c0_124, %c0_125] : memref<2x1x256xf32, #tpu.memory_space<vmem>>, vector<1x1x256xf32>
    %319 = vector.shape_cast %318 : vector<1x1x256xf32> to vector<1x256xf32>
    %320 = vector.broadcast %319 : vector<1x256xf32> to vector<8x256xf32>
    %321 = arith.addf %317, %320 : vector<8x256xf32>
    %322 = arith.mulf %321, %321 : vector<8x256xf32>
    %323 = arith.mulf %321, %322 : vector<8x256xf32>
    %cst_126 = arith.constant 4.471500e-02 : f32
    %324 = vector.broadcast %cst_126 : f32 to vector<8x256xf32>
    %325 = arith.mulf %324, %323 : vector<8x256xf32>
    %326 = arith.addf %321, %325 : vector<8x256xf32>
    %cst_127 = arith.constant 0.797884583 : f32
    %327 = vector.broadcast %cst_127 : f32 to vector<8x256xf32>
    %328 = arith.mulf %327, %326 : vector<8x256xf32>
    %329 = math.tanh %328 : vector<8x256xf32>
    %cst_128 = arith.constant 1.000000e+00 : f32
    %330 = vector.broadcast %cst_128 : f32 to vector<8x256xf32>
    %331 = arith.addf %330, %329 : vector<8x256xf32>
    %cst_129 = arith.constant 5.000000e-01 : f32
    %332 = vector.broadcast %cst_129 : f32 to vector<8x256xf32>
    %333 = arith.mulf %332, %331 : vector<8x256xf32>
    %334 = arith.mulf %321, %333 : vector<8x256xf32>
    %c1_130 = arith.constant 1 : index
    %c0_131 = arith.constant 0 : index
    %c0_132 = arith.constant 0 : index
    %335 = vector.load %arg10[%c1_130, %c0_131, %c0_132] : memref<2x256x128xbf16, #tpu.memory_space<vmem>>, vector<1x256x128xbf16>
    %336 = vector.shape_cast %335 : vector<1x256x128xbf16> to vector<256x128xbf16>
    %337 = arith.truncf %334 : vector<8x256xf32> to vector<8x256xbf16>
    %cst_133 = arith.constant dense<0.000000e+00> : vector<8x128xf32>
    %338 = tpu.matmul %337, %336, %cst_133 {dimension_numbers = #tpu.dot_dimension_numbers<[1], [0], [0], [1], [0, 0, 1, 1], [], []>} : vector<8x256xbf16>, vector<256x128xbf16>, vector<8x128xf32> -> vector<8x128xf32>
    %c1_134 = arith.constant 1 : index
    %c0_135 = arith.constant 0 : index
    %c0_136 = arith.constant 0 : index
    %339 = vector.load %arg11[%c1_134, %c0_135, %c0_136] : memref<2x1x128xf32, #tpu.memory_space<vmem>>, vector<1x1x128xf32>
    %340 = vector.shape_cast %339 : vector<1x1x128xf32> to vector<1x128xf32>
    %341 = vector.broadcast %340 : vector<1x128xf32> to vector<8x128xf32>
    %342 = arith.addf %338, %341 : vector<8x128xf32>
    %343 = arith.addf %313, %342 : vector<8x128xf32>
    %c1_137 = arith.constant 1 : index
    %c0_138 = arith.constant 0 : index
    %c0_139 = arith.constant 0 : index
    %344 = vector.load %arg12[%c1_137, %c0_138, %c0_139] : memref<2x1x128xf32, #tpu.memory_space<vmem>>, vector<1x1x128xf32>
    %345 = vector.shape_cast %344 : vector<1x1x128xf32> to vector<1x128xf32>
    %c1_140 = arith.constant 1 : index
    %c0_141 = arith.constant 0 : index
    %c0_142 = arith.constant 0 : index
    %346 = vector.load %arg13[%c1_140, %c0_141, %c0_142] : memref<2x1x128xf32, #tpu.memory_space<vmem>>, vector<1x1x128xf32>
    %347 = vector.shape_cast %346 : vector<1x1x128xf32> to vector<1x128xf32>
    %cst_143 = arith.constant dense<0.000000e+00> : vector<8xf32>
    %348 = vector.multi_reduction <add>, %343, %cst_143 [1] : vector<8x128xf32> to vector<8xf32>
    %349 = vector.shape_cast %348 : vector<8xf32> to vector<8x1xf32>
    %cst_144 = arith.constant 1.280000e+02 : f32
    %350 = vector.broadcast %cst_144 : f32 to vector<8x1xf32>
    %351 = arith.divf %349, %350 : vector<8x1xf32>
    %352 = vector.broadcast %351 : vector<8x1xf32> to vector<8x128xf32>
    %353 = arith.subf %343, %352 : vector<8x128xf32>
    %354 = arith.mulf %353, %353 : vector<8x128xf32>
    %cst_145 = arith.constant dense<0.000000e+00> : vector<8xf32>
    %355 = vector.multi_reduction <add>, %354, %cst_145 [1] : vector<8x128xf32> to vector<8xf32>
    %356 = vector.shape_cast %355 : vector<8xf32> to vector<8x1xf32>
    %cst_146 = arith.constant 1.280000e+02 : f32
    %357 = vector.broadcast %cst_146 : f32 to vector<8x1xf32>
    %358 = arith.divf %356, %357 : vector<8x1xf32>
    %359 = vector.broadcast %351 : vector<8x1xf32> to vector<8x128xf32>
    %360 = arith.subf %343, %359 : vector<8x128xf32>
    %cst_147 = arith.constant 9.99999974E-6 : f32
    %361 = vector.broadcast %cst_147 : f32 to vector<8x1xf32>
    %362 = arith.addf %358, %361 : vector<8x1xf32>
    %363 = math.rsqrt %362 : vector<8x1xf32>
    %364 = vector.broadcast %363 : vector<8x1xf32> to vector<8x128xf32>
    %365 = arith.mulf %360, %364 : vector<8x128xf32>
    %366 = vector.broadcast %345 : vector<1x128xf32> to vector<8x128xf32>
    %367 = arith.mulf %365, %366 : vector<8x128xf32>
    %368 = vector.broadcast %347 : vector<1x128xf32> to vector<8x128xf32>
    %369 = arith.addf %367, %368 : vector<8x128xf32>
    %cst_148 = arith.constant dense<0.000000e+00> : vector<128xf32>
    %370 = vector.multi_reduction <add>, %369, %cst_148 [0] : vector<8x128xf32> to vector<128xf32>
    %371 = vector.shape_cast %370 : vector<128xf32> to vector<1x128xf32>
    %cst_149 = arith.constant 1.250000e-01 : f32
    %372 = vector.broadcast %cst_149 : f32 to vector<1x128xf32>
    %373 = arith.mulf %371, %372 : vector<1x128xf32>
    %c0_150 = arith.constant 0 : index
    %c0_151 = arith.constant 0 : index
    %374 = vector.load %arg14[%c0_150, %c0_151] : memref<128x256xbf16, #tpu.memory_space<vmem>>, vector<128x256xbf16>
    %375 = arith.truncf %373 : vector<1x128xf32> to vector<1x128xbf16>
    %cst_152 = arith.constant dense<0.000000e+00> : vector<1x256xf32>
    %376 = tpu.matmul %375, %374, %cst_152 {dimension_numbers = #tpu.dot_dimension_numbers<[1], [0], [0], [1], [0, 0, 1, 1], [], []>} : vector<1x128xbf16>, vector<128x256xbf16>, vector<1x256xf32> -> vector<1x256xf32>
    %c0_153 = arith.constant 0 : index
    %c0_154 = arith.constant 0 : index
    %377 = vector.load %arg15[%c0_153, %c0_154] : memref<1x256xf32, #tpu.memory_space<vmem>>, vector<1x256xf32>
    %378 = arith.addf %376, %377 : vector<1x256xf32>
    %cst_155 = arith.constant 0.000000e+00 : f32
    %379 = vector.broadcast %cst_155 : f32 to vector<1x256xf32>
    %380 = arith.maximumf %378, %379 : vector<1x256xf32>
    %c0_156 = arith.constant 0 : index
    %c0_157 = arith.constant 0 : index
    %381 = vector.load %arg16[%c0_156, %c0_157] : memref<256x128xbf16, #tpu.memory_space<vmem>>, vector<256x128xbf16>
    %382 = arith.truncf %380 : vector<1x256xf32> to vector<1x256xbf16>
    %cst_158 = arith.constant dense<0.000000e+00> : vector<1x128xf32>
    %383 = tpu.matmul %382, %381, %cst_158 {dimension_numbers = #tpu.dot_dimension_numbers<[1], [0], [0], [1], [0, 0, 1, 1], [], []>} : vector<1x256xbf16>, vector<256x128xbf16>, vector<1x128xf32> -> vector<1x128xf32>
    %c0_159 = arith.constant 0 : index
    %c0_160 = arith.constant 0 : index
    %384 = vector.load %arg17[%c0_159, %c0_160] : memref<1x128xf32, #tpu.memory_space<vmem>>, vector<1x128xf32>
    %385 = arith.addf %383, %384 : vector<1x128xf32>
    %386 = vector.shape_cast %385 : vector<1x128xf32> to vector<1x128xf32>
    %387 = vector.broadcast %386 : vector<1x128xf32> to vector<8x128xf32>
    %c0_161 = arith.constant 0 : index
    %c0_162 = arith.constant 0 : index
    %c0_163 = arith.constant 0 : index
    %388 = vector.load %arg18[%c0_161, %c0_162, %c0_163] : memref<1x8x128xf32, #tpu.memory_space<vmem>>, vector<1x8x128xf32>
    %389 = vector.shape_cast %388 : vector<1x8x128xf32> to vector<8x128xf32>
    %390 = vector.shape_cast %387 : vector<8x128xf32> to vector<1x8x128xf32>
    tpu.vector_store %arg18[%c0_161, %c0_162, %c0_163], %390 {strides = array<i32>} : memref<1x8x128xf32, #tpu.memory_space<vmem>>, vector<1x8x128xf32>,
    return
  }
  func.func @transform_0(%arg0: i32) -> (i32, i32, i32) {
    %c0_i32 = arith.constant 0 : i32
    %c0_i32_0 = arith.constant 0 : i32
    %c0_i32_1 = arith.constant 0 : i32
    return %arg0, %c0_i32, %c0_i32_0 : i32, i32, i32
  }
  func.func @transform_1(%arg0: i32) -> (i32, i32, i32) {
    %c0_i32 = arith.constant 0 : i32
    %c0_i32_0 = arith.constant 0 : i32
    %c0_i32_1 = arith.constant 0 : i32
    %c0_i32_2 = arith.constant 0 : i32
    return %c0_i32, %c0_i32_0, %c0_i32_1 : i32, i32, i32
  }
  func.func @transform_2(%arg0: i32) -> (i32, i32, i32) {
    %c0_i32 = arith.constant 0 : i32
    %c0_i32_0 = arith.constant 0 : i32
    %c0_i32_1 = arith.constant 0 : i32
    %c0_i32_2 = arith.constant 0 : i32
    return %c0_i32, %c0_i32_0, %c0_i32_1 : i32, i32, i32
  }
  func.func @transform_3(%arg0: i32) -> (i32, i32, i32) {
    %c0_i32 = arith.constant 0 : i32
    %c0_i32_0 = arith.constant 0 : i32
    %c0_i32_1 = arith.constant 0 : i32
    %c0_i32_2 = arith.constant 0 : i32
    return %c0_i32, %c0_i32_0, %c0_i32_1 : i32, i32, i32
  }
  func.func @transform_4(%arg0: i32) -> (i32, i32, i32) {
    %c0_i32 = arith.constant 0 : i32
    %c0_i32_0 = arith.constant 0 : i32
    %c0_i32_1 = arith.constant 0 : i32
    %c0_i32_2 = arith.constant 0 : i32
    return %c0_i32, %c0_i32_0, %c0_i32_1 : i32, i32, i32
  }
  func.func @transform_5(%arg0: i32) -> (i32, i32, i32) {
    %c0_i32 = arith.constant 0 : i32
    %c0_i32_0 = arith.constant 0 : i32
    %c0_i32_1 = arith.constant 0 : i32
    %c0_i32_2 = arith.constant 0 : i32
    return %c0_i32, %c0_i32_0, %c0_i32_1 : i32, i32, i32
  }
  func.func @transform_6(%arg0: i32) -> (i32, i32, i32) {
    %c0_i32 = arith.constant 0 : i32
    %c0_i32_0 = arith.constant 0 : i32
    %c0_i32_1 = arith.constant 0 : i32
    %c0_i32_2 = arith.constant 0 : i32
    return %c0_i32, %c0_i32_0, %c0_i32_1 : i32, i32, i32
  }
  func.func @transform_7(%arg0: i32) -> (i32, i32, i32) {
    %c0_i32 = arith.constant 0 : i32
    %c0_i32_0 = arith.constant 0 : i32
    %c0_i32_1 = arith.constant 0 : i32
    %c0_i32_2 = arith.constant 0 : i32
    return %c0_i32, %c0_i32_0, %c0_i32_1 : i32, i32, i32
  }
  func.func @transform_8(%arg0: i32) -> (i32, i32, i32) {
    %c0_i32 = arith.constant 0 : i32
    %c0_i32_0 = arith.constant 0 : i32
    %c0_i32_1 = arith.constant 0 : i32
    %c0_i32_2 = arith.constant 0 : i32
    return %c0_i32, %c0_i32_0, %c0_i32_1 : i32, i32, i32
  }
  func.func @transform_9(%arg0: i32) -> (i32, i32, i32) {
    %c0_i32 = arith.constant 0 : i32
    %c0_i32_0 = arith.constant 0 : i32
    %c0_i32_1 = arith.constant 0 : i32
    %c0_i32_2 = arith.constant 0 : i32
    return %c0_i32, %c0_i32_0, %c0_i32_1 : i32, i32, i32
  }
  func.func @transform_10(%arg0: i32) -> (i32, i32, i32) {
    %c0_i32 = arith.constant 0 : i32
    %c0_i32_0 = arith.constant 0 : i32
    %c0_i32_1 = arith.constant 0 : i32
    %c0_i32_2 = arith.constant 0 : i32
    return %c0_i32, %c0_i32_0, %c0_i32_1 : i32, i32, i32
  }
  func.func @transform_11(%arg0: i32) -> (i32, i32, i32) {
    %c0_i32 = arith.constant 0 : i32
    %c0_i32_0 = arith.constant 0 : i32
    %c0_i32_1 = arith.constant 0 : i32
    %c0_i32_2 = arith.constant 0 : i32
    return %c0_i32, %c0_i32_0, %c0_i32_1 : i32, i32, i32
  }
  func.func @transform_12(%arg0: i32) -> (i32, i32, i32) {
    %c0_i32 = arith.constant 0 : i32
    %c0_i32_0 = arith.constant 0 : i32
    %c0_i32_1 = arith.constant 0 : i32
    %c0_i32_2 = arith.constant 0 : i32
    return %c0_i32, %c0_i32_0, %c0_i32_1 : i32, i32, i32
  }
  func.func @transform_13(%arg0: i32) -> (i32, i32) {
    %c0_i32 = arith.constant 0 : i32
    %c0_i32_0 = arith.constant 0 : i32
    %c0_i32_1 = arith.constant 0 : i32
    return %c0_i32, %c0_i32_0 : i32, i32
  }
  func.func @transform_14(%arg0: i32) -> (i32, i32) {
    %c0_i32 = arith.constant 0 : i32
    %c0_i32_0 = arith.constant 0 : i32
    %c0_i32_1 = arith.constant 0 : i32
    return %c0_i32, %c0_i32_0 : i32, i32
  }
  func.func @transform_15(%arg0: i32) -> (i32, i32) {
    %c0_i32 = arith.constant 0 : i32
    %c0_i32_0 = arith.constant 0 : i32
    %c0_i32_1 = arith.constant 0 : i32
    return %c0_i32, %c0_i32_0 : i32, i32
  }
  func.func @transform_16(%arg0: i32) -> (i32, i32) {
    %c0_i32 = arith.constant 0 : i32
    %c0_i32_0 = arith.constant 0 : i32
    %c0_i32_1 = arith.constant 0 : i32
    return %c0_i32, %c0_i32_0 : i32, i32
  }
  func.func @transform_17(%arg0: i32) -> (i32, i32, i32) {
    %c0_i32 = arith.constant 0 : i32
    %c0_i32_0 = arith.constant 0 : i32
    %c0_i32_1 = arith.constant 0 : i32
    return %arg0, %c0_i32, %c0_i32_0 : i32, i32, i32
  }
}

</mosaic_0001>

<llo_original>
// kernel: wav2vec2_classifier_forward.3
$region0: #{wav2vec2_classifier_forward.3}
  #allocation0 [shape = 'u32[]', space=smem, size = 0x4, offset = 0x4, fixed_abs, tag = 'smem constant byte address 0x4 - core index']
  #allocation1 [shape = 'u32[144,128]{1,0:T(1,128)}', space=vmem, size = 0x12000, scoped, tag = 'internal scratch']
  %s0 = inlined_call_operand.vmem [shape: f32[2,17,16], index: 0, kind: input, shape index: {}]
  %s1 = inlined_call_operand.vmem [shape: bf16[16,128], index: 1, kind: input, shape index: {}]
  %s2 = inlined_call_operand.vmem [shape: f32[1,128], index: 2, kind: input, shape index: {}]
  %s3 = inlined_call_operand.vmem [shape: f32[1,128], index: 3, kind: input, shape index: {}]
  %s4 = inlined_call_operand.vmem [shape: f32[2,17,128], index: 4, kind: output, shape index: {}]
  %s5 = sld [smem:[#allocation0]]
  $region49: #{wav2vec2_classifier_forward.3} parent=0
    _
  %s7 = ssub.s32 1, %s5
  %s8 = scalar_select 0, %s7, %s5
  loop: start=0, step=1, limit=4
  $region2: #{wav2vec2_classifier_forward.3} parent=0 // loop_pre_header
    _
  $region3: #{wav2vec2_classifier_forward.3} parent=0 // loop_header
    %s10 = sphi 0, %s14
    %p11 = scmp.ge.s32.totalorder %s10, 4
    %s20 = sphi 0, %s22
    %s23 = sphi 0, %s20
    %s24 = sphi 0, %s23
    %s40 = sphi 0, %s24
    %s44 = sphi 0, %s44
    %s46 = sphi 0, %s44
    %s47 = sphi 0, %s46
    %s61 = sphi 0, %s47
    %s65 = sphi 0, %s65
    %s67 = sphi 0, %s65
    %s68 = sphi 0, %s67
    %s82 = sphi 0, %s68
    %s86 = sphi 0, %s86
    %s88 = sphi 0, %s86
    %s89 = sphi 0, %s88
    %s103 = sphi 0, %s89
    %s109 = sphi 0, %s111
    %s112 = sphi 0, %s109
    %s113 = sphi 0, %s112
    %s129 = sphi 0, %s113
  $region4: #{wav2vec2_classifier_forward.3} parent=0 // loop_header_branch
    %13 = sbr.rel (%p11) target = $region8
  $region5: #{wav2vec2_classifier_forward.3} parent=0 // loop_body
    %s15 = ssub.s32 %s10, 1
    %s16 = ssub.s32 %s10, 2
    %s17 = sadd.s32 %s10, 1
    %s18 = ssub.s32 %s10, %s17
    %p19 = scmp.eq.s32.totalorder %s18, 0
    %s21 = sadd.s32 %s20, 1
    %s22 = scalar_select %p19, %s20, %s21
    %p25 = pneg %p19
    %p26 = scmp.eq.s32.totalorder %s10, 1
    %p27 = por %p25, %p26
    %p28 = scmp.ne.s32.totalorder %s20, %s23
    %p29 = scmp.eq.s32.totalorder %s10, 0
    %p30 = por %p28, %p29
    %p31 = scmp.ne.s32.totalorder %s20, %s23
    %p32 = scmp.eq.s32.totalorder %s15, 1
    %p33 = por %p31, %p32
    %p34 = scmp.ne.s32.totalorder %s23, %s24
    %p35 = scmp.eq.s32.totalorder %s15, 0
    %p36 = por %p34, %p35
    %p37 = scmp.ne.s32.totalorder %s23, %s24
    %p38 = scmp.eq.s32.totalorder %s16, 1
    %p39 = por %p37, %p38
    %p41 = scmp.ne.s32.totalorder %s24, %s40
    %p42 = scmp.eq.s32.totalorder %s16, 0
    %p43 = por %p41, %p42
    %s45 = sadd.s32 %s44, 1
    %p48 = scmp.eq.s32.totalorder %s10, 1
    %p49 = scmp.ne.s32.totalorder %s44, %s46
    %p50 = scmp.eq.s32.totalorder %s10, 0
    %p51 = por %p49, %p50
    %p52 = scmp.ne.s32.totalorder %s44, %s46
    %p53 = scmp.eq.s32.totalorder %s15, 1
    %p54 = por %p52, %p53
    %p55 = scmp.ne.s32.totalorder %s46, %s47
    %p56 = scmp.eq.s32.totalorder %s15, 0
    %p57 = por %p55, %p56
    %p58 = scmp.ne.s32.totalorder %s46, %s47
    %p59 = scmp.eq.s32.totalorder %s16, 1
    %p60 = por %p58, %p59
    %p62 = scmp.ne.s32.totalorder %s47, %s61
    %p63 = scmp.eq.s32.totalorder %s16, 0
    %p64 = por %p62, %p63
    %s66 = sadd.s32 %s65, 1
    %p69 = scmp.eq.s32.totalorder %s10, 1
    %p70 = scmp.ne.s32.totalorder %s65, %s67
    %p71 = scmp.eq.s32.totalorder %s10, 0
    %p72 = por %p70, %p71
    %p73 = scmp.ne.s32.totalorder %s65, %s67
    %p74 = scmp.eq.s32.totalorder %s15, 1
    %p75 = por %p73, %p74
    %p76 = scmp.ne.s32.totalorder %s67, %s68
    %p77 = scmp.eq.s32.totalorder %s15, 0
    %p78 = por %p76, %p77
    %p79 = scmp.ne.s32.totalorder %s67, %s68
    %p80 = scmp.eq.s32.totalorder %s16, 1
    %p81 = por %p79, %p80
    %p83 = scmp.ne.s32.totalorder %s68, %s82
    %p84 = scmp.eq.s32.totalorder %s16, 0
    %p85 = por %p83, %p84
    %s87 = sadd.s32 %s86, 1
    %p90 = scmp.eq.s32.totalorder %s10, 1
    %p91 = scmp.ne.s32.totalorder %s86, %s88
    %p92 = scmp.eq.s32.totalorder %s10, 0
    %p93 = por %p91, %p92
    %p94 = scmp.ne.s32.totalorder %s86, %s88
    %p95 = scmp.eq.s32.totalorder %s15, 1
    %p96 = por %p94, %p95
    %p97 = scmp.ne.s32.totalorder %s88, %s89
    %p98 = scmp.eq.s32.totalorder %s15, 0
    %p99 = por %p97, %p98
    %p100 = scmp.ne.s32.totalorder %s88, %s89
    %p101 = scmp.eq.s32.totalorder %s16, 1
    %p102 = por %p100, %p101
    %p104 = scmp.ne.s32.totalorder %s89, %s103
    %p105 = scmp.eq.s32.totalorder %s16, 0
    %p106 = por %p104, %p105
    %s107 = ssub.s32 %s10, %s17
    %p108 = scmp.eq.s32.totalorder %s107, 0
    %s110 = sadd.s32 %s109, 1
    %s111 = scalar_select %p108, %s109, %s110
    %p114 = pneg %p108
    %p115 = scmp.eq.s32.totalorder %s10, 1
    %p116 = por %p114, %p115
    %p117 = scmp.ne.s32.totalorder %s109, %s112
    %p118 = scmp.eq.s32.totalorder %s10, 0
    %p119 = por %p117, %p118
    %p120 = scmp.ne.s32.totalorder %s109, %s112
    %p121 = scmp.eq.s32.totalorder %s15, 1
    %p122 = por %p120, %p121
    %p123 = scmp.ne.s32.totalorder %s112, %s113
    %p124 = scmp.eq.s32.totalorder %s15, 0
    %p125 = por %p123, %p124
    %p126 = scmp.ne.s32.totalorder %s112, %s113
    %p127 = scmp.eq.s32.totalorder %s16, 1
    %p128 = por %p126, %p127
    %p130 = scmp.ne.s32.totalorder %s113, %s129
    %p131 = scmp.eq.s32.totalorder %s16, 0
    %p132 = por %p130, %p131
    %p133 = scmp.le.s32.totalorder 1, %s10
    %p134 = scmp.lt.s32.totalorder %s10, 3
    %p135 = pnand %p133, %p134
    %p136 = pneg %p135
    // Predicated region
    $region9: #{wav2vec2_classifier_forward.3} parent=5 // pred_check
      _
    $region10: #{wav2vec2_classifier_forward.3} parent=5 // pred_check_branch
      %138 = sbr.rel (%p135) target = $region12
    $region11: #{wav2vec2_classifier_forward.3} parent=5 // pred_region
      %s139 = ssub.s32 %s10, 1
      // Predicated region
      $region13: #{wav2vec2_classifier_forward.3} parent=11 // pred_check
        %p140 = pneg %p57
      $region14: #{wav2vec2_classifier_forward.3} parent=11 // pred_check_branch
        %142 = sbr.rel (%p140) target = $region16
      $region15: #{wav2vec2_classifier_forward.3} parent=11 // pred_region
        _
      $region16: #{wav2vec2_classifier_forward.3} parent=11 // pred_fallthru
        _
      // Predicated region
      $region17: #{wav2vec2_classifier_forward.3} parent=11 // pred_check
        %p143 = pneg %p78
      $region18: #{wav2vec2_classifier_forward.3} parent=11 // pred_check_branch
        %145 = sbr.rel (%p143) target = $region20
      $region19: #{wav2vec2_classifier_forward.3} parent=11 // pred_region
        _
      $region20: #{wav2vec2_classifier_forward.3} parent=11 // pred_fallthru
        _
      // Predicated region
      $region21: #{wav2vec2_classifier_forward.3} parent=11 // pred_check
        %p146 = pneg %p99
      $region22: #{wav2vec2_classifier_forward.3} parent=11 // pred_check_branch
        %148 = sbr.rel (%p146) target = $region24
      $region23: #{wav2vec2_classifier_forward.3} parent=11 // pred_region
        _
      $region24: #{wav2vec2_classifier_forward.3} parent=11 // pred_fallthru
        _
    $region12: #{wav2vec2_classifier_forward.3} parent=5 // pred_fallthru
      _
    %p149 = scmp.lt.s32.totalorder %s10, 2
    // Predicated region
    $region25: #{wav2vec2_classifier_forward.3} parent=5 // pred_check
      %p150 = pneg %p149
    $region26: #{wav2vec2_classifier_forward.3} parent=5 // pred_check_branch
      %152 = sbr.rel (%p150) target = $region28
    $region27: #{wav2vec2_classifier_forward.3} parent=5 // pred_region
      // Predicated region
      $region29: #{wav2vec2_classifier_forward.3} parent=27 // pred_check
        %p153 = pneg %p30
      $region30: #{wav2vec2_classifier_forward.3} parent=27 // pred_check_branch
        %155 = sbr.rel (%p153) target = $region32
      $region31: #{wav2vec2_classifier_forward.3} parent=27 // pred_region
        %p156 = scmp.lt.s32.totalorder %s10, 1
        %s157 = scalar_select %p156, %s10, 1
        %s158 = smul.addr %s157, 3
        %s159 = smul.addr %s158, 8
        %s160 = scalar_lea.vmem %s0, %s159
      $region32: #{wav2vec2_classifier_forward.3} parent=27 // pred_fallthru
        _
    $region28: #{wav2vec2_classifier_forward.3} parent=5 // pred_fallthru
      _
    %p161 = scmp.le.s32.totalorder 1, %s10
    %p162 = scmp.lt.s32.totalorder %s10, 3
    %p163 = pnand %p161, %p162
    %p164 = pneg %p163
    // Predicated region
    $region33: #{wav2vec2_classifier_forward.3} parent=5 // pred_check
      _
    $region34: #{wav2vec2_classifier_forward.3} parent=5 // pred_check_branch
      %166 = sbr.rel (%p163) target = $region36
    $region35: #{wav2vec2_classifier_forward.3} parent=5 // pred_region
      %s167 = ssub.s32 %s10, 1
      %p168 = scmp.lt.s32.totalorder %s15, 1
      %s169 = scalar_select %p168, %s15, 1
      %s170 = smul.addr %s169, 3
      %s171 = smul.addr %s170, 8
      %s172 = scalar_lea.vmem %s0, %s171
      %p173 = pneg %p36
      %p174 = pneg %p33
      %p175 = pneg %p57
      %p176 = pneg %p54
      %p177 = pneg %p78
      %p178 = pneg %p75
      %p179 = pneg %p99
      %p180 = pneg %p96
      %p181 = pneg %p125
      %p182 = pneg %p122
      %p183 = scmp.lt.s32.totalorder %s15, 1
      %s184 = scalar_select %p183, %s15, 1
      %s185 = smul.addr %s184, 3
      %s186 = smul.addr %s185, 8
      %s187 = scalar_lea.vmem %s4, %s186
      %p188 = scmp.lt.s32.totalorder %s15, 1
      %s189 = scalar_select %p188, %s15, 1
      %s190 = smul.addr %s189, 3
      %s191 = smul.addr %s190, 8
      %s192 = scalar_lea.vmem %s0, %s191
      %p193 = scmp.lt.s32.totalorder %s15, 1
      %s194 = scalar_select %p193, %s15, 1
      %s195 = smul.addr %s194, 3
      %s196 = smul.addr %s195, 8
      %s197 = scalar_lea.vmem %s4, %s196
      %v199 = vld [vmem:[%s192] sm:$0xff]
      %v200 = vld [vmem:[%s192 + $0x8] sm:$0xff]
      %v201 = vld [vmem:[%s192 + $0x10] sm:$0x1]
      %v202 = vld [vmem:[%s1] sm:$0xf]
      %v203 = vld [vmem:[%s1 + $0x4] sm:$0xf]
      %v204 = vpack.c.bf16 %v200, %v199
      %v205 = vpack.c.bf16 %v201, %v201
      %v208 = vunpack.c.l.b16 %v202
      %v209 = vunpack.c.l.b16 %v203
      %v210 = vpack.c.b16 %v209, %v208
      %vm212 = vcmask 130048
      %v214 = vsel %vm212, %v204, 0
      %v217 = vsel %vm212, %v205, 0
      %219 = vmatprep.subr.bf16.mxu0 0
      %220 = vmatpush1.bf16.msra.mxu0 %v210
      %221 = vmatprep.subr.bf16.mxu0 0
      %222 = vmatpush1.bf16.msra.mxu0 0
      %223 = vmatprep.subr.bf16.mxu0 0
      %224 = vmatpush1.bf16.msra.mxu0 0
      %225 = vmatprep.subr.bf16.mxu0 0
      %226 = vmatpush1.bf16.msra.mxu0 0
      %227 = vmatprep.subr.bf16.mxu0 0
      %228 = vmatpush1.bf16.msra.mxu0 0
      %229 = vmatprep.subr.bf16.mxu0 0
      %230 = vmatpush1.bf16.msra.mxu0 0
      %231 = vmatprep.subr.bf16.mxu0 0
      %232 = vmatpush1.bf16.msra.mxu0 0
      %233 = vmatprep.subr.bf16.mxu0 0
      %234 = vmatpush1.bf16.msra.mxu0 0
      %235 = vmatprep.subr.bf16.mxu0 0
      %236 = vmatpush1.bf16.msra.mxu0 0
      %237 = vmatprep.subr.bf16.mxu0 0
      %238 = vmatpush1.bf16.msra.mxu0 0
      %239 = vmatprep.subr.bf16.mxu0 0
      %240 = vmatpush1.bf16.msra.mxu0 0
      %241 = vmatprep.subr.bf16.mxu0 0
      %242 = vmatpush1.bf16.msra.mxu0 0
      %243 = vmatprep.subr.bf16.mxu0 0
      %244 = vmatpush1.bf16.msra.mxu0 0
      %245 = vmatprep.subr.bf16.mxu0 0
      %246 = vmatpush1.bf16.msra.mxu0 0
      %247 = vmatprep.subr.bf16.mxu0 0
      %248 = vmatpush1.bf16.msra.mxu0 0
      %249 = vmatprep.subr.bf16.mxu0 0
      %250 = vmatpush1.bf16.msra.mxu0 0
      %251 = vmatprep.mubr.bf16.mxu0 0
      %252 = vmatmul.mubr.bf16.gmra.mrb[0].mxu0 %v214
      %v253 = vpop.f32.mrb[0].mxu0
      %v254 = vadd.f32 0.0, %v253
      %v255 = vpop.f32.mrb[0].mxu0
      %v256 = vpop.f32.mrb[0].mxu0
      %v257 = vadd.f32 0.0, %v256
      %v258 = vpop.f32.mrb[0].mxu0
      %259 = vmatprep.mubr.bf16.mxu0 0
      %260 = vmatmul.mubr.bf16.gmra.mrb[0].mxu0 %v217
      %v261 = vpop.f32.mrb[0].mxu0
      %v262 = vadd.f32 0.0, %v261
      %v263 = vpop.f32.mrb[0].mxu0
      %v264 = vpop.f32.mrb[0].mxu0
      %v265 = vpop.f32.mrb[0].mxu0
      %266 = vdwg.mxu0
      %v267 = vadd.f32 %v254, %v257
      %vm268 = vcmask 1040384
      %v269 = vsel %vm268, %v262, 0.0
      %v270 = vadd.f32 %v267, %v269
      %v271 = vrot.slane %v270, 4
      %v272 = vadd.f32 %v270, %v271
      %v273 = vrot.slane %v272, 2
      %v274 = vadd.f32 %v272, %v273
      %v275 = vrot.slane %v274, 1
      %v276 = vadd.f32 %v274, %v275
      %v277 = vrcp.pop 17.0
      %v278 = vmul.f32 %v276, %v277
      %v279 = vsub.f32 %v254, %v278
      %v280 = vsub.f32 %v257, %v278
      %v281 = vsub.f32 %v262, %v278
      %v282 = vmul.f32 %v279, %v279
      %v283 = vmul.f32 %v280, %v280
      %v284 = vmul.f32 %v281, %v281
      %v285 = vadd.f32 %v282, %v283
      %v286 = vsel %vm268, %v284, 0.0
      %v287 = vadd.f32 %v285, %v286
      %v288 = vrot.slane %v287, 4
      %v289 = vadd.f32 %v287, %v288
      %v290 = vrot.slane %v289, 2
      %v291 = vadd.f32 %v289, %v290
      %v292 = vrot.slane %v291, 1
      %v293 = vadd.f32 %v291, %v292
      %v294 = vmul.f32 %v293, %v277
      %v295 = vadd.f32 %v294, 1e-05
      %v296 = vrsqrt.pop %v295
      %v297 = vmul.f32 %v279, %v296
      %v298 = vmul.f32 %v280, %v296
      %v299 = vmul.f32 %v281, %v296
      %v300 = vld [vmem:[%s2] sm:$0x1]
      %v302 = vlaneseq
      %v303 = vshrl.u32 %v302, 7
      %v304 = vsub.s32 0, %v303
      %v305 = vrot.slane %v300, %v304
      %v307 = vmul.f32 %v297, %v305
      %v308 = vmul.f32 %v298, %v305
      %v309 = vmul.f32 %v299, %v305
      %v310 = vld [vmem:[%s3] sm:$0x1]
      %v312 = vlaneseq
      %v313 = vshrl.u32 %v312, 7
      %v314 = vsub.s32 0, %v313
      %v315 = vrot.slane %v310, %v314
      %v317 = vadd.f32 %v307, %v315
      %v318 = vadd.f32 %v308, %v315
      %v319 = vadd.f32 %v309, %v315
      %v320 = vmul.f32 %v317, %v317
      %v321 = vmul.f32 %v318, %v318
      %v322 = vmul.f32 %v319, %v319
      %v323 = vmul.f32 %v317, %v320
      %v324 = vmul.f32 %v318, %v321
      %v325 = vmul.f32 %v319, %v322
      %v326 = vmul.f32 %v323, 0.044715
      %v327 = vmul.f32 %v324, 0.044715
      %v328 = vmul.f32 %v325, 0.044715
      %v329 = vadd.f32 %v317, %v326
      %v330 = vadd.f32 %v318, %v327
      %v331 = vadd.f32 %v319, %v328
      %v332 = vmul.f32 %v329, 0.7978846
      %v333 = vmul.f32 %v330, 0.7978846
      %v334 = vmul.f32 %v331, 0.7978846
      %v335 = vtanh.pop %v332
      %v336 = vtanh.pop %v333
      %v337 = vtanh.pop %v334
      %v338 = vadd.f32 %v335, 1.0
      %v339 = vadd.f32 %v336, 1.0
      %v340 = vadd.f32 %v337, 1.0
      %v341 = vmul.f32 %v338, 0.5
      %v342 = vmul.f32 %v339, 0.5
      %v343 = vmul.f32 %v340, 0.5
      %v344 = vmul.f32 %v317, %v341
      %v345 = vmul.f32 %v318, %v342
      %v346 = vmul.f32 %v319, %v343
      %347 = vst [vmem:[%s197] sm:$0xff] %v344
      %348 = vst [vmem:[%s197 + $0x8] sm:$0xff] %v345
      %349 = vst [vmem:[%s197 + $0x10] sm:$0x1] %v346
      %p350 = scmp.lt.s32.totalorder %s15, 1
      %s351 = scalar_select %p350, %s15, 1
      %s352 = smul.addr %s351, 3
      %s353 = smul.addr %s352, 8
      %s354 = scalar_lea.vmem %s4, %s353
      // Predicated region
      $region37: #{wav2vec2_classifier_forward.3} parent=35 // pred_check
        %p355 = pneg %p122
      $region38: #{wav2vec2_classifier_forward.3} parent=35 // pred_check_branch
        %357 = sbr.rel (%p355) target = $region40
      $region39: #{wav2vec2_classifier_forward.3} parent=35 // pred_region
        _
      $region40: #{wav2vec2_classifier_forward.3} parent=35 // pred_fallthru
        _
    $region36: #{wav2vec2_classifier_forward.3} parent=5 // pred_fallthru
      _
    %p358 = scmp.le.s32.totalorder 2, %s10
    // Predicated region
    $region41: #{wav2vec2_classifier_forward.3} parent=5 // pred_check
      %p359 = pneg %p358
    $region42: #{wav2vec2_classifier_forward.3} parent=5 // pred_check_branch
      %361 = sbr.rel (%p359) target = $region44
    $region43: #{wav2vec2_classifier_forward.3} parent=5 // pred_region
      %s362 = ssub.s32 %s10, 2
      // Predicated region
      $region45: #{wav2vec2_classifier_forward.3} parent=43 // pred_check
        %p363 = pneg %p128
      $region46: #{wav2vec2_classifier_forward.3} parent=43 // pred_check_branch
        %365 = sbr.rel (%p363) target = $region48
      $region47: #{wav2vec2_classifier_forward.3} parent=43 // pred_region
        %p366 = scmp.lt.s32.totalorder %s16, 1
        %s367 = scalar_select %p366, %s16, 1
        %s368 = smul.addr %s367, 3
        %s369 = smul.addr %s368, 8
        %s370 = scalar_lea.vmem %s4, %s369
      $region48: #{wav2vec2_classifier_forward.3} parent=43 // pred_fallthru
        _
    $region44: #{wav2vec2_classifier_forward.3} parent=5 // pred_fallthru
      _
  $region6: #{wav2vec2_classifier_forward.3} parent=0 // loop_footer
    %s14 = sadd.s32 1, %s10
  $region7: #{wav2vec2_classifier_forward.3} parent=0 // loop_footer_branch
    %9 = sbr.rel target = $region3
  $region8: #{wav2vec2_classifier_forward.3} parent=0 // loop_exit
    _

// kernel: wav2vec2_classifier_forward.4
$region0: #{wav2vec2_classifier_forward.4}
  #allocation0 [shape = 'u32[]', space=smem, size = 0x4, offset = 0x4, fixed_abs, tag = 'smem constant byte address 0x4 - core index']
  #allocation1 [shape = 'u32[144,128]{1,0:T(1,128)}', space=vmem, size = 0x12000, scoped, tag = 'internal scratch']
  %s0 = inlined_call_operand.vmem [shape: f32[2,8,384], index: 0, kind: input, shape index: {}]
  %s1 = inlined_call_operand.vmem [shape: bf16[384,128], index: 1, kind: input, shape index: {}]
  %s2 = inlined_call_operand.vmem [shape: f32[1,128], index: 2, kind: input, shape index: {}]
  %s3 = inlined_call_operand.vmem [shape: f32[1,128], index: 3, kind: input, shape index: {}]
  %s4 = inlined_call_operand.vmem [shape: bf16[128,128], index: 4, kind: input, shape index: {}]
  %s5 = inlined_call_operand.vmem [shape: f32[1,128], index: 5, kind: input, shape index: {}]
  %s6 = inlined_call_operand.vmem [shape: bf16[4,128,128], index: 6, kind: input, shape index: {}]
  %s7 = inlined_call_operand.vmem [shape: f32[1,128], index: 7, kind: input, shape index: {}]
  %s8 = inlined_call_operand.vmem [shape: f32[1,128], index: 8, kind: input, shape index: {}]
  %s9 = inlined_call_operand.vmem [shape: f32[1,128], index: 9, kind: input, shape index: {}]
  %s10 = inlined_call_operand.vmem [shape: f32[2,8,128], index: 10, kind: output, shape index: {}]
  %s11 = sld [smem:[#allocation0]]
  $region73: #{wav2vec2_classifier_forward.4} parent=0
    _
  %s13 = ssub.s32 1, %s11
  %s14 = scalar_select 0, %s13, %s11
  loop: start=0, step=1, limit=4
  $region2: #{wav2vec2_classifier_forward.4} parent=0 // loop_pre_header
    _
  $region3: #{wav2vec2_classifier_forward.4} parent=0 // loop_header
    %s16 = sphi 0, %s20
    %p17 = scmp.ge.s32.totalorder %s16, 4
    %s26 = sphi 0, %s28
    %s29 = sphi 0, %s26
    %s30 = sphi 0, %s29
    %s46 = sphi 0, %s30
    %s50 = sphi 0, %s50
    %s52 = sphi 0, %s50
    %s53 = sphi 0, %s52
    %s67 = sphi 0, %s53
    %s71 = sphi 0, %s71
    %s73 = sphi 0, %s71
    %s74 = sphi 0, %s73
    %s88 = sphi 0, %s74
    %s92 = sphi 0, %s92
    %s94 = sphi 0, %s92
    %s95 = sphi 0, %s94
    %s109 = sphi 0, %s95
    %s113 = sphi 0, %s113
    %s115 = sphi 0, %s113
    %s116 = sphi 0, %s115
    %s130 = sphi 0, %s116
    %s134 = sphi 0, %s134
    %s136 = sphi 0, %s134
    %s137 = sphi 0, %s136
    %s151 = sphi 0, %s137
    %s155 = sphi 0, %s155
    %s157 = sphi 0, %s155
    %s158 = sphi 0, %s157
    %s172 = sphi 0, %s158
    %s176 = sphi 0, %s176
    %s178 = sphi 0, %s176
    %s179 = sphi 0, %s178
    %s193 = sphi 0, %s179
    %s197 = sphi 0, %s197
    %s199 = sphi 0, %s197
    %s200 = sphi 0, %s199
    %s214 = sphi 0, %s200
    %s218 = sphi 0, %s218
    %s220 = sphi 0, %s218
    %s221 = sphi 0, %s220
    %s235 = sphi 0, %s221
    %s241 = sphi 0, %s243
    %s244 = sphi 0, %s241
    %s245 = sphi 0, %s244
    %s261 = sphi 0, %s245
  $region4: #{wav2vec2_classifier_forward.4} parent=0 // loop_header_branch
    %19 = sbr.rel (%p17) target = $region8
  $region5: #{wav2vec2_classifier_forward.4} parent=0 // loop_body
    %s21 = ssub.s32 %s16, 1
    %s22 = ssub.s32 %s16, 2
    %s23 = sadd.s32 %s16, 1
    %s24 = ssub.s32 %s16, %s23
    %p25 = scmp.eq.s32.totalorder %s24, 0
    %s27 = sadd.s32 %s26, 1
    %s28 = scalar_select %p25, %s26, %s27
    %p31 = pneg %p25
    %p32 = scmp.eq.s32.totalorder %s16, 1
    %p33 = por %p31, %p32
    %p34 = scmp.ne.s32.totalorder %s26, %s29
    %p35 = scmp.eq.s32.totalorder %s16, 0
    %p36 = por %p34, %p35
    %p37 = scmp.ne.s32.totalorder %s26, %s29
    %p38 = scmp.eq.s32.totalorder %s21, 1
    %p39 = por %p37, %p38
    %p40 = scmp.ne.s32.totalorder %s29, %s30
    %p41 = scmp.eq.s32.totalorder %s21, 0
    %p42 = por %p40, %p41
    %p43 = scmp.ne.s32.totalorder %s29, %s30
    %p44 = scmp.eq.s32.totalorder %s22, 1
    %p45 = por %p43, %p44
    %p47 = scmp.ne.s32.totalorder %s30, %s46
    %p48 = scmp.eq.s32.totalorder %s22, 0
    %p49 = por %p47, %p48
    %s51 = sadd.s32 %s50, 1
    %p54 = scmp.eq.s32.totalorder %s16, 1
    %p55 = scmp.ne.s32.totalorder %s50, %s52
    %p56 = scmp.eq.s32.totalorder %s16, 0
    %p57 = por %p55, %p56
    %p58 = scmp.ne.s32.totalorder %s50, %s52
    %p59 = scmp.eq.s32.totalorder %s21, 1
    %p60 = por %p58, %p59
    %p61 = scmp.ne.s32.totalorder %s52, %s53
    %p62 = scmp.eq.s32.totalorder %s21, 0
    %p63 = por %p61, %p62
    %p64 = scmp.ne.s32.totalorder %s52, %s53
    %p65 = scmp.eq.s32.totalorder %s22, 1
    %p66 = por %p64, %p65
    %p68 = scmp.ne.s32.totalorder %s53, %s67
    %p69 = scmp.eq.s32.totalorder %s22, 0
    %p70 = por %p68, %p69
    %s72 = sadd.s32 %s71, 1
    %p75 = scmp.eq.s32.totalorder %s16, 1
    %p76 = scmp.ne.s32.totalorder %s71, %s73
    %p77 = scmp.eq.s32.totalorder %s16, 0
    %p78 = por %p76, %p77
    %p79 = scmp.ne.s32.totalorder %s71, %s73
    %p80 = scmp.eq.s32.totalorder %s21, 1
    %p81 = por %p79, %p80
    %p82 = scmp.ne.s32.totalorder %s73, %s74
    %p83 = scmp.eq.s32.totalorder %s21, 0
    %p84 = por %p82, %p83
    %p85 = scmp.ne.s32.totalorder %s73, %s74
    %p86 = scmp.eq.s32.totalorder %s22, 1
    %p87 = por %p85, %p86
    %p89 = scmp.ne.s32.totalorder %s74, %s88
    %p90 = scmp.eq.s32.totalorder %s22, 0
    %p91 = por %p89, %p90
    %s93 = sadd.s32 %s92, 1
    %p96 = scmp.eq.s32.totalorder %s16, 1
    %p97 = scmp.ne.s32.totalorder %s92, %s94
    %p98 = scmp.eq.s32.totalorder %s16, 0
    %p99 = por %p97, %p98
    %p100 = scmp.ne.s32.totalorder %s92, %s94
    %p101 = scmp.eq.s32.totalorder %s21, 1
    %p102 = por %p100, %p101
    %p103 = scmp.ne.s32.totalorder %s94, %s95
    %p104 = scmp.eq.s32.totalorder %s21, 0
    %p105 = por %p103, %p104
    %p106 = scmp.ne.s32.totalorder %s94, %s95
    %p107 = scmp.eq.s32.totalorder %s22, 1
    %p108 = por %p106, %p107
    %p110 = scmp.ne.s32.totalorder %s95, %s109
    %p111 = scmp.eq.s32.totalorder %s22, 0
    %p112 = por %p110, %p111
    %s114 = sadd.s32 %s113, 1
    %p117 = scmp.eq.s32.totalorder %s16, 1
    %p118 = scmp.ne.s32.totalorder %s113, %s115
    %p119 = scmp.eq.s32.totalorder %s16, 0
    %p120 = por %p118, %p119
    %p121 = scmp.ne.s32.totalorder %s113, %s115
    %p122 = scmp.eq.s32.totalorder %s21, 1
    %p123 = por %p121, %p122
    %p124 = scmp.ne.s32.totalorder %s115, %s116
    %p125 = scmp.eq.s32.totalorder %s21, 0
    %p126 = por %p124, %p125
    %p127 = scmp.ne.s32.totalorder %s115, %s116
    %p128 = scmp.eq.s32.totalorder %s22, 1
    %p129 = por %p127, %p128
    %p131 = scmp.ne.s32.totalorder %s116, %s130
    %p132 = scmp.eq.s32.totalorder %s22, 0
    %p133 = por %p131, %p132
    %s135 = sadd.s32 %s134, 1
    %p138 = scmp.eq.s32.totalorder %s16, 1
    %p139 = scmp.ne.s32.totalorder %s134, %s136
    %p140 = scmp.eq.s32.totalorder %s16, 0
    %p141 = por %p139, %p140
    %p142 = scmp.ne.s32.totalorder %s134, %s136
    %p143 = scmp.eq.s32.totalorder %s21, 1
    %p144 = por %p142, %p143
    %p145 = scmp.ne.s32.totalorder %s136, %s137
    %p146 = scmp.eq.s32.totalorder %s21, 0
    %p147 = por %p145, %p146
    %p148 = scmp.ne.s32.totalorder %s136, %s137
    %p149 = scmp.eq.s32.totalorder %s22, 1
    %p150 = por %p148, %p149
    %p152 = scmp.ne.s32.totalorder %s137, %s151
    %p153 = scmp.eq.s32.totalorder %s22, 0
    %p154 = por %p152, %p153
    %s156 = sadd.s32 %s155, 1
    %p159 = scmp.eq.s32.totalorder %s16, 1
    %p160 = scmp.ne.s32.totalorder %s155, %s157
    %p161 = scmp.eq.s32.totalorder %s16, 0
    %p162 = por %p160, %p161
    %p163 = scmp.ne.s32.totalorder %s155, %s157
    %p164 = scmp.eq.s32.totalorder %s21, 1
    %p165 = por %p163, %p164
    %p166 = scmp.ne.s32.totalorder %s157, %s158
    %p167 = scmp.eq.s32.totalorder %s21, 0
    %p168 = por %p166, %p167
    %p169 = scmp.ne.s32.totalorder %s157, %s158
    %p170 = scmp.eq.s32.totalorder %s22, 1
    %p171 = por %p169, %p170
    %p173 = scmp.ne.s32.totalorder %s158, %s172
    %p174 = scmp.eq.s32.totalorder %s22, 0
    %p175 = por %p173, %p174
    %s177 = sadd.s32 %s176, 1
    %p180 = scmp.eq.s32.totalorder %s16, 1
    %p181 = scmp.ne.s32.totalorder %s176, %s178
    %p182 = scmp.eq.s32.totalorder %s16, 0
    %p183 = por %p181, %p182
    %p184 = scmp.ne.s32.totalorder %s176, %s178
    %p185 = scmp.eq.s32.totalorder %s21, 1
    %p186 = por %p184, %p185
    %p187 = scmp.ne.s32.totalorder %s178, %s179
    %p188 = scmp.eq.s32.totalorder %s21, 0
    %p189 = por %p187, %p188
    %p190 = scmp.ne.s32.totalorder %s178, %s179
    %p191 = scmp.eq.s32.totalorder %s22, 1
    %p192 = por %p190, %p191
    %p194 = scmp.ne.s32.totalorder %s179, %s193
    %p195 = scmp.eq.s32.totalorder %s22, 0
    %p196 = por %p194, %p195
    %s198 = sadd.s32 %s197, 1
    %p201 = scmp.eq.s32.totalorder %s16, 1
    %p202 = scmp.ne.s32.totalorder %s197, %s199
    %p203 = scmp.eq.s32.totalorder %s16, 0
    %p204 = por %p202, %p203
    %p205 = scmp.ne.s32.totalorder %s197, %s199
    %p206 = scmp.eq.s32.totalorder %s21, 1
    %p207 = por %p205, %p206
    %p208 = scmp.ne.s32.totalorder %s199, %s200
    %p209 = scmp.eq.s32.totalorder %s21, 0
    %p210 = por %p208, %p209
    %p211 = scmp.ne.s32.totalorder %s199, %s200
    %p212 = scmp.eq.s32.totalorder %s22, 1
    %p213 = por %p211, %p212
    %p215 = scmp.ne.s32.totalorder %s200, %s214
    %p216 = scmp.eq.s32.totalorder %s22, 0
    %p217 = por %p215, %p216
    %s219 = sadd.s32 %s218, 1
    %p222 = scmp.eq.s32.totalorder %s16, 1
    %p223 = scmp.ne.s32.totalorder %s218, %s220
    %p224 = scmp.eq.s32.totalorder %s16, 0
    %p225 = por %p223, %p224
    %p226 = scmp.ne.s32.totalorder %s218, %s220
    %p227 = scmp.eq.s32.totalorder %s21, 1
    %p228 = por %p226, %p227
    %p229 = scmp.ne.s32.totalorder %s220, %s221
    %p230 = scmp.eq.s32.totalorder %s21, 0
    %p231 = por %p229, %p230
    %p232 = scmp.ne.s32.totalorder %s220, %s221
    %p233 = scmp.eq.s32.totalorder %s22, 1
    %p234 = por %p232, %p233
    %p236 = scmp.ne.s32.totalorder %s221, %s235
    %p237 = scmp.eq.s32.totalorder %s22, 0
    %p238 = por %p236, %p237
    %s239 = ssub.s32 %s16, %s23
    %p240 = scmp.eq.s32.totalorder %s239, 0
    %s242 = sadd.s32 %s241, 1
    %s243 = scalar_select %p240, %s241, %s242
    %p246 = pneg %p240
    %p247 = scmp.eq.s32.totalorder %s16, 1
    %p248 = por %p246, %p247
    %p249 = scmp.ne.s32.totalorder %s241, %s244
    %p250 = scmp.eq.s32.totalorder %s16, 0
    %p251 = por %p249, %p250
    %p252 = scmp.ne.s32.totalorder %s241, %s244
    %p253 = scmp.eq.s32.totalorder %s21, 1
    %p254 = por %p252, %p253
    %p255 = scmp.ne.s32.totalorder %s244, %s245
    %p256 = scmp.eq.s32.totalorder %s21, 0
    %p257 = por %p255, %p256
    %p258 = scmp.ne.s32.totalorder %s244, %s245
    %p259 = scmp.eq.s32.totalorder %s22, 1
    %p260 = por %p258, %p259
    %p262 = scmp.ne.s32.totalorder %s245, %s261
    %p263 = scmp.eq.s32.totalorder %s22, 0
    %p264 = por %p262, %p263
    %p265 = scmp.le.s32.totalorder 1, %s16
    %p266 = scmp.lt.s32.totalorder %s16, 3
    %p267 = pnand %p265, %p266
    %p268 = pneg %p267
    // Predicated region
    $region9: #{wav2vec2_classifier_forward.4} parent=5 // pred_check
      _
    $region10: #{wav2vec2_classifier_forward.4} parent=5 // pred_check_branch
      %270 = sbr.rel (%p267) target = $region12
    $region11: #{wav2vec2_classifier_forward.4} parent=5 // pred_region
      %s271 = ssub.s32 %s16, 1
      // Predicated region
      $region13: #{wav2vec2_classifier_forward.4} parent=11 // pred_check
        %p272 = pneg %p63
      $region14: #{wav2vec2_classifier_forward.4} parent=11 // pred_check_branch
        %274 = sbr.rel (%p272) target = $region16
      $region15: #{wav2vec2_classifier_forward.4} parent=11 // pred_region
        _
      $region16: #{wav2vec2_classifier_forward.4} parent=11 // pred_fallthru
        _
      // Predicated region
      $region17: #{wav2vec2_classifier_forward.4} parent=11 // pred_check
        %p275 = pneg %p84
      $region18: #{wav2vec2_classifier_forward.4} parent=11 // pred_check_branch
        %277 = sbr.rel (%p275) target = $region20
      $region19: #{wav2vec2_classifier_forward.4} parent=11 // pred_region
        _
      $region20: #{wav2vec2_classifier_forward.4} parent=11 // pred_fallthru
        _
      // Predicated region
      $region21: #{wav2vec2_classifier_forward.4} parent=11 // pred_check
        %p278 = pneg %p105
      $region22: #{wav2vec2_classifier_forward.4} parent=11 // pred_check_branch
        %280 = sbr.rel (%p278) target = $region24
      $region23: #{wav2vec2_classifier_forward.4} parent=11 // pred_region
        _
      $region24: #{wav2vec2_classifier_forward.4} parent=11 // pred_fallthru
        _
      // Predicated region
      $region25: #{wav2vec2_classifier_forward.4} parent=11 // pred_check
        %p281 = pneg %p126
      $region26: #{wav2vec2_classifier_forward.4} parent=11 // pred_check_branch
        %283 = sbr.rel (%p281) target = $region28
      $region27: #{wav2vec2_classifier_forward.4} parent=11 // pred_region
        _
      $region28: #{wav2vec2_classifier_forward.4} parent=11 // pred_fallthru
        _
      // Predicated region
      $region29: #{wav2vec2_classifier_forward.4} parent=11 // pred_check
        %p284 = pneg %p147
      $region30: #{wav2vec2_classifier_forward.4} parent=11 // pred_check_branch
        %286 = sbr.rel (%p284) target = $region32
      $region31: #{wav2vec2_classifier_forward.4} parent=11 // pred_region
        _
      $region32: #{wav2vec2_classifier_forward.4} parent=11 // pred_fallthru
        _
      // Predicated region
      $region33: #{wav2vec2_classifier_forward.4} parent=11 // pred_check
        %p287 = pneg %p168
      $region34: #{wav2vec2_classifier_forward.4} parent=11 // pred_check_branch
        %289 = sbr.rel (%p287) target = $region36
      $region35: #{wav2vec2_classifier_forward.4} parent=11 // pred_region
        _
      $region36: #{wav2vec2_classifier_forward.4} parent=11 // pred_fallthru
        _
      // Predicated region
      $region37: #{wav2vec2_classifier_forward.4} parent=11 // pred_check
        %p290 = pneg %p189
      $region38: #{wav2vec2_classifier_forward.4} parent=11 // pred_check_branch
        %292 = sbr.rel (%p290) target = $region40
      $region39: #{wav2vec2_classifier_forward.4} parent=11 // pred_region
        _
      $region40: #{wav2vec2_classifier_forward.4} parent=11 // pred_fallthru
        _
      // Predicated region
      $region41: #{wav2vec2_classifier_forward.4} parent=11 // pred_check
        %p293 = pneg %p210
      $region42: #{wav2vec2_classifier_forward.4} parent=11 // pred_check_branch
        %295 = sbr.rel (%p293) target = $region44
      $region43: #{wav2vec2_classifier_forward.4} parent=11 // pred_region
        _
      $region44: #{wav2vec2_classifier_forward.4} parent=11 // pred_fallthru
        _
      // Predicated region
      $region45: #{wav2vec2_classifier_forward.4} parent=11 // pred_check
        %p296 = pneg %p231
      $region46: #{wav2vec2_classifier_forward.4} parent=11 // pred_check_branch
        %298 = sbr.rel (%p296) target = $region48
      $region47: #{wav2vec2_classifier_forward.4} parent=11 // pred_region
        _
      $region48: #{wav2vec2_classifier_forward.4} parent=11 // pred_fallthru
        _
    $region12: #{wav2vec2_classifier_forward.4} parent=5 // pred_fallthru
      _
    %p299 = scmp.lt.s32.totalorder %s16, 2
    // Predicated region
    $region49: #{wav2vec2_classifier_forward.4} parent=5 // pred_check
      %p300 = pneg %p299
    $region50: #{wav2vec2_classifier_forward.4} parent=5 // pred_check_branch
      %302 = sbr.rel (%p300) target = $region52
    $region51: #{wav2vec2_classifier_forward.4} parent=5 // pred_region
      // Predicated region
      $region53: #{wav2vec2_classifier_forward.4} parent=51 // pred_check
        %p303 = pneg %p36
      $region54: #{wav2vec2_classifier_forward.4} parent=51 // pred_check_branch
        %305 = sbr.rel (%p303) target = $region56
      $region55: #{wav2vec2_classifier_forward.4} parent=51 // pred_region
        %p306 = scmp.lt.s32.totalorder %s16, 1
        %s307 = scalar_select %p306, %s16, 1
        %s308 = smul.addr %s307, 3
        %s309 = smul.addr %s308, 8
        %s310 = scalar_lea.vmem %s0, %s309
      $region56: #{wav2vec2_classifier_forward.4} parent=51 // pred_fallthru
        _
    $region52: #{wav2vec2_classifier_forward.4} parent=5 // pred_fallthru
      _
    %p311 = scmp.le.s32.totalorder 1, %s16
    %p312 = scmp.lt.s32.totalorder %s16, 3
    %p313 = pnand %p311, %p312
    %p314 = pneg %p313
    // Predicated region
    $region57: #{wav2vec2_classifier_forward.4} parent=5 // pred_check
      _
    $region58: #{wav2vec2_classifier_forward.4} parent=5 // pred_check_branch
      %316 = sbr.rel (%p313) target = $region60
    $region59: #{wav2vec2_classifier_forward.4} parent=5 // pred_region
      %s317 = ssub.s32 %s16, 1
      %p318 = scmp.lt.s32.totalorder %s21, 1
      %s319 = scalar_select %p318, %s21, 1
      %s320 = smul.addr %s319, 3
      %s321 = smul.addr %s320, 8
      %s322 = scalar_lea.vmem %s0, %s321
      %p323 = pneg %p42
      %p324 = pneg %p39
      %p325 = pneg %p63
      %p326 = pneg %p60
      %p327 = pneg %p84
      %p328 = pneg %p81
      %p329 = pneg %p105
      %p330 = pneg %p102
      %p331 = pneg %p126
      %p332 = pneg %p123
      %p333 = pneg %p147
      %p334 = pneg %p144
      %p335 = pneg %p168
      %p336 = pneg %p165
      %p337 = pneg %p189
      %p338 = pneg %p186
      %p339 = pneg %p210
      %p340 = pneg %p207
      %p341 = pneg %p231
      %p342 = pneg %p228
      %p343 = pneg %p257
      %p344 = pneg %p254
      %p345 = scmp.lt.s32.totalorder %s21, 1
      %s346 = scalar_select %p345, %s21, 1
      %s347 = smul.addr %s346, 8
      %s348 = scalar_lea.vmem %s10, %s347
      %p349 = scmp.lt.s32.totalorder %s21, 1
      %s350 = scalar_select %p349, %s21, 1
      %s351 = smul.addr %s350, 3
      %s352 = smul.addr %s351, 8
      %s353 = scalar_lea.vmem %s0, %s352
      %p354 = scmp.lt.s32.totalorder %s21, 1
      %s355 = scalar_select %p354, %s21, 1
      %s356 = smul.addr %s355, 8
      %s357 = scalar_lea.vmem %s10, %s356
      %v359 = vld [vmem:[%s353] sm:$0xff]
      %v360 = vld [vmem:[%s353 + $0x8] sm:$0xff]
      %v361 = vld [vmem:[%s353 + $0x10] sm:$0xff]
      %v362 = vld [vmem:[%s1] sm:$0xf]
      %v363 = vld [vmem:[%s1 + $0x4] sm:$0xf]
      %v364 = vld [vmem:[%s1 + $0x8] sm:$0xf]
      %v365 = vld [vmem:[%s1 + $0xc] sm:$0xf]
      %v366 = vld [vmem:[%s1 + $0x10] sm:$0xf]
      %v367 = vld [vmem:[%s1 + $0x14] sm:$0xf]
      %v368 = vld [vmem:[%s1 + $0x18] sm:$0xf]
      %v369 = vld [vmem:[%s1 + $0x1c] sm:$0xf]
      %v370 = vld [vmem:[%s1 + $0x20] sm:$0xf]
      %v371 = vld [vmem:[%s1 + $0x24] sm:$0xf]
      %v372 = vld [vmem:[%s1 + $0x28] sm:$0xf]
      %v373 = vld [vmem:[%s1 + $0x2c] sm:$0xf]
      %v374 = vld [vmem:[%s1 + $0x30] sm:$0xf]
      %v375 = vld [vmem:[%s1 + $0x34] sm:$0xf]
      %v376 = vld [vmem:[%s1 + $0x38] sm:$0xf]
      %v377 = vld [vmem:[%s1 + $0x3c] sm:$0xf]
      %v378 = vld [vmem:[%s1 + $0x40] sm:$0xf]
      %v379 = vld [vmem:[%s1 + $0x44] sm:$0xf]
      %v380 = vld [vmem:[%s1 + $0x48] sm:$0xf]
      %v381 = vld [vmem:[%s1 + $0x4c] sm:$0xf]
      %v382 = vld [vmem:[%s1 + $0x50] sm:$0xf]
      %v383 = vld [vmem:[%s1 + $0x54] sm:$0xf]
      %v384 = vld [vmem:[%s1 + $0x58] sm:$0xf]
      %v385 = vld [vmem:[%s1 + $0x5c] sm:$0xf]
      %v386 = vld [vmem:[%s1 + $0x60] sm:$0xf]
      %v387 = vld [vmem:[%s1 + $0x64] sm:$0xf]
      %v388 = vld [vmem:[%s1 + $0x68] sm:$0xf]
      %v389 = vld [vmem:[%s1 + $0x6c] sm:$0xf]
      %v390 = vld [vmem:[%s1 + $0x70] sm:$0xf]
      %v391 = vld [vmem:[%s1 + $0x74] sm:$0xf]
      %v392 = vld [vmem:[%s1 + $0x78] sm:$0xf]
      %v393 = vld [vmem:[%s1 + $0x7c] sm:$0xf]
      %v394 = vld [vmem:[%s1 + $0x80] sm:$0xf]
      %v395 = vld [vmem:[%s1 + $0x84] sm:$0xf]
      %v396 = vld [vmem:[%s1 + $0x88] sm:$0xf]
      %v397 = vld [vmem:[%s1 + $0x8c] sm:$0xf]
      %v398 = vld [vmem:[%s1 + $0x90] sm:$0xf]
      %v399 = vld [vmem:[%s1 + $0x94] sm:$0xf]
      %v400 = vld [vmem:[%s1 + $0x98] sm:$0xf]
      %v401 = vld [vmem:[%s1 + $0x9c] sm:$0xf]
      %v402 = vld [vmem:[%s1 + $0xa0] sm:$0xf]
      %v403 = vld [vmem:[%s1 + $0xa4] sm:$0xf]
      %v404 = vld [vmem:[%s1 + $0xa8] sm:$0xf]
      %v405 = vld [vmem:[%s1 + $0xac] sm:$0xf]
      %v406 = vld [vmem:[%s1 + $0xb0] sm:$0xf]
      %v407 = vld [vmem:[%s1 + $0xb4] sm:$0xf]
      %v408 = vld [vmem:[%s1 + $0xb8] sm:$0xf]
      %v409 = vld [vmem:[%s1 + $0xbc] sm:$0xf]
      %v410 = vpack.c.bf16 %v359, %v359
      %v411 = vpack.c.bf16 %v360, %v360
      %v412 = vpack.c.bf16 %v361, %v361
      %v461 = vunpack.c.l.b16 %v362
      %v462 = vunpack.c.l.b16 %v363
      %v463 = vunpack.c.l.b16 %v364
      %v464 = vunpack.c.l.b16 %v365
      %v465 = vunpack.c.l.b16 %v366
      %v466 = vunpack.c.l.b16 %v367
      %v467 = vunpack.c.l.b16 %v368
      %v468 = vunpack.c.l.b16 %v369
      %v469 = vunpack.c.l.b16 %v370
      %v470 = vunpack.c.l.b16 %v371
      %v471 = vunpack.c.l.b16 %v372
      %v472 = vunpack.c.l.b16 %v373
      %v473 = vunpack.c.l.b16 %v374
      %v474 = vunpack.c.l.b16 %v375
      %v475 = vunpack.c.l.b16 %v376
      %v476 = vunpack.c.l.b16 %v377
      %v477 = vunpack.c.l.b16 %v378
      %v478 = vunpack.c.l.b16 %v379
      %v479 = vunpack.c.l.b16 %v380
      %v480 = vunpack.c.l.b16 %v381
      %v481 = vunpack.c.l.b16 %v382
      %v482 = vunpack.c.l.b16 %v383
      %v483 = vunpack.c.l.b16 %v384
      %v484 = vunpack.c.l.b16 %v385
      %v485 = vunpack.c.l.b16 %v386
      %v486 = vunpack.c.l.b16 %v387
      %v487 = vunpack.c.l.b16 %v388
      %v488 = vunpack.c.l.b16 %v389
      %v489 = vunpack.c.l.b16 %v390
      %v490 = vunpack.c.l.b16 %v391
      %v491 = vunpack.c.l.b16 %v392
      %v492 = vunpack.c.l.b16 %v393
      %v493 = vunpack.c.l.b16 %v394
      %v494 = vunpack.c.l.b16 %v395
      %v495 = vunpack.c.l.b16 %v396
      %v496 = vunpack.c.l.b16 %v397
      %v497 = vunpack.c.l.b16 %v398
      %v498 = vunpack.c.l.b16 %v399
      %v499 = vunpack.c.l.b16 %v400
      %v500 = vunpack.c.l.b16 %v401
      %v501 = vunpack.c.l.b16 %v402
      %v502 = vunpack.c.l.b16 %v403
      %v503 = vunpack.c.l.b16 %v404
      %v504 = vunpack.c.l.b16 %v405
      %v505 = vunpack.c.l.b16 %v406
      %v506 = vunpack.c.l.b16 %v407
      %v507 = vunpack.c.l.b16 %v408
      %v508 = vunpack.c.l.b16 %v409
      %v509 = vpack.c.b16 %v462, %v461
      %v510 = vpack.c.b16 %v464, %v463
      %v511 = vpack.c.b16 %v466, %v465
      %v512 = vpack.c.b16 %v468, %v467
      %v513 = vpack.c.b16 %v470, %v469
      %v514 = vpack.c.b16 %v472, %v471
      %v515 = vpack.c.b16 %v474, %v473
      %v516 = vpack.c.b16 %v476, %v475
      %v517 = vpack.c.b16 %v478, %v477
      %v518 = vpack.c.b16 %v480, %v479
      %v519 = vpack.c.b16 %v482, %v481
      %v520 = vpack.c.b16 %v484, %v483
      %v521 = vpack.c.b16 %v486, %v485
      %v522 = vpack.c.b16 %v488, %v487
      %v523 = vpack.c.b16 %v490, %v489
      %v524 = vpack.c.b16 %v492, %v491
      %v525 = vpack.c.b16 %v494, %v493
      %v526 = vpack.c.b16 %v496, %v495
      %v527 = vpack.c.b16 %v498, %v497
      %v528 = vpack.c.b16 %v500, %v499
      %v529 = vpack.c.b16 %v502, %v501
      %v530 = vpack.c.b16 %v504, %v503
      %v531 = vpack.c.b16 %v506, %v505
      %v532 = vpack.c.b16 %v508, %v507
      %557 = vmatprep.subr.bf16.mxu0 0
      %558 = vmatpush1.bf16.msra.mxu0 %v509
      %559 = vmatprep.subr.bf16.mxu0 0
      %560 = vmatpush1.bf16.msra.mxu0 %v510
      %561 = vmatprep.subr.bf16.mxu0 0
      %562 = vmatpush1.bf16.msra.mxu0 %v511
      %563 = vmatprep.subr.bf16.mxu0 0
      %564 = vmatpush1.bf16.msra.mxu0 %v512
      %565 = vmatprep.subr.bf16.mxu0 0
      %566 = vmatpush1.bf16.msra.mxu0 %v513
      %567 = vmatprep.subr.bf16.mxu0 0
      %568 = vmatpush1.bf16.msra.mxu0 %v514
      %569 = vmatprep.subr.bf16.mxu0 0
      %570 = vmatpush1.bf16.msra.mxu0 %v515
      %571 = vmatprep.subr.bf16.mxu0 0
      %572 = vmatpush1.bf16.msra.mxu0 %v516
      %573 = vmatprep.subr.bf16.mxu0 0
      %574 = vmatpush1.bf16.msra.mxu0 %v517
      %575 = vmatprep.subr.bf16.mxu0 0
      %576 = vmatpush1.bf16.msra.mxu0 %v518
      %577 = vmatprep.subr.bf16.mxu0 0
      %578 = vmatpush1.bf16.msra.mxu0 %v519
      %579 = vmatprep.subr.bf16.mxu0 0
      %580 = vmatpush1.bf16.msra.mxu0 %v520
      %581 = vmatprep.subr.bf16.mxu0 0
      %582 = vmatpush1.bf16.msra.mxu0 %v521
      %583 = vmatprep.subr.bf16.mxu0 0
      %584 = vmatpush1.bf16.msra.mxu0 %v522
      %585 = vmatprep.subr.bf16.mxu0 0
      %586 = vmatpush1.bf16.msra.mxu0 %v523
      %587 = vmatprep.subr.bf16.mxu0 0
      %588 = vmatpush1.bf16.msra.mxu0 %v524
      %589 = vmatprep.mubr.bf16.mxu0 %v411
      %590 = vmatmul.mubr.bf16.gmra.mrb[0].mxu0 %v410
      %v591 = vpop.f32.mrb[0].mxu0
      %v592 = vadd.f32 0.0, %v591
      %v593 = vpop.f32.mrb[0].mxu0
      %v594 = vpop.f32.mrb[0].mxu0
      %v595 = vpop.f32.mrb[0].mxu0
      %596 = vdwg.mxu0
      %597 = vmatprep.subr.bf16.mxu0 0
      %598 = vmatpush1.bf16.msra.mxu0 %v525
      %599 = vmatprep.subr.bf16.mxu0 0
      %600 = vmatpush1.bf16.msra.mxu0 %v526
      %601 = vmatprep.subr.bf16.mxu0 0
      %602 = vmatpush1.bf16.msra.mxu0 %v527
      %603 = vmatprep.subr.bf16.mxu0 0
      %604 = vmatpush1.bf16.msra.mxu0 %v528
      %605 = vmatprep.subr.bf16.mxu0 0
      %606 = vmatpush1.bf16.msra.mxu0 %v529
      %607 = vmatprep.subr.bf16.mxu0 0
      %608 = vmatpush1.bf16.msra.mxu0 %v530
      %609 = vmatprep.subr.bf16.mxu0 0
      %610 = vmatpush1.bf16.msra.mxu0 %v531
      %611 = vmatprep.subr.bf16.mxu0 0
      %612 = vmatpush1.bf16.msra.mxu0 %v532
      %613 = vmatprep.subr.bf16.mxu0 0
      %614 = vmatpush1.bf16.msra.mxu0 0
      %615 = vmatprep.subr.bf16.mxu0 0
      %616 = vmatpush1.bf16.msra.mxu0 0
      %617 = vmatprep.subr.bf16.mxu0 0
      %618 = vmatpush1.bf16.msra.mxu0 0
      %619 = vmatprep.subr.bf16.mxu0 0
      %620 = vmatpush1.bf16.msra.mxu0 0
      %621 = vmatprep.subr.bf16.mxu0 0
      %622 = vmatpush1.bf16.msra.mxu0 0
      %623 = vmatprep.subr.bf16.mxu0 0
      %624 = vmatpush1.bf16.msra.mxu0 0
      %625 = vmatprep.subr.bf16.mxu0 0
      %626 = vmatpush1.bf16.msra.mxu0 0
      %627 = vmatprep.subr.bf16.mxu0 0
      %628 = vmatpush1.bf16.msra.mxu0 0
      %629 = vmatprep.mubr.bf16.mxu0 0
      %630 = vmatmul.mubr.bf16.gmra.mrb[0].mxu0 %v412
      %v631 = vpop.f32.mrb[0].mxu0
      %v632 = vadd.f32 %v592, %v631
      %v633 = vpop.f32.mrb[0].mxu0
      %v634 = vpop.f32.mrb[0].mxu0
      %v635 = vpop.f32.mrb[0].mxu0
      %636 = vdwg.mxu0
      %v637 = vmul.f32 %v632, %v632
      %v638 = vmul.f32 %v632, %v637
      %v639 = vmul.f32 %v638, 0.044715
      %v640 = vadd.f32 %v632, %v639
      %v641 = vmul.f32 %v640, 0.7978846
      %v642 = vtanh.pop %v641
      %v643 = vadd.f32 %v642, 1.0
      %v644 = vmul.f32 %v643, 0.5
      %v645 = vmul.f32 %v632, %v644
      %v646 = vld [vmem:[%s2] sm:$0x1]
      %v647 = vld [vmem:[%s3] sm:$0x1]
      %648 = vadd.xlane.f32.xlu0 %v645
      %v649 = vpop.xlane.xlu0 %648
      %v650 = vrcp.pop 128.0
      %v651 = vmul.f32 %v649, %v650
      %v652 = vsub.f32 %v645, %v651
      %v653 = vmul.f32 %v652, %v652
      %654 = vadd.xlane.f32.xlu0 %v653
      %v655 = vpop.xlane.xlu0 %654
      %v656 = vmul.f32 %v655, %v650
      %v657 = vadd.f32 %v656, 1e-05
      %v658 = vrsqrt.pop %v657
      %v659 = vmul.f32 %v652, %v658
      %v661 = vlaneseq
      %v662 = vshrl.u32 %v661, 7
      %v663 = vsub.s32 0, %v662
      %v664 = vrot.slane %v646, %v663
      %v666 = vmul.f32 %v659, %v664
      %v668 = vlaneseq
      %v669 = vshrl.u32 %v668, 7
      %v670 = vsub.s32 0, %v669
      %v671 = vrot.slane %v647, %v670
      %v673 = vadd.f32 %v666, %v671
      %v674 = vld [vmem:[%s4] sm:$0xf]
      %v675 = vld [vmem:[%s4 + $0x4] sm:$0xf]
      %v676 = vld [vmem:[%s4 + $0x8] sm:$0xf]
      %v677 = vld [vmem:[%s4 + $0xc] sm:$0xf]
      %v678 = vld [vmem:[%s4 + $0x10] sm:$0xf]
      %v679 = vld [vmem:[%s4 + $0x14] sm:$0xf]
      %v680 = vld [vmem:[%s4 + $0x18] sm:$0xf]
      %v681 = vld [vmem:[%s4 + $0x1c] sm:$0xf]
      %v682 = vld [vmem:[%s4 + $0x20] sm:$0xf]
      %v683 = vld [vmem:[%s4 + $0x24] sm:$0xf]
      %v684 = vld [vmem:[%s4 + $0x28] sm:$0xf]
      %v685 = vld [vmem:[%s4 + $0x2c] sm:$0xf]
      %v686 = vld [vmem:[%s4 + $0x30] sm:$0xf]
      %v687 = vld [vmem:[%s4 + $0x34] sm:$0xf]
      %v688 = vld [vmem:[%s4 + $0x38] sm:$0xf]
      %v689 = vld [vmem:[%s4 + $0x3c] sm:$0xf]
      %v690 = vpack.c.bf16 %v673, %v673
      %v691 = vld [vmem:[%s5] sm:$0x1]
      %v693 = vlaneseq
      %v694 = vshrl.u32 %v693, 7
      %v695 = vsub.s32 0, %v694
      %v696 = vrot.slane %v691, %v695
      %v714 = vunpack.c.l.b16 %v674
      %v715 = vunpack.c.l.b16 %v675
      %v716 = vunpack.c.l.b16 %v676
      %v717 = vunpack.c.l.b16 %v677
      %v718 = vunpack.c.l.b16 %v678
      %v719 = vunpack.c.l.b16 %v679
      %v720 = vunpack.c.l.b16 %v680
      %v721 = vunpack.c.l.b16 %v681
      %v722 = vunpack.c.l.b16 %v682
      %v723 = vunpack.c.l.b16 %v683
      %v724 = vunpack.c.l.b16 %v684
      %v725 = vunpack.c.l.b16 %v685
      %v726 = vunpack.c.l.b16 %v686
      %v727 = vunpack.c.l.b16 %v687
      %v728 = vunpack.c.l.b16 %v688
      %v729 = vunpack.c.l.b16 %v689
      %v730 = vpack.c.b16 %v715, %v714
      %v731 = vpack.c.b16 %v717, %v716
      %v732 = vpack.c.b16 %v719, %v718
      %v733 = vpack.c.b16 %v721, %v720
      %v734 = vpack.c.b16 %v723, %v722
      %v735 = vpack.c.b16 %v725, %v724
      %v736 = vpack.c.b16 %v727, %v726
      %v737 = vpack.c.b16 %v729, %v728
      %746 = vmatprep.subr.bf16.mxu0 0
      %747 = vmatpush1.bf16.msra.mxu0 %v730
      %748 = vmatprep.subr.bf16.mxu0 0
      %749 = vmatpush1.bf16.msra.mxu0 %v731
      %750 = vmatprep.subr.bf16.mxu0 0
      %751 = vmatpush1.bf16.msra.mxu0 %v732
      %752 = vmatprep.subr.bf16.mxu0 0
      %753 = vmatpush1.bf16.msra.mxu0 %v733
      %754 = vmatprep.subr.bf16.mxu0 0
      %755 = vmatpush1.bf16.msra.mxu0 %v734
      %756 = vmatprep.subr.bf16.mxu0 0
      %757 = vmatpush1.bf16.msra.mxu0 %v735
      %758 = vmatprep.subr.bf16.mxu0 0
      %759 = vmatpush1.bf16.msra.mxu0 %v736
      %760 = vmatprep.subr.bf16.mxu0 0
      %761 = vmatpush1.bf16.msra.mxu0 %v737
      %762 = vmatprep.subr.bf16.mxu0 0
      %763 = vmatpush1.bf16.msra.mxu0 0
      %764 = vmatprep.subr.bf16.mxu0 0
      %765 = vmatpush1.bf16.msra.mxu0 0
      %766 = vmatprep.subr.bf16.mxu0 0
      %767 = vmatpush1.bf16.msra.mxu0 0
      %768 = vmatprep.subr.bf16.mxu0 0
      %769 = vmatpush1.bf16.msra.mxu0 0
      %770 = vmatprep.subr.bf16.mxu0 0
      %771 = vmatpush1.bf16.msra.mxu0 0
      %772 = vmatprep.subr.bf16.mxu0 0
      %773 = vmatpush1.bf16.msra.mxu0 0
      %774 = vmatprep.subr.bf16.mxu0 0
      %775 = vmatpush1.bf16.msra.mxu0 0
      %776 = vmatprep.subr.bf16.mxu0 0
      %777 = vmatpush1.bf16.msra.mxu0 0
      %778 = vmatprep.mubr.bf16.mxu0 0
      %779 = vmatmul.mubr.bf16.gmra.mrb[0].mxu0 %v690
      %v780 = vpop.f32.mrb[0].mxu0
      %v781 = vadd.f32 %v696, %v780
      %v782 = vpop.f32.mrb[0].mxu0
      %v783 = vpop.f32.mrb[0].mxu0
      %v784 = vpop.f32.mrb[0].mxu0
      %785 = vdwg.mxu0
      %v787 = vrot.slane %v781, 6
      %vm789 = vcmask 1041408
      %v790 = vsel %vm789, 0.0, %v787
      %v791 = vsel %vm789, %v787, 0.0
      %v792 = vld [vmem:[%s6] sm:$0xf]
      %v793 = vld [vmem:[%s6 + $0x4] sm:$0xf]
      %v794 = vld [vmem:[%s6 + $0x8] sm:$0xf]
      %v795 = vld [vmem:[%s6 + $0xc] sm:$0xf]
      %v796 = vld [vmem:[%s6 + $0x10] sm:$0xf]
      %v797 = vld [vmem:[%s6 + $0x14] sm:$0xf]
      %v798 = vld [vmem:[%s6 + $0x18] sm:$0xf]
      %v799 = vld [vmem:[%s6 + $0x1c] sm:$0xf]
      %v800 = vld [vmem:[%s6 + $0x20] sm:$0xf]
      %v801 = vld [vmem:[%s6 + $0x24] sm:$0xf]
      %v802 = vld [vmem:[%s6 + $0x28] sm:$0xf]
      %v803 = vld [vmem:[%s6 + $0x2c] sm:$0xf]
      %v804 = vld [vmem:[%s6 + $0x30] sm:$0xf]
      %v805 = vld [vmem:[%s6 + $0x34] sm:$0xf]
      %v806 = vld [vmem:[%s6 + $0x38] sm:$0xf]
      %v807 = vld [vmem:[%s6 + $0x3c] sm:$0xf]
      %v808 = vpack.c.bf16 %v790, %v790
      %s809 = scalar_lea.vmem %s6, 64
      %v810 = vld [vmem:[%s809] sm:$0xf]
      %v811 = vld [vmem:[%s809 + $0x4] sm:$0xf]
      %v812 = vld [vmem:[%s809 + $0x8] sm:$0xf]
      %v813 = vld [vmem:[%s809 + $0xc] sm:$0xf]
      %v814 = vld [vmem:[%s809 + $0x10] sm:$0xf]
      %v815 = vld [vmem:[%s809 + $0x14] sm:$0xf]
      %v816 = vld [vmem:[%s809 + $0x18] sm:$0xf]
      %v817 = vld [vmem:[%s809 + $0x1c] sm:$0xf]
      %v818 = vld [vmem:[%s809 + $0x20] sm:$0xf]
      %v819 = vld [vmem:[%s809 + $0x24] sm:$0xf]
      %v820 = vld [vmem:[%s809 + $0x28] sm:$0xf]
      %v821 = vld [vmem:[%s809 + $0x2c] sm:$0xf]
      %v822 = vld [vmem:[%s809 + $0x30] sm:$0xf]
      %v823 = vld [vmem:[%s809 + $0x34] sm:$0xf]
      %v824 = vld [vmem:[%s809 + $0x38] sm:$0xf]
      %v825 = vld [vmem:[%s809 + $0x3c] sm:$0xf]
      %v826 = vpack.c.bf16 %v791, %v790
      %v828 = vshrl.u32 %v826, 16
      %v830 = vshll.u32 %v826, 16
      %v832 = vrot.slane %v830, 1
      %v833 = vor.u32 %v828, %v832
      %v851 = vunpack.c.l.b16 %v810
      %v852 = vunpack.c.l.b16 %v811
      %v853 = vunpack.c.l.b16 %v812
      %v854 = vunpack.c.l.b16 %v813
      %v855 = vunpack.c.l.b16 %v814
      %v856 = vunpack.c.l.b16 %v815
      %v857 = vunpack.c.l.b16 %v816
      %v858 = vunpack.c.l.b16 %v817
      %v859 = vunpack.c.l.b16 %v818
      %v860 = vunpack.c.l.b16 %v819
      %v861 = vunpack.c.l.b16 %v820
      %v862 = vunpack.c.l.b16 %v821
      %v863 = vunpack.c.l.b16 %v822
      %v864 = vunpack.c.l.b16 %v823
      %v865 = vunpack.c.l.b16 %v824
      %v866 = vunpack.c.l.b16 %v825
      %v867 = vpack.c.b16 %v852, %v851
      %v868 = vpack.c.b16 %v854, %v853
      %v869 = vpack.c.b16 %v856, %v855
      %v870 = vpack.c.b16 %v858, %v857
      %v871 = vpack.c.b16 %v860, %v859
      %v872 = vpack.c.b16 %v862, %v861
      %v873 = vpack.c.b16 %v864, %v863
      %v874 = vpack.c.b16 %v866, %v865
      %883 = vmatprep.subr.bf16.mxu0 0
      %884 = vmatpush1.bf16.msra.mxu0 %v867
      %885 = vmatprep.subr.bf16.mxu0 0
      %886 = vmatpush1.bf16.msra.mxu0 %v868
      %887 = vmatprep.subr.bf16.mxu0 0
      %888 = vmatpush1.bf16.msra.mxu0 %v869
      %889 = vmatprep.subr.bf16.mxu0 0
      %890 = vmatpush1.bf16.msra.mxu0 %v870
      %891 = vmatprep.subr.bf16.mxu0 0
      %892 = vmatpush1.bf16.msra.mxu0 %v871
      %893 = vmatprep.subr.bf16.mxu0 0
      %894 = vmatpush1.bf16.msra.mxu0 %v872
      %895 = vmatprep.subr.bf16.mxu0 0
      %896 = vmatpush1.bf16.msra.mxu0 %v873
      %897 = vmatprep.subr.bf16.mxu0 0
      %898 = vmatpush1.bf16.msra.mxu0 %v874
      %899 = vmatprep.subr.bf16.mxu0 0
      %900 = vmatpush1.bf16.msra.mxu0 0
      %901 = vmatprep.subr.bf16.mxu0 0
      %902 = vmatpush1.bf16.msra.mxu0 0
      %903 = vmatprep.subr.bf16.mxu0 0
      %904 = vmatpush1.bf16.msra.mxu0 0
      %905 = vmatprep.subr.bf16.mxu0 0
      %906 = vmatpush1.bf16.msra.mxu0 0
      %907 = vmatprep.subr.bf16.mxu0 0
      %908 = vmatpush1.bf16.msra.mxu0 0
      %909 = vmatprep.subr.bf16.mxu0 0
      %910 = vmatpush1.bf16.msra.mxu0 0
      %911 = vmatprep.subr.bf16.mxu0 0
      %912 = vmatpush1.bf16.msra.mxu0 0
      %913 = vmatprep.subr.bf16.mxu0 0
      %914 = vmatpush1.bf16.msra.mxu0 0
      %915 = vmatprep.mubr.bf16.mxu0 0
      %916 = vmatmul.mubr.bf16.gmra.mrb[0].mxu0 %v833
      %v917 = vpop.f32.mrb[0].mxu0
      %v918 = vadd.f32 0.0, %v917
      %v919 = vpop.f32.mrb[0].mxu0
      %v920 = vpop.f32.mrb[0].mxu0
      %v921 = vpop.f32.mrb[0].mxu0
      %922 = vdwg.mxu0
      %v939 = vunpack.c.l.b16 %v792
      %v940 = vunpack.c.l.b16 %v793
      %v941 = vunpack.c.l.b16 %v794
      %v942 = vunpack.c.l.b16 %v795
      %v943 = vunpack.c.l.b16 %v796
      %v944 = vunpack.c.l.b16 %v797
      %v945 = vunpack.c.l.b16 %v798
      %v946 = vunpack.c.l.b16 %v799
      %v947 = vunpack.c.l.b16 %v800
      %v948 = vunpack.c.l.b16 %v801
      %v949 = vunpack.c.l.b16 %v802
      %v950 = vunpack.c.l.b16 %v803
      %v951 = vunpack.c.l.b16 %v804
      %v952 = vunpack.c.l.b16 %v805
      %v953 = vunpack.c.l.b16 %v806
      %v954 = vunpack.c.l.b16 %v807
      %v955 = vpack.c.b16 %v940, %v939
      %v956 = vpack.c.b16 %v942, %v941
      %v957 = vpack.c.b16 %v944, %v943
      %v958 = vpack.c.b16 %v946, %v945
      %v959 = vpack.c.b16 %v948, %v947
      %v960 = vpack.c.b16 %v950, %v949
      %v961 = vpack.c.b16 %v952, %v951
      %v962 = vpack.c.b16 %v954, %v953
      %971 = vmatprep.subr.bf16.mxu0 0
      %972 = vmatpush1.bf16.msra.mxu0 %v955
      %973 = vmatprep.subr.bf16.mxu0 0
      %974 = vmatpush1.bf16.msra.mxu0 %v956
      %975 = vmatprep.subr.bf16.mxu0 0
      %976 = vmatpush1.bf16.msra.mxu0 %v957
      %977 = vmatprep.subr.bf16.mxu0 0
      %978 = vmatpush1.bf16.msra.mxu0 %v958
      %979 = vmatprep.subr.bf16.mxu0 0
      %980 = vmatpush1.bf16.msra.mxu0 %v959
      %981 = vmatprep.subr.bf16.mxu0 0
      %982 = vmatpush1.bf16.msra.mxu0 %v960
      %983 = vmatprep.subr.bf16.mxu0 0
      %984 = vmatpush1.bf16.msra.mxu0 %v961
      %985 = vmatprep.subr.bf16.mxu0 0
      %986 = vmatpush1.bf16.msra.mxu0 %v962
      %987 = vmatprep.subr.bf16.mxu0 0
      %988 = vmatpush1.bf16.msra.mxu0 0
      %989 = vmatprep.subr.bf16.mxu0 0
      %990 = vmatpush1.bf16.msra.mxu0 0
      %991 = vmatprep.subr.bf16.mxu0 0
      %992 = vmatpush1.bf16.msra.mxu0 0
      %993 = vmatprep.subr.bf16.mxu0 0
      %994 = vmatpush1.bf16.msra.mxu0 0
      %995 = vmatprep.subr.bf16.mxu0 0
      %996 = vmatpush1.bf16.msra.mxu0 0
      %997 = vmatprep.subr.bf16.mxu0 0
      %998 = vmatpush1.bf16.msra.mxu0 0
      %999 = vmatprep.subr.bf16.mxu0 0
      %1000 = vmatpush1.bf16.msra.mxu0 0
      %1001 = vmatprep.subr.bf16.mxu0 0
      %1002 = vmatpush1.bf16.msra.mxu0 0
      %1003 = vmatprep.mubr.bf16.mxu0 0
      %1004 = vmatmul.mubr.bf16.gmra.mrb[0].mxu0 %v808
      %v1005 = vpop.f32.mrb[0].mxu0
      %v1006 = vadd.f32 %v918, %v1005
      %v1007 = vpop.f32.mrb[0].mxu0
      %v1008 = vpop.f32.mrb[0].mxu0
      %v1009 = vpop.f32.mrb[0].mxu0
      %1010 = vdwg.mxu0
      %s1011 = scalar_lea.vmem %s6, 128
      %v1012 = vld [vmem:[%s1011] sm:$0xf]
      %v1013 = vld [vmem:[%s1011 + $0x4] sm:$0xf]
      %v1014 = vld [vmem:[%s1011 + $0x8] sm:$0xf]
      %v1015 = vld [vmem:[%s1011 + $0xc] sm:$0xf]
      %v1016 = vld [vmem:[%s1011 + $0x10] sm:$0xf]
      %v1017 = vld [vmem:[%s1011 + $0x14] sm:$0xf]
      %v1018 = vld [vmem:[%s1011 + $0x18] sm:$0xf]
      %v1019 = vld [vmem:[%s1011 + $0x1c] sm:$0xf]
      %v1020 = vld [vmem:[%s1011 + $0x20] sm:$0xf]
      %v1021 = vld [vmem:[%s1011 + $0x24] sm:$0xf]
      %v1022 = vld [vmem:[%s1011 + $0x28] sm:$0xf]
      %v1023 = vld [vmem:[%s1011 + $0x2c] sm:$0xf]
      %v1024 = vld [vmem:[%s1011 + $0x30] sm:$0xf]
      %v1025 = vld [vmem:[%s1011 + $0x34] sm:$0xf]
      %v1026 = vld [vmem:[%s1011 + $0x38] sm:$0xf]
      %v1027 = vld [vmem:[%s1011 + $0x3c] sm:$0xf]
      %v1029 = vrot.slane %v826, 1
      %v1047 = vunpack.c.l.b16 %v1012
      %v1048 = vunpack.c.l.b16 %v1013
      %v1049 = vunpack.c.l.b16 %v1014
      %v1050 = vunpack.c.l.b16 %v1015
      %v1051 = vunpack.c.l.b16 %v1016
      %v1052 = vunpack.c.l.b16 %v1017
      %v1053 = vunpack.c.l.b16 %v1018
      %v1054 = vunpack.c.l.b16 %v1019
      %v1055 = vunpack.c.l.b16 %v1020
      %v1056 = vunpack.c.l.b16 %v1021
      %v1057 = vunpack.c.l.b16 %v1022
      %v1058 = vunpack.c.l.b16 %v1023
      %v1059 = vunpack.c.l.b16 %v1024
      %v1060 = vunpack.c.l.b16 %v1025
      %v1061 = vunpack.c.l.b16 %v1026
      %v1062 = vunpack.c.l.b16 %v1027
      %v1063 = vpack.c.b16 %v1048, %v1047
      %v1064 = vpack.c.b16 %v1050, %v1049
      %v1065 = vpack.c.b16 %v1052, %v1051
      %v1066 = vpack.c.b16 %v1054, %v1053
      %v1067 = vpack.c.b16 %v1056, %v1055
      %v1068 = vpack.c.b16 %v1058, %v1057
      %v1069 = vpack.c.b16 %v1060, %v1059
      %v1070 = vpack.c.b16 %v1062, %v1061
      %1079 = vmatprep.subr.bf16.mxu0 0
      %1080 = vmatpush1.bf16.msra.mxu0 %v1063
      %1081 = vmatprep.subr.bf16.mxu0 0
      %1082 = vmatpush1.bf16.msra.mxu0 %v1064
      %1083 = vmatprep.subr.bf16.mxu0 0
      %1084 = vmatpush1.bf16.msra.mxu0 %v1065
      %1085 = vmatprep.subr.bf16.mxu0 0
      %1086 = vmatpush1.bf16.msra.mxu0 %v1066
      %1087 = vmatprep.subr.bf16.mxu0 0
      %1088 = vmatpush1.bf16.msra.mxu0 %v1067
      %1089 = vmatprep.subr.bf16.mxu0 0
      %1090 = vmatpush1.bf16.msra.mxu0 %v1068
      %1091 = vmatprep.subr.bf16.mxu0 0
      %1092 = vmatpush1.bf16.msra.mxu0 %v1069
      %1093 = vmatprep.subr.bf16.mxu0 0
      %1094 = vmatpush1.bf16.msra.mxu0 %v1070
      %1095 = vmatprep.subr.bf16.mxu0 0
      %1096 = vmatpush1.bf16.msra.mxu0 0
      %1097 = vmatprep.subr.bf16.mxu0 0
      %1098 = vmatpush1.bf16.msra.mxu0 0
      %1099 = vmatprep.subr.bf16.mxu0 0
      %1100 = vmatpush1.bf16.msra.mxu0 0
      %1101 = vmatprep.subr.bf16.mxu0 0
      %1102 = vmatpush1.bf16.msra.mxu0 0
      %1103 = vmatprep.subr.bf16.mxu0 0
      %1104 = vmatpush1.bf16.msra.mxu0 0
      %1105 = vmatprep.subr.bf16.mxu0 0
      %1106 = vmatpush1.bf16.msra.mxu0 0
      %1107 = vmatprep.subr.bf16.mxu0 0
      %1108 = vmatpush1.bf16.msra.mxu0 0
      %1109 = vmatprep.subr.bf16.mxu0 0
      %1110 = vmatpush1.bf16.msra.mxu0 0
      %1111 = vmatprep.mubr.bf16.mxu0 0
      %1112 = vmatmul.mubr.bf16.gmra.mrb[0].mxu0 %v1029
      %v1113 = vpop.f32.mrb[0].mxu0
      %v1114 = vadd.f32 0.0, %v1113
      %v1115 = vpop.f32.mrb[0].mxu0
      %v1116 = vpop.f32.mrb[0].mxu0
      %v1117 = vpop.f32.mrb[0].mxu0
      %1118 = vdwg.mxu0
      %v1119 = vadd.f32 %v1006, %v1114
      %s1120 = scalar_lea.vmem %s6, 192
      %v1121 = vld [vmem:[%s1120] sm:$0xf]
      %v1122 = vld [vmem:[%s1120 + $0x4] sm:$0xf]
      %v1123 = vld [vmem:[%s1120 + $0x8] sm:$0xf]
      %v1124 = vld [vmem:[%s1120 + $0xc] sm:$0xf]
      %v1125 = vld [vmem:[%s1120 + $0x10] sm:$0xf]
      %v1126 = vld [vmem:[%s1120 + $0x14] sm:$0xf]
      %v1127 = vld [vmem:[%s1120 + $0x18] sm:$0xf]
      %v1128 = vld [vmem:[%s1120 + $0x1c] sm:$0xf]
      %v1129 = vld [vmem:[%s1120 + $0x20] sm:$0xf]
      %v1130 = vld [vmem:[%s1120 + $0x24] sm:$0xf]
      %v1131 = vld [vmem:[%s1120 + $0x28] sm:$0xf]
      %v1132 = vld [vmem:[%s1120 + $0x2c] sm:$0xf]
      %v1133 = vld [vmem:[%s1120 + $0x30] sm:$0xf]
      %v1134 = vld [vmem:[%s1120 + $0x34] sm:$0xf]
      %v1135 = vld [vmem:[%s1120 + $0x38] sm:$0xf]
      %v1136 = vld [vmem:[%s1120 + $0x3c] sm:$0xf]
      %v1137 = vrot.slane %v828, 1
      %v1138 = vrot.slane %v830, 2
      %v1139 = vor.u32 %v1137, %v1138
      %v1157 = vunpack.c.l.b16 %v1121
      %v1158 = vunpack.c.l.b16 %v1122
      %v1159 = vunpack.c.l.b16 %v1123
      %v1160 = vunpack.c.l.b16 %v1124
      %v1161 = vunpack.c.l.b16 %v1125
      %v1162 = vunpack.c.l.b16 %v1126
      %v1163 = vunpack.c.l.b16 %v1127
      %v1164 = vunpack.c.l.b16 %v1128
      %v1165 = vunpack.c.l.b16 %v1129
      %v1166 = vunpack.c.l.b16 %v1130
      %v1167 = vunpack.c.l.b16 %v1131
      %v1168 = vunpack.c.l.b16 %v1132
      %v1169 = vunpack.c.l.b16 %v1133
      %v1170 = vunpack.c.l.b16 %v1134
      %v1171 = vunpack.c.l.b16 %v1135
      %v1172 = vunpack.c.l.b16 %v1136
      %v1173 = vpack.c.b16 %v1158, %v1157
      %v1174 = vpack.c.b16 %v1160, %v1159
      %v1175 = vpack.c.b16 %v1162, %v1161
      %v1176 = vpack.c.b16 %v1164, %v1163
      %v1177 = vpack.c.b16 %v1166, %v1165
      %v1178 = vpack.c.b16 %v1168, %v1167
      %v1179 = vpack.c.b16 %v1170, %v1169
      %v1180 = vpack.c.b16 %v1172, %v1171
      %1189 = vmatprep.subr.bf16.mxu0 0
      %1190 = vmatpush1.bf16.msra.mxu0 %v1173
      %1191 = vmatprep.subr.bf16.mxu0 0
      %1192 = vmatpush1.bf16.msra.mxu0 %v1174
      %1193 = vmatprep.subr.bf16.mxu0 0
      %1194 = vmatpush1.bf16.msra.mxu0 %v1175
      %1195 = vmatprep.subr.bf16.mxu0 0
      %1196 = vmatpush1.bf16.msra.mxu0 %v1176
      %1197 = vmatprep.subr.bf16.mxu0 0
      %1198 = vmatpush1.bf16.msra.mxu0 %v1177
      %1199 = vmatprep.subr.bf16.mxu0 0
      %1200 = vmatpush1.bf16.msra.mxu0 %v1178
      %1201 = vmatprep.subr.bf16.mxu0 0
      %1202 = vmatpush1.bf16.msra.mxu0 %v1179
      %1203 = vmatprep.subr.bf16.mxu0 0
      %1204 = vmatpush1.bf16.msra.mxu0 %v1180
      %1205 = vmatprep.subr.bf16.mxu0 0
      %1206 = vmatpush1.bf16.msra.mxu0 0
      %1207 = vmatprep.subr.bf16.mxu0 0
      %1208 = vmatpush1.bf16.msra.mxu0 0
      %1209 = vmatprep.subr.bf16.mxu0 0
      %1210 = vmatpush1.bf16.msra.mxu0 0
      %1211 = vmatprep.subr.bf16.mxu0 0
      %1212 = vmatpush1.bf16.msra.mxu0 0
      %1213 = vmatprep.subr.bf16.mxu0 0
      %1214 = vmatpush1.bf16.msra.mxu0 0
      %1215 = vmatprep.subr.bf16.mxu0 0
      %1216 = vmatpush1.bf16.msra.mxu0 0
      %1217 = vmatprep.subr.bf16.mxu0 0
      %1218 = vmatpush1.bf16.msra.mxu0 0
      %1219 = vmatprep.subr.bf16.mxu0 0
      %1220 = vmatpush1.bf16.msra.mxu0 0
      %1221 = vmatprep.mubr.bf16.mxu0 0
      %1222 = vmatmul.mubr.bf16.gmra.mrb[0].mxu0 %v1139
      %v1223 = vpop.f32.mrb[0].mxu0
      %v1224 = vadd.f32 0.0, %v1223
      %v1225 = vpop.f32.mrb[0].mxu0
      %v1226 = vpop.f32.mrb[0].mxu0
      %v1227 = vpop.f32.mrb[0].mxu0
      %1228 = vdwg.mxu0
      %v1229 = vadd.f32 %v1119, %v1224
      %v1230 = vld [vmem:[%s7] sm:$0x1]
      %v1232 = vlaneseq
      %v1233 = vshrl.u32 %v1232, 7
      %v1234 = vsub.s32 0, %v1233
      %v1235 = vrot.slane %v1230, %v1234
      %v1237 = vadd.f32 %v1229, %v1235
      %v1238 = vmul.f32 %v1237, %v1237
      %v1239 = vmul.f32 %v1237, %v1238
      %v1240 = vmul.f32 %v1239, 0.044715
      %v1241 = vadd.f32 %v1237, %v1240
      %v1242 = vmul.f32 %v1241, 0.7978846
      %v1243 = vtanh.pop %v1242
      %v1244 = vadd.f32 %v1243, 1.0
      %v1245 = vmul.f32 %v1244, 0.5
      %v1246 = vmul.f32 %v1237, %v1245
      %v1247 = vadd.f32 %v781, %v1246
      %v1248 = vld [vmem:[%s8] sm:$0x1]
      %v1249 = vld [vmem:[%s9] sm:$0x1]
      %1250 = vadd.xlane.f32.xlu0 %v1247
      %v1251 = vpop.xlane.xlu0 %1250
      %v1252 = vmul.f32 %v1251, %v650
      %v1253 = vsub.f32 %v1247, %v1252
      %v1254 = vmul.f32 %v1253, %v1253
      %1255 = vadd.xlane.f32.xlu0 %v1254
      %v1256 = vpop.xlane.xlu0 %1255
      %v1257 = vmul.f32 %v1256, %v650
      %v1258 = vadd.f32 %v1257, 1e-05
      %v1259 = vrsqrt.pop %v1258
      %v1260 = vmul.f32 %v1253, %v1259
      %v1262 = vlaneseq
      %v1263 = vshrl.u32 %v1262, 7
      %v1264 = vsub.s32 0, %v1263
      %v1265 = vrot.slane %v1248, %v1264
      %v1267 = vmul.f32 %v1260, %v1265
      %v1269 = vlaneseq
      %v1270 = vshrl.u32 %v1269, 7
      %v1271 = vsub.s32 0, %v1270
      %v1272 = vrot.slane %v1249, %v1271
      %v1274 = vadd.f32 %v1267, %v1272
      %1275 = vst [vmem:[%s357] sm:$0xff] %v1274
      %p1276 = scmp.lt.s32.totalorder %s21, 1
      %s1277 = scalar_select %p1276, %s21, 1
      %s1278 = smul.addr %s1277, 8
      %s1279 = scalar_lea.vmem %s10, %s1278
      // Predicated region
      $region61: #{wav2vec2_classifier_forward.4} parent=59 // pred_check
        %p1280 = pneg %p254
      $region62: #{wav2vec2_classifier_forward.4} parent=59 // pred_check_branch
        %1282 = sbr.rel (%p1280) target = $region64
      $region63: #{wav2vec2_classifier_forward.4} parent=59 // pred_region
        _
      $region64: #{wav2vec2_classifier_forward.4} parent=59 // pred_fallthru
        _
    $region60: #{wav2vec2_classifier_forward.4} parent=5 // pred_fallthru
      _
    %p1283 = scmp.le.s32.totalorder 2, %s16
    // Predicated region
    $region65: #{wav2vec2_classifier_forward.4} parent=5 // pred_check
      %p1284 = pneg %p1283
    $region66: #{wav2vec2_classifier_forward.4} parent=5 // pred_check_branch
      %1286 = sbr.rel (%p1284) target = $region68
    $region67: #{wav2vec2_classifier_forward.4} parent=5 // pred_region
      %s1287 = ssub.s32 %s16, 2
      // Predicated region
      $region69: #{wav2vec2_classifier_forward.4} parent=67 // pred_check
        %p1288 = pneg %p260
      $region70: #{wav2vec2_classifier_forward.4} parent=67 // pred_check_branch
        %1290 = sbr.rel (%p1288) target = $region72
      $region71: #{wav2vec2_classifier_forward.4} parent=67 // pred_region
        %p1291 = scmp.lt.s32.totalorder %s22, 1
        %s1292 = scalar_select %p1291, %s22, 1
        %s1293 = smul.addr %s1292, 8
        %s1294 = scalar_lea.vmem %s10, %s1293
      $region72: #{wav2vec2_classifier_forward.4} parent=67 // pred_fallthru
        _
    $region68: #{wav2vec2_classifier_forward.4} parent=5 // pred_fallthru
      _
  $region6: #{wav2vec2_classifier_forward.4} parent=0 // loop_footer
    %s20 = sadd.s32 1, %s16
  $region7: #{wav2vec2_classifier_forward.4} parent=0 // loop_footer_branch
    %15 = sbr.rel target = $region3
  $region8: #{wav2vec2_classifier_forward.4} parent=0 // loop_exit
    _

// kernel: wav2vec2_classifier_forward.5
$region0: #{wav2vec2_classifier_forward.5}
  #allocation0 [shape = 'u32[]', space=smem, size = 0x4, offset = 0x4, fixed_abs, tag = 'smem constant byte address 0x4 - core index']
  #allocation1 [shape = 'u32[144,128]{1,0:T(1,128)}', space=vmem, size = 0x12000, scoped, tag = 'internal scratch']
  %s0 = inlined_call_operand.vmem [shape: f32[2,8,128], index: 0, kind: input, shape index: {}]
  %s1 = inlined_call_operand.vmem [shape: bf16[2,128,384], index: 1, kind: input, shape index: {}]
  %s2 = inlined_call_operand.vmem [shape: f32[2,1,384], index: 2, kind: input, shape index: {}]
  %s3 = inlined_call_operand.vmem [shape: bf16[2,128,128], index: 3, kind: input, shape index: {}]
  %s4 = inlined_call_operand.vmem [shape: f32[2,1,128], index: 4, kind: input, shape index: {}]
  %s5 = inlined_call_operand.vmem [shape: f32[2,1,128], index: 5, kind: input, shape index: {}]
  %s6 = inlined_call_operand.vmem [shape: f32[2,1,128], index: 6, kind: input, shape index: {}]
  %s7 = inlined_call_operand.vmem [shape: bf16[2,128,256], index: 7, kind: input, shape index: {}]
  %s8 = inlined_call_operand.vmem [shape: f32[2,1,256], index: 8, kind: input, shape index: {}]
  %s9 = inlined_call_operand.vmem [shape: bf16[2,256,128], index: 9, kind: input, shape index: {}]
  %s10 = inlined_call_operand.vmem [shape: f32[2,1,128], index: 10, kind: input, shape index: {}]
  %s11 = inlined_call_operand.vmem [shape: f32[2,1,128], index: 11, kind: input, shape index: {}]
  %s12 = inlined_call_operand.vmem [shape: f32[2,1,128], index: 12, kind: input, shape index: {}]
  %s13 = inlined_call_operand.vmem [shape: bf16[128,256], index: 13, kind: input, shape index: {}]
  %s14 = inlined_call_operand.vmem [shape: f32[1,256], index: 14, kind: input, shape index: {}]
  %s15 = inlined_call_operand.vmem [shape: bf16[256,128], index: 15, kind: input, shape index: {}]
  %s16 = inlined_call_operand.vmem [shape: f32[1,128], index: 16, kind: input, shape index: {}]
  %s17 = inlined_call_operand.vmem [shape: f32[2,8,128], index: 17, kind: output, shape index: {}]
  %s18 = sld [smem:[#allocation0]]
  $region101: #{wav2vec2_classifier_forward.5} parent=0
    _
  %s20 = ssub.s32 1, %s18
  %s21 = scalar_select 0, %s20, %s18
  loop: start=0, step=1, limit=4
  $region2: #{wav2vec2_classifier_forward.5} parent=0 // loop_pre_header
    _
  $region3: #{wav2vec2_classifier_forward.5} parent=0 // loop_header
    %s23 = sphi 0, %s27
    %p24 = scmp.ge.s32.totalorder %s23, 4
    %s33 = sphi 0, %s35
    %s36 = sphi 0, %s33
    %s37 = sphi 0, %s36
    %s53 = sphi 0, %s37
    %s57 = sphi 0, %s57
    %s59 = sphi 0, %s57
    %s60 = sphi 0, %s59
    %s74 = sphi 0, %s60
    %s78 = sphi 0, %s78
    %s80 = sphi 0, %s78
    %s81 = sphi 0, %s80
    %s95 = sphi 0, %s81
    %s99 = sphi 0, %s99
    %s101 = sphi 0, %s99
    %s102 = sphi 0, %s101
    %s116 = sphi 0, %s102
    %s120 = sphi 0, %s120
    %s122 = sphi 0, %s120
    %s123 = sphi 0, %s122
    %s137 = sphi 0, %s123
    %s141 = sphi 0, %s141
    %s143 = sphi 0, %s141
    %s144 = sphi 0, %s143
    %s158 = sphi 0, %s144
    %s162 = sphi 0, %s162
    %s164 = sphi 0, %s162
    %s165 = sphi 0, %s164
    %s179 = sphi 0, %s165
    %s183 = sphi 0, %s183
    %s185 = sphi 0, %s183
    %s186 = sphi 0, %s185
    %s200 = sphi 0, %s186
    %s204 = sphi 0, %s204
    %s206 = sphi 0, %s204
    %s207 = sphi 0, %s206
    %s221 = sphi 0, %s207
    %s225 = sphi 0, %s225
    %s227 = sphi 0, %s225
    %s228 = sphi 0, %s227
    %s242 = sphi 0, %s228
    %s246 = sphi 0, %s246
    %s248 = sphi 0, %s246
    %s249 = sphi 0, %s248
    %s263 = sphi 0, %s249
    %s267 = sphi 0, %s267
    %s269 = sphi 0, %s267
    %s270 = sphi 0, %s269
    %s284 = sphi 0, %s270
    %s288 = sphi 0, %s288
    %s290 = sphi 0, %s288
    %s291 = sphi 0, %s290
    %s305 = sphi 0, %s291
    %s309 = sphi 0, %s309
    %s311 = sphi 0, %s309
    %s312 = sphi 0, %s311
    %s326 = sphi 0, %s312
    %s330 = sphi 0, %s330
    %s332 = sphi 0, %s330
    %s333 = sphi 0, %s332
    %s347 = sphi 0, %s333
    %s351 = sphi 0, %s351
    %s353 = sphi 0, %s351
    %s354 = sphi 0, %s353
    %s368 = sphi 0, %s354
    %s372 = sphi 0, %s372
    %s374 = sphi 0, %s372
    %s375 = sphi 0, %s374
    %s389 = sphi 0, %s375
    %s395 = sphi 0, %s397
    %s398 = sphi 0, %s395
    %s399 = sphi 0, %s398
    %s415 = sphi 0, %s399
  $region4: #{wav2vec2_classifier_forward.5} parent=0 // loop_header_branch
    %26 = sbr.rel (%p24) target = $region8
  $region5: #{wav2vec2_classifier_forward.5} parent=0 // loop_body
    %s28 = ssub.s32 %s23, 1
    %s29 = ssub.s32 %s23, 2
    %s30 = sadd.s32 %s23, 1
    %s31 = ssub.s32 %s23, %s30
    %p32 = scmp.eq.s32.totalorder %s31, 0
    %s34 = sadd.s32 %s33, 1
    %s35 = scalar_select %p32, %s33, %s34
    %p38 = pneg %p32
    %p39 = scmp.eq.s32.totalorder %s23, 1
    %p40 = por %p38, %p39
    %p41 = scmp.ne.s32.totalorder %s33, %s36
    %p42 = scmp.eq.s32.totalorder %s23, 0
    %p43 = por %p41, %p42
    %p44 = scmp.ne.s32.totalorder %s33, %s36
    %p45 = scmp.eq.s32.totalorder %s28, 1
    %p46 = por %p44, %p45
    %p47 = scmp.ne.s32.totalorder %s36, %s37
    %p48 = scmp.eq.s32.totalorder %s28, 0
    %p49 = por %p47, %p48
    %p50 = scmp.ne.s32.totalorder %s36, %s37
    %p51 = scmp.eq.s32.totalorder %s29, 1
    %p52 = por %p50, %p51
    %p54 = scmp.ne.s32.totalorder %s37, %s53
    %p55 = scmp.eq.s32.totalorder %s29, 0
    %p56 = por %p54, %p55
    %s58 = sadd.s32 %s57, 1
    %p61 = scmp.eq.s32.totalorder %s23, 1
    %p62 = scmp.ne.s32.totalorder %s57, %s59
    %p63 = scmp.eq.s32.totalorder %s23, 0
    %p64 = por %p62, %p63
    %p65 = scmp.ne.s32.totalorder %s57, %s59
    %p66 = scmp.eq.s32.totalorder %s28, 1
    %p67 = por %p65, %p66
    %p68 = scmp.ne.s32.totalorder %s59, %s60
    %p69 = scmp.eq.s32.totalorder %s28, 0
    %p70 = por %p68, %p69
    %p71 = scmp.ne.s32.totalorder %s59, %s60
    %p72 = scmp.eq.s32.totalorder %s29, 1
    %p73 = por %p71, %p72
    %p75 = scmp.ne.s32.totalorder %s60, %s74
    %p76 = scmp.eq.s32.totalorder %s29, 0
    %p77 = por %p75, %p76
    %s79 = sadd.s32 %s78, 1
    %p82 = scmp.eq.s32.totalorder %s23, 1
    %p83 = scmp.ne.s32.totalorder %s78, %s80
    %p84 = scmp.eq.s32.totalorder %s23, 0
    %p85 = por %p83, %p84
    %p86 = scmp.ne.s32.totalorder %s78, %s80
    %p87 = scmp.eq.s32.totalorder %s28, 1
    %p88 = por %p86, %p87
    %p89 = scmp.ne.s32.totalorder %s80, %s81
    %p90 = scmp.eq.s32.totalorder %s28, 0
    %p91 = por %p89, %p90
    %p92 = scmp.ne.s32.totalorder %s80, %s81
    %p93 = scmp.eq.s32.totalorder %s29, 1
    %p94 = por %p92, %p93
    %p96 = scmp.ne.s32.totalorder %s81, %s95
    %p97 = scmp.eq.s32.totalorder %s29, 0
    %p98 = por %p96, %p97
    %s100 = sadd.s32 %s99, 1
    %p103 = scmp.eq.s32.totalorder %s23, 1
    %p104 = scmp.ne.s32.totalorder %s99, %s101
    %p105 = scmp.eq.s32.totalorder %s23, 0
    %p106 = por %p104, %p105
    %p107 = scmp.ne.s32.totalorder %s99, %s101
    %p108 = scmp.eq.s32.totalorder %s28, 1
    %p109 = por %p107, %p108
    %p110 = scmp.ne.s32.totalorder %s101, %s102
    %p111 = scmp.eq.s32.totalorder %s28, 0
    %p112 = por %p110, %p111
    %p113 = scmp.ne.s32.totalorder %s101, %s102
    %p114 = scmp.eq.s32.totalorder %s29, 1
    %p115 = por %p113, %p114
    %p117 = scmp.ne.s32.totalorder %s102, %s116
    %p118 = scmp.eq.s32.totalorder %s29, 0
    %p119 = por %p117, %p118
    %s121 = sadd.s32 %s120, 1
    %p124 = scmp.eq.s32.totalorder %s23, 1
    %p125 = scmp.ne.s32.totalorder %s120, %s122
    %p126 = scmp.eq.s32.totalorder %s23, 0
    %p127 = por %p125, %p126
    %p128 = scmp.ne.s32.totalorder %s120, %s122
    %p129 = scmp.eq.s32.totalorder %s28, 1
    %p130 = por %p128, %p129
    %p131 = scmp.ne.s32.totalorder %s122, %s123
    %p132 = scmp.eq.s32.totalorder %s28, 0
    %p133 = por %p131, %p132
    %p134 = scmp.ne.s32.totalorder %s122, %s123
    %p135 = scmp.eq.s32.totalorder %s29, 1
    %p136 = por %p134, %p135
    %p138 = scmp.ne.s32.totalorder %s123, %s137
    %p139 = scmp.eq.s32.totalorder %s29, 0
    %p140 = por %p138, %p139
    %s142 = sadd.s32 %s141, 1
    %p145 = scmp.eq.s32.totalorder %s23, 1
    %p146 = scmp.ne.s32.totalorder %s141, %s143
    %p147 = scmp.eq.s32.totalorder %s23, 0
    %p148 = por %p146, %p147
    %p149 = scmp.ne.s32.totalorder %s141, %s143
    %p150 = scmp.eq.s32.totalorder %s28, 1
    %p151 = por %p149, %p150
    %p152 = scmp.ne.s32.totalorder %s143, %s144
    %p153 = scmp.eq.s32.totalorder %s28, 0
    %p154 = por %p152, %p153
    %p155 = scmp.ne.s32.totalorder %s143, %s144
    %p156 = scmp.eq.s32.totalorder %s29, 1
    %p157 = por %p155, %p156
    %p159 = scmp.ne.s32.totalorder %s144, %s158
    %p160 = scmp.eq.s32.totalorder %s29, 0
    %p161 = por %p159, %p160
    %s163 = sadd.s32 %s162, 1
    %p166 = scmp.eq.s32.totalorder %s23, 1
    %p167 = scmp.ne.s32.totalorder %s162, %s164
    %p168 = scmp.eq.s32.totalorder %s23, 0
    %p169 = por %p167, %p168
    %p170 = scmp.ne.s32.totalorder %s162, %s164
    %p171 = scmp.eq.s32.totalorder %s28, 1
    %p172 = por %p170, %p171
    %p173 = scmp.ne.s32.totalorder %s164, %s165
    %p174 = scmp.eq.s32.totalorder %s28, 0
    %p175 = por %p173, %p174
    %p176 = scmp.ne.s32.totalorder %s164, %s165
    %p177 = scmp.eq.s32.totalorder %s29, 1
    %p178 = por %p176, %p177
    %p180 = scmp.ne.s32.totalorder %s165, %s179
    %p181 = scmp.eq.s32.totalorder %s29, 0
    %p182 = por %p180, %p181
    %s184 = sadd.s32 %s183, 1
    %p187 = scmp.eq.s32.totalorder %s23, 1
    %p188 = scmp.ne.s32.totalorder %s183, %s185
    %p189 = scmp.eq.s32.totalorder %s23, 0
    %p190 = por %p188, %p189
    %p191 = scmp.ne.s32.totalorder %s183, %s185
    %p192 = scmp.eq.s32.totalorder %s28, 1
    %p193 = por %p191, %p192
    %p194 = scmp.ne.s32.totalorder %s185, %s186
    %p195 = scmp.eq.s32.totalorder %s28, 0
    %p196 = por %p194, %p195
    %p197 = scmp.ne.s32.totalorder %s185, %s186
    %p198 = scmp.eq.s32.totalorder %s29, 1
    %p199 = por %p197, %p198
    %p201 = scmp.ne.s32.totalorder %s186, %s200
    %p202 = scmp.eq.s32.totalorder %s29, 0
    %p203 = por %p201, %p202
    %s205 = sadd.s32 %s204, 1
    %p208 = scmp.eq.s32.totalorder %s23, 1
    %p209 = scmp.ne.s32.totalorder %s204, %s206
    %p210 = scmp.eq.s32.totalorder %s23, 0
    %p211 = por %p209, %p210
    %p212 = scmp.ne.s32.totalorder %s204, %s206
    %p213 = scmp.eq.s32.totalorder %s28, 1
    %p214 = por %p212, %p213
    %p215 = scmp.ne.s32.totalorder %s206, %s207
    %p216 = scmp.eq.s32.totalorder %s28, 0
    %p217 = por %p215, %p216
    %p218 = scmp.ne.s32.totalorder %s206, %s207
    %p219 = scmp.eq.s32.totalorder %s29, 1
    %p220 = por %p218, %p219
    %p222 = scmp.ne.s32.totalorder %s207, %s221
    %p223 = scmp.eq.s32.totalorder %s29, 0
    %p224 = por %p222, %p223
    %s226 = sadd.s32 %s225, 1
    %p229 = scmp.eq.s32.totalorder %s23, 1
    %p230 = scmp.ne.s32.totalorder %s225, %s227
    %p231 = scmp.eq.s32.totalorder %s23, 0
    %p232 = por %p230, %p231
    %p233 = scmp.ne.s32.totalorder %s225, %s227
    %p234 = scmp.eq.s32.totalorder %s28, 1
    %p235 = por %p233, %p234
    %p236 = scmp.ne.s32.totalorder %s227, %s228
    %p237 = scmp.eq.s32.totalorder %s28, 0
    %p238 = por %p236, %p237
    %p239 = scmp.ne.s32.totalorder %s227, %s228
    %p240 = scmp.eq.s32.totalorder %s29, 1
    %p241 = por %p239, %p240
    %p243 = scmp.ne.s32.totalorder %s228, %s242
    %p244 = scmp.eq.s32.totalorder %s29, 0
    %p245 = por %p243, %p244
    %s247 = sadd.s32 %s246, 1
    %p250 = scmp.eq.s32.totalorder %s23, 1
    %p251 = scmp.ne.s32.totalorder %s246, %s248
    %p252 = scmp.eq.s32.totalorder %s23, 0
    %p253 = por %p251, %p252
    %p254 = scmp.ne.s32.totalorder %s246, %s248
    %p255 = scmp.eq.s32.totalorder %s28, 1
    %p256 = por %p254, %p255
    %p257 = scmp.ne.s32.totalorder %s248, %s249
    %p258 = scmp.eq.s32.totalorder %s28, 0
    %p259 = por %p257, %p258
    %p260 = scmp.ne.s32.totalorder %s248, %s249
    %p261 = scmp.eq.s32.totalorder %s29, 1
    %p262 = por %p260, %p261
    %p264 = scmp.ne.s32.totalorder %s249, %s263
    %p265 = scmp.eq.s32.totalorder %s29, 0
    %p266 = por %p264, %p265
    %s268 = sadd.s32 %s267, 1
    %p271 = scmp.eq.s32.totalorder %s23, 1
    %p272 = scmp.ne.s32.totalorder %s267, %s269
    %p273 = scmp.eq.s32.totalorder %s23, 0
    %p274 = por %p272, %p273
    %p275 = scmp.ne.s32.totalorder %s267, %s269
    %p276 = scmp.eq.s32.totalorder %s28, 1
    %p277 = por %p275, %p276
    %p278 = scmp.ne.s32.totalorder %s269, %s270
    %p279 = scmp.eq.s32.totalorder %s28, 0
    %p280 = por %p278, %p279
    %p281 = scmp.ne.s32.totalorder %s269, %s270
    %p282 = scmp.eq.s32.totalorder %s29, 1
    %p283 = por %p281, %p282
    %p285 = scmp.ne.s32.totalorder %s270, %s284
    %p286 = scmp.eq.s32.totalorder %s29, 0
    %p287 = por %p285, %p286
    %s289 = sadd.s32 %s288, 1
    %p292 = scmp.eq.s32.totalorder %s23, 1
    %p293 = scmp.ne.s32.totalorder %s288, %s290
    %p294 = scmp.eq.s32.totalorder %s23, 0
    %p295 = por %p293, %p294
    %p296 = scmp.ne.s32.totalorder %s288, %s290
    %p297 = scmp.eq.s32.totalorder %s28, 1
    %p298 = por %p296, %p297
    %p299 = scmp.ne.s32.totalorder %s290, %s291
    %p300 = scmp.eq.s32.totalorder %s28, 0
    %p301 = por %p299, %p300
    %p302 = scmp.ne.s32.totalorder %s290, %s291
    %p303 = scmp.eq.s32.totalorder %s29, 1
    %p304 = por %p302, %p303
    %p306 = scmp.ne.s32.totalorder %s291, %s305
    %p307 = scmp.eq.s32.totalorder %s29, 0
    %p308 = por %p306, %p307
    %s310 = sadd.s32 %s309, 1
    %p313 = scmp.eq.s32.totalorder %s23, 1
    %p314 = scmp.ne.s32.totalorder %s309, %s311
    %p315 = scmp.eq.s32.totalorder %s23, 0
    %p316 = por %p314, %p315
    %p317 = scmp.ne.s32.totalorder %s309, %s311
    %p318 = scmp.eq.s32.totalorder %s28, 1
    %p319 = por %p317, %p318
    %p320 = scmp.ne.s32.totalorder %s311, %s312
    %p321 = scmp.eq.s32.totalorder %s28, 0
    %p322 = por %p320, %p321
    %p323 = scmp.ne.s32.totalorder %s311, %s312
    %p324 = scmp.eq.s32.totalorder %s29, 1
    %p325 = por %p323, %p324
    %p327 = scmp.ne.s32.totalorder %s312, %s326
    %p328 = scmp.eq.s32.totalorder %s29, 0
    %p329 = por %p327, %p328
    %s331 = sadd.s32 %s330, 1
    %p334 = scmp.eq.s32.totalorder %s23, 1
    %p335 = scmp.ne.s32.totalorder %s330, %s332
    %p336 = scmp.eq.s32.totalorder %s23, 0
    %p337 = por %p335, %p336
    %p338 = scmp.ne.s32.totalorder %s330, %s332
    %p339 = scmp.eq.s32.totalorder %s28, 1
    %p340 = por %p338, %p339
    %p341 = scmp.ne.s32.totalorder %s332, %s333
    %p342 = scmp.eq.s32.totalorder %s28, 0
    %p343 = por %p341, %p342
    %p344 = scmp.ne.s32.totalorder %s332, %s333
    %p345 = scmp.eq.s32.totalorder %s29, 1
    %p346 = por %p344, %p345
    %p348 = scmp.ne.s32.totalorder %s333, %s347
    %p349 = scmp.eq.s32.totalorder %s29, 0
    %p350 = por %p348, %p349
    %s352 = sadd.s32 %s351, 1
    %p355 = scmp.eq.s32.totalorder %s23, 1
    %p356 = scmp.ne.s32.totalorder %s351, %s353
    %p357 = scmp.eq.s32.totalorder %s23, 0
    %p358 = por %p356, %p357
    %p359 = scmp.ne.s32.totalorder %s351, %s353
    %p360 = scmp.eq.s32.totalorder %s28, 1
    %p361 = por %p359, %p360
    %p362 = scmp.ne.s32.totalorder %s353, %s354
    %p363 = scmp.eq.s32.totalorder %s28, 0
    %p364 = por %p362, %p363
    %p365 = scmp.ne.s32.totalorder %s353, %s354
    %p366 = scmp.eq.s32.totalorder %s29, 1
    %p367 = por %p365, %p366
    %p369 = scmp.ne.s32.totalorder %s354, %s368
    %p370 = scmp.eq.s32.totalorder %s29, 0
    %p371 = por %p369, %p370
    %s373 = sadd.s32 %s372, 1
    %p376 = scmp.eq.s32.totalorder %s23, 1
    %p377 = scmp.ne.s32.totalorder %s372, %s374
    %p378 = scmp.eq.s32.totalorder %s23, 0
    %p379 = por %p377, %p378
    %p380 = scmp.ne.s32.totalorder %s372, %s374
    %p381 = scmp.eq.s32.totalorder %s28, 1
    %p382 = por %p380, %p381
    %p383 = scmp.ne.s32.totalorder %s374, %s375
    %p384 = scmp.eq.s32.totalorder %s28, 0
    %p385 = por %p383, %p384
    %p386 = scmp.ne.s32.totalorder %s374, %s375
    %p387 = scmp.eq.s32.totalorder %s29, 1
    %p388 = por %p386, %p387
    %p390 = scmp.ne.s32.totalorder %s375, %s389
    %p391 = scmp.eq.s32.totalorder %s29, 0
    %p392 = por %p390, %p391
    %s393 = ssub.s32 %s23, %s30
    %p394 = scmp.eq.s32.totalorder %s393, 0
    %s396 = sadd.s32 %s395, 1
    %s397 = scalar_select %p394, %s395, %s396
    %p400 = pneg %p394
    %p401 = scmp.eq.s32.totalorder %s23, 1
    %p402 = por %p400, %p401
    %p403 = scmp.ne.s32.totalorder %s395, %s398
    %p404 = scmp.eq.s32.totalorder %s23, 0
    %p405 = por %p403, %p404
    %p406 = scmp.ne.s32.totalorder %s395, %s398
    %p407 = scmp.eq.s32.totalorder %s28, 1
    %p408 = por %p406, %p407
    %p409 = scmp.ne.s32.totalorder %s398, %s399
    %p410 = scmp.eq.s32.totalorder %s28, 0
    %p411 = por %p409, %p410
    %p412 = scmp.ne.s32.totalorder %s398, %s399
    %p413 = scmp.eq.s32.totalorder %s29, 1
    %p414 = por %p412, %p413
    %p416 = scmp.ne.s32.totalorder %s399, %s415
    %p417 = scmp.eq.s32.totalorder %s29, 0
    %p418 = por %p416, %p417
    %p419 = scmp.le.s32.totalorder 1, %s23
    %p420 = scmp.lt.s32.totalorder %s23, 3
    %p421 = pnand %p419, %p420
    %p422 = pneg %p421
    // Predicated region
    $region9: #{wav2vec2_classifier_forward.5} parent=5 // pred_check
      _
    $region10: #{wav2vec2_classifier_forward.5} parent=5 // pred_check_branch
      %424 = sbr.rel (%p421) target = $region12
    $region11: #{wav2vec2_classifier_forward.5} parent=5 // pred_region
      %s425 = ssub.s32 %s23, 1
      // Predicated region
      $region13: #{wav2vec2_classifier_forward.5} parent=11 // pred_check
        %p426 = pneg %p70
      $region14: #{wav2vec2_classifier_forward.5} parent=11 // pred_check_branch
        %428 = sbr.rel (%p426) target = $region16
      $region15: #{wav2vec2_classifier_forward.5} parent=11 // pred_region
        _
      $region16: #{wav2vec2_classifier_forward.5} parent=11 // pred_fallthru
        _
      // Predicated region
      $region17: #{wav2vec2_classifier_forward.5} parent=11 // pred_check
        %p429 = pneg %p91
      $region18: #{wav2vec2_classifier_forward.5} parent=11 // pred_check_branch
        %431 = sbr.rel (%p429) target = $region20
      $region19: #{wav2vec2_classifier_forward.5} parent=11 // pred_region
        _
      $region20: #{wav2vec2_classifier_forward.5} parent=11 // pred_fallthru
        _
      // Predicated region
      $region21: #{wav2vec2_classifier_forward.5} parent=11 // pred_check
        %p432 = pneg %p112
      $region22: #{wav2vec2_classifier_forward.5} parent=11 // pred_check_branch
        %434 = sbr.rel (%p432) target = $region24
      $region23: #{wav2vec2_classifier_forward.5} parent=11 // pred_region
        _
      $region24: #{wav2vec2_classifier_forward.5} parent=11 // pred_fallthru
        _
      // Predicated region
      $region25: #{wav2vec2_classifier_forward.5} parent=11 // pred_check
        %p435 = pneg %p133
      $region26: #{wav2vec2_classifier_forward.5} parent=11 // pred_check_branch
        %437 = sbr.rel (%p435) target = $region28
      $region27: #{wav2vec2_classifier_forward.5} parent=11 // pred_region
        _
      $region28: #{wav2vec2_classifier_forward.5} parent=11 // pred_fallthru
        _
      // Predicated region
      $region29: #{wav2vec2_classifier_forward.5} parent=11 // pred_check
        %p438 = pneg %p154
      $region30: #{wav2vec2_classifier_forward.5} parent=11 // pred_check_branch
        %440 = sbr.rel (%p438) target = $region32
      $region31: #{wav2vec2_classifier_forward.5} parent=11 // pred_region
        _
      $region32: #{wav2vec2_classifier_forward.5} parent=11 // pred_fallthru
        _
      // Predicated region
      $region33: #{wav2vec2_classifier_forward.5} parent=11 // pred_check
        %p441 = pneg %p175
      $region34: #{wav2vec2_classifier_forward.5} parent=11 // pred_check_branch
        %443 = sbr.rel (%p441) target = $region36
      $region35: #{wav2vec2_classifier_forward.5} parent=11 // pred_region
        _
      $region36: #{wav2vec2_classifier_forward.5} parent=11 // pred_fallthru
        _
      // Predicated region
      $region37: #{wav2vec2_classifier_forward.5} parent=11 // pred_check
        %p444 = pneg %p196
      $region38: #{wav2vec2_classifier_forward.5} parent=11 // pred_check_branch
        %446 = sbr.rel (%p444) target = $region40
      $region39: #{wav2vec2_classifier_forward.5} parent=11 // pred_region
        _
      $region40: #{wav2vec2_classifier_forward.5} parent=11 // pred_fallthru
        _
      // Predicated region
      $region41: #{wav2vec2_classifier_forward.5} parent=11 // pred_check
        %p447 = pneg %p217
      $region42: #{wav2vec2_classifier_forward.5} parent=11 // pred_check_branch
        %449 = sbr.rel (%p447) target = $region44
      $region43: #{wav2vec2_classifier_forward.5} parent=11 // pred_region
        _
      $region44: #{wav2vec2_classifier_forward.5} parent=11 // pred_fallthru
        _
      // Predicated region
      $region45: #{wav2vec2_classifier_forward.5} parent=11 // pred_check
        %p450 = pneg %p238
      $region46: #{wav2vec2_classifier_forward.5} parent=11 // pred_check_branch
        %452 = sbr.rel (%p450) target = $region48
      $region47: #{wav2vec2_classifier_forward.5} parent=11 // pred_region
        _
      $region48: #{wav2vec2_classifier_forward.5} parent=11 // pred_fallthru
        _
      // Predicated region
      $region49: #{wav2vec2_classifier_forward.5} parent=11 // pred_check
        %p453 = pneg %p259
      $region50: #{wav2vec2_classifier_forward.5} parent=11 // pred_check_branch
        %455 = sbr.rel (%p453) target = $region52
      $region51: #{wav2vec2_classifier_forward.5} parent=11 // pred_region
        _
      $region52: #{wav2vec2_classifier_forward.5} parent=11 // pred_fallthru
        _
      // Predicated region
      $region53: #{wav2vec2_classifier_forward.5} parent=11 // pred_check
        %p456 = pneg %p280
      $region54: #{wav2vec2_classifier_forward.5} parent=11 // pred_check_branch
        %458 = sbr.rel (%p456) target = $region56
      $region55: #{wav2vec2_classifier_forward.5} parent=11 // pred_region
        _
      $region56: #{wav2vec2_classifier_forward.5} parent=11 // pred_fallthru
        _
      // Predicated region
      $region57: #{wav2vec2_classifier_forward.5} parent=11 // pred_check
        %p459 = pneg %p301
      $region58: #{wav2vec2_classifier_forward.5} parent=11 // pred_check_branch
        %461 = sbr.rel (%p459) target = $region60
      $region59: #{wav2vec2_classifier_forward.5} parent=11 // pred_region
        _
      $region60: #{wav2vec2_classifier_forward.5} parent=11 // pred_fallthru
        _
      // Predicated region
      $region61: #{wav2vec2_classifier_forward.5} parent=11 // pred_check
        %p462 = pneg %p322
      $region62: #{wav2vec2_classifier_forward.5} parent=11 // pred_check_branch
        %464 = sbr.rel (%p462) target = $region64
      $region63: #{wav2vec2_classifier_forward.5} parent=11 // pred_region
        _
      $region64: #{wav2vec2_classifier_forward.5} parent=11 // pred_fallthru
        _
      // Predicated region
      $region65: #{wav2vec2_classifier_forward.5} parent=11 // pred_check
        %p465 = pneg %p343
      $region66: #{wav2vec2_classifier_forward.5} parent=11 // pred_check_branch
        %467 = sbr.rel (%p465) target = $region68
      $region67: #{wav2vec2_classifier_forward.5} parent=11 // pred_region
        _
      $region68: #{wav2vec2_classifier_forward.5} parent=11 // pred_fallthru
        _
      // Predicated region
      $region69: #{wav2vec2_classifier_forward.5} parent=11 // pred_check
        %p468 = pneg %p364
      $region70: #{wav2vec2_classifier_forward.5} parent=11 // pred_check_branch
        %470 = sbr.rel (%p468) target = $region72
      $region71: #{wav2vec2_classifier_forward.5} parent=11 // pred_region
        _
      $region72: #{wav2vec2_classifier_forward.5} parent=11 // pred_fallthru
        _
      // Predicated region
      $region73: #{wav2vec2_classifier_forward.5} parent=11 // pred_check
        %p471 = pneg %p385
      $region74: #{wav2vec2_classifier_forward.5} parent=11 // pred_check_branch
        %473 = sbr.rel (%p471) target = $region76
      $region75: #{wav2vec2_classifier_forward.5} parent=11 // pred_region
        _
      $region76: #{wav2vec2_classifier_forward.5} parent=11 // pred_fallthru
        _
    $region12: #{wav2vec2_classifier_forward.5} parent=5 // pred_fallthru
      _
    %p474 = scmp.lt.s32.totalorder %s23, 2
    // Predicated region
    $region77: #{wav2vec2_classifier_forward.5} parent=5 // pred_check
      %p475 = pneg %p474
    $region78: #{wav2vec2_classifier_forward.5} parent=5 // pred_check_branch
      %477 = sbr.rel (%p475) target = $region80
    $region79: #{wav2vec2_classifier_forward.5} parent=5 // pred_region
      // Predicated region
      $region81: #{wav2vec2_classifier_forward.5} parent=79 // pred_check
        %p478 = pneg %p43
      $region82: #{wav2vec2_classifier_forward.5} parent=79 // pred_check_branch
        %480 = sbr.rel (%p478) target = $region84
      $region83: #{wav2vec2_classifier_forward.5} parent=79 // pred_region
        %p481 = scmp.lt.s32.totalorder %s23, 1
        %s482 = scalar_select %p481, %s23, 1
        %s483 = smul.addr %s482, 8
        %s484 = scalar_lea.vmem %s0, %s483
      $region84: #{wav2vec2_classifier_forward.5} parent=79 // pred_fallthru
        _
    $region80: #{wav2vec2_classifier_forward.5} parent=5 // pred_fallthru
      _
    %p485 = scmp.le.s32.totalorder 1, %s23
    %p486 = scmp.lt.s32.totalorder %s23, 3
    %p487 = pnand %p485, %p486
    %p488 = pneg %p487
    // Predicated region
    $region85: #{wav2vec2_classifier_forward.5} parent=5 // pred_check
      _
    $region86: #{wav2vec2_classifier_forward.5} parent=5 // pred_check_branch
      %490 = sbr.rel (%p487) target = $region88
    $region87: #{wav2vec2_classifier_forward.5} parent=5 // pred_region
      %s491 = ssub.s32 %s23, 1
      %p492 = scmp.lt.s32.totalorder %s28, 1
      %s493 = scalar_select %p492, %s28, 1
      %s494 = smul.addr %s493, 8
      %s495 = scalar_lea.vmem %s0, %s494
      %p496 = pneg %p49
      %p497 = pneg %p46
      %p498 = pneg %p70
      %p499 = pneg %p67
      %p500 = pneg %p91
      %p501 = pneg %p88
      %p502 = pneg %p112
      %p503 = pneg %p109
      %p504 = pneg %p133
      %p505 = pneg %p130
      %p506 = pneg %p154
      %p507 = pneg %p151
      %p508 = pneg %p175
      %p509 = pneg %p172
      %p510 = pneg %p196
      %p511 = pneg %p193
      %p512 = pneg %p217
      %p513 = pneg %p214
      %p514 = pneg %p238
      %p515 = pneg %p235
      %p516 = pneg %p259
      %p517 = pneg %p256
      %p518 = pneg %p280
      %p519 = pneg %p277
      %p520 = pneg %p301
      %p521 = pneg %p298
      %p522 = pneg %p322
      %p523 = pneg %p319
      %p524 = pneg %p343
      %p525 = pneg %p340
      %p526 = pneg %p364
      %p527 = pneg %p361
      %p528 = pneg %p385
      %p529 = pneg %p382
      %p530 = pneg %p411
      %p531 = pneg %p408
      %p532 = scmp.lt.s32.totalorder %s28, 1
      %s533 = scalar_select %p532, %s28, 1
      %s534 = smul.addr %s533, 8
      %s535 = scalar_lea.vmem %s17, %s534
      %p536 = scmp.lt.s32.totalorder %s28, 1
      %s537 = scalar_select %p536, %s28, 1
      %s538 = smul.addr %s537, 8
      %s539 = scalar_lea.vmem %s0, %s538
      %p540 = scmp.lt.s32.totalorder %s28, 1
      %s541 = scalar_select %p540, %s28, 1
      %s542 = smul.addr %s541, 8
      %s543 = scalar_lea.vmem %s17, %s542
      %v545 = vld [vmem:[%s539] sm:$0xff]
      %v546 = vld [vmem:[%s1] sm:$0xff]
      %v547 = vld [vmem:[%s1 + $0x8] sm:$0xf]
      %v548 = vld [vmem:[%s1 + $0xc] sm:$0xff]
      %v549 = vld [vmem:[%s1 + $0x14] sm:$0xf]
      %v550 = vld [vmem:[%s1 + $0x18] sm:$0xff]
      %v551 = vld [vmem:[%s1 + $0x20] sm:$0xf]
      %v552 = vld [vmem:[%s1 + $0x24] sm:$0xff]
      %v553 = vld [vmem:[%s1 + $0x2c] sm:$0xf]
      %v554 = vld [vmem:[%s1 + $0x30] sm:$0xff]
      %v555 = vld [vmem:[%s1 + $0x38] sm:$0xf]
      %v556 = vld [vmem:[%s1 + $0x3c] sm:$0xff]
      %v557 = vld [vmem:[%s1 + $0x44] sm:$0xf]
      %v558 = vld [vmem:[%s1 + $0x48] sm:$0xff]
      %v559 = vld [vmem:[%s1 + $0x50] sm:$0xf]
      %v560 = vld [vmem:[%s1 + $0x54] sm:$0xff]
      %v561 = vld [vmem:[%s1 + $0x5c] sm:$0xf]
      %v562 = vld [vmem:[%s1 + $0x60] sm:$0xff]
      %v563 = vld [vmem:[%s1 + $0x68] sm:$0xf]
      %v564 = vld [vmem:[%s1 + $0x6c] sm:$0xff]
      %v565 = vld [vmem:[%s1 + $0x74] sm:$0xf]
      %v566 = vld [vmem:[%s1 + $0x78] sm:$0xff]
      %v567 = vld [vmem:[%s1 + $0x80] sm:$0xf]
      %v568 = vld [vmem:[%s1 + $0x84] sm:$0xff]
      %v569 = vld [vmem:[%s1 + $0x8c] sm:$0xf]
      %v570 = vld [vmem:[%s1 + $0x90] sm:$0xff]
      %v571 = vld [vmem:[%s1 + $0x98] sm:$0xf]
      %v572 = vld [vmem:[%s1 + $0x9c] sm:$0xff]
      %v573 = vld [vmem:[%s1 + $0xa4] sm:$0xf]
      %v574 = vld [vmem:[%s1 + $0xa8] sm:$0xff]
      %v575 = vld [vmem:[%s1 + $0xb0] sm:$0xf]
      %v576 = vld [vmem:[%s1 + $0xb4] sm:$0xff]
      %v577 = vld [vmem:[%s1 + $0xbc] sm:$0xf]
      %v578 = vpack.c.bf16 %v545, %v545
      %v579 = vld [vmem:[%s2] sm:$0x7]
      %v581 = vlaneseq
      %v582 = vshrl.u32 %v581, 7
      %v583 = vsub.s32 0, %v582
      %v584 = vrot.slane %v579, %v583
      %v585 = vlaneseq
      %v586 = vshrl.u32 %v585, 7
      %v587 = vsub.s32 1, %v586
      %v588 = vrot.slane %v579, %v587
      %v589 = vlaneseq
      %v590 = vshrl.u32 %v589, 7
      %v591 = vsub.s32 2, %v590
      %v592 = vrot.slane %v579, %v591
      %v628 = vunpack.c.l.b16 %v546
      %v629 = vunpack.c.h.b16 %v546
      %v630 = vunpack.c.l.b16 %v547
      %v631 = vunpack.c.l.b16 %v548
      %v632 = vunpack.c.h.b16 %v548
      %v633 = vunpack.c.l.b16 %v549
      %v634 = vunpack.c.l.b16 %v550
      %v635 = vunpack.c.h.b16 %v550
      %v636 = vunpack.c.l.b16 %v551
      %v637 = vunpack.c.l.b16 %v552
      %v638 = vunpack.c.h.b16 %v552
      %v639 = vunpack.c.l.b16 %v553
      %v640 = vunpack.c.l.b16 %v554
      %v641 = vunpack.c.h.b16 %v554
      %v642 = vunpack.c.l.b16 %v555
      %v643 = vunpack.c.l.b16 %v556
      %v644 = vunpack.c.h.b16 %v556
      %v645 = vunpack.c.l.b16 %v557
      %v646 = vunpack.c.l.b16 %v558
      %v647 = vunpack.c.h.b16 %v558
      %v648 = vunpack.c.l.b16 %v559
      %v649 = vunpack.c.l.b16 %v560
      %v650 = vunpack.c.h.b16 %v560
      %v651 = vunpack.c.l.b16 %v561
      %v652 = vunpack.c.l.b16 %v562
      %v653 = vunpack.c.h.b16 %v562
      %v654 = vunpack.c.l.b16 %v563
      %v655 = vunpack.c.l.b16 %v564
      %v656 = vunpack.c.h.b16 %v564
      %v657 = vunpack.c.l.b16 %v565
      %v658 = vunpack.c.l.b16 %v566
      %v659 = vunpack.c.h.b16 %v566
      %v660 = vunpack.c.l.b16 %v567
      %v661 = vunpack.c.l.b16 %v568
      %v662 = vunpack.c.h.b16 %v568
      %v663 = vunpack.c.l.b16 %v569
      %v664 = vunpack.c.l.b16 %v570
      %v665 = vunpack.c.h.b16 %v570
      %v666 = vunpack.c.l.b16 %v571
      %v667 = vunpack.c.l.b16 %v572
      %v668 = vunpack.c.h.b16 %v572
      %v669 = vunpack.c.l.b16 %v573
      %v670 = vunpack.c.l.b16 %v574
      %v671 = vunpack.c.h.b16 %v574
      %v672 = vunpack.c.l.b16 %v575
      %v673 = vunpack.c.l.b16 %v576
      %v674 = vunpack.c.h.b16 %v576
      %v675 = vunpack.c.l.b16 %v577
      %v676 = vpack.c.b16 %v631, %v628
      %v677 = vpack.c.b16 %v632, %v629
      %v678 = vpack.c.b16 %v633, %v630
      %v679 = vpack.c.b16 %v637, %v634
      %v680 = vpack.c.b16 %v638, %v635
      %v681 = vpack.c.b16 %v639, %v636
      %v682 = vpack.c.b16 %v643, %v640
      %v683 = vpack.c.b16 %v644, %v641
      %v684 = vpack.c.b16 %v645, %v642
      %v685 = vpack.c.b16 %v649, %v646
      %v686 = vpack.c.b16 %v650, %v647
      %v687 = vpack.c.b16 %v651, %v648
      %v688 = vpack.c.b16 %v655, %v652
      %v689 = vpack.c.b16 %v656, %v653
      %v690 = vpack.c.b16 %v657, %v654
      %v691 = vpack.c.b16 %v661, %v658
      %v692 = vpack.c.b16 %v662, %v659
      %v693 = vpack.c.b16 %v663, %v660
      %v694 = vpack.c.b16 %v667, %v664
      %v695 = vpack.c.b16 %v668, %v665
      %v696 = vpack.c.b16 %v669, %v666
      %v697 = vpack.c.b16 %v673, %v670
      %v698 = vpack.c.b16 %v674, %v671
      %v699 = vpack.c.b16 %v675, %v672
      %724 = vmatprep.subr.bf16.mxu0 %v677
      %725 = vmatpush1.bf16.msra.mxu0 %v676
      %726 = vmatprep.subr.bf16.mxu0 %v680
      %727 = vmatpush1.bf16.msra.mxu0 %v679
      %728 = vmatprep.subr.bf16.mxu0 %v683
      %729 = vmatpush1.bf16.msra.mxu0 %v682
      %730 = vmatprep.subr.bf16.mxu0 %v686
      %731 = vmatpush1.bf16.msra.mxu0 %v685
      %732 = vmatprep.subr.bf16.mxu0 %v689
      %733 = vmatpush1.bf16.msra.mxu0 %v688
      %734 = vmatprep.subr.bf16.mxu0 %v692
      %735 = vmatpush1.bf16.msra.mxu0 %v691
      %736 = vmatprep.subr.bf16.mxu0 %v695
      %737 = vmatpush1.bf16.msra.mxu0 %v694
      %738 = vmatprep.subr.bf16.mxu0 %v698
      %739 = vmatpush1.bf16.msra.mxu0 %v697
      %740 = vmatprep.subr.bf16.mxu0 0
      %741 = vmatpush1.bf16.msra.mxu0 0
      %742 = vmatprep.subr.bf16.mxu0 0
      %743 = vmatpush1.bf16.msra.mxu0 0
      %744 = vmatprep.subr.bf16.mxu0 0
      %745 = vmatpush1.bf16.msra.mxu0 0
      %746 = vmatprep.subr.bf16.mxu0 0
      %747 = vmatpush1.bf16.msra.mxu0 0
      %748 = vmatprep.subr.bf16.mxu0 0
      %749 = vmatpush1.bf16.msra.mxu0 0
      %750 = vmatprep.subr.bf16.mxu0 0
      %751 = vmatpush1.bf16.msra.mxu0 0
      %752 = vmatprep.subr.bf16.mxu0 0
      %753 = vmatpush1.bf16.msra.mxu0 0
      %754 = vmatprep.subr.bf16.mxu0 0
      %755 = vmatpush1.bf16.msra.mxu0 0
      %756 = vmatprep.mubr.bf16.mxu0 0
      %757 = vmatmul.mubr.bf16.gmra.mrb[0].mxu0 %v578
      %v758 = vpop.f32.mrb[0].mxu0
      %v759 = vadd.f32 %v584, %v758
      %v760 = vpop.f32.mrb[0].mxu0
      %v761 = vadd.f32 %v588, %v760
      %v762 = vpop.f32.mrb[0].mxu0
      %v763 = vpop.f32.mrb[0].mxu0
      %764 = vdwg.mxu0
      %765 = vmatprep.subr.bf16.mxu0 0
      %766 = vmatpush1.bf16.msra.mxu0 %v678
      %767 = vmatprep.subr.bf16.mxu0 0
      %768 = vmatpush1.bf16.msra.mxu0 %v681
      %769 = vmatprep.subr.bf16.mxu0 0
      %770 = vmatpush1.bf16.msra.mxu0 %v684
      %771 = vmatprep.subr.bf16.mxu0 0
      %772 = vmatpush1.bf16.msra.mxu0 %v687
      %773 = vmatprep.subr.bf16.mxu0 0
      %774 = vmatpush1.bf16.msra.mxu0 %v690
      %775 = vmatprep.subr.bf16.mxu0 0
      %776 = vmatpush1.bf16.msra.mxu0 %v693
      %777 = vmatprep.subr.bf16.mxu0 0
      %778 = vmatpush1.bf16.msra.mxu0 %v696
      %779 = vmatprep.subr.bf16.mxu0 0
      %780 = vmatpush1.bf16.msra.mxu0 %v699
      %781 = vmatprep.subr.bf16.mxu0 0
      %782 = vmatpush1.bf16.msra.mxu0 0
      %783 = vmatprep.subr.bf16.mxu0 0
      %784 = vmatpush1.bf16.msra.mxu0 0
      %785 = vmatprep.subr.bf16.mxu0 0
      %786 = vmatpush1.bf16.msra.mxu0 0
      %787 = vmatprep.subr.bf16.mxu0 0
      %788 = vmatpush1.bf16.msra.mxu0 0
      %789 = vmatprep.subr.bf16.mxu0 0
      %790 = vmatpush1.bf16.msra.mxu0 0
      %791 = vmatprep.subr.bf16.mxu0 0
      %792 = vmatpush1.bf16.msra.mxu0 0
      %793 = vmatprep.subr.bf16.mxu0 0
      %794 = vmatpush1.bf16.msra.mxu0 0
      %795 = vmatprep.subr.bf16.mxu0 0
      %796 = vmatpush1.bf16.msra.mxu0 0
      %797 = vmatprep.mubr.bf16.mxu0 0
      %798 = vmatmul.mubr.bf16.gmra.mrb[0].mxu0 %v578
      %v799 = vpop.f32.mrb[0].mxu0
      %v800 = vadd.f32 %v592, %v799
      %v801 = vpop.f32.mrb[0].mxu0
      %v802 = vpop.f32.mrb[0].mxu0
      %v803 = vpop.f32.mrb[0].mxu0
      %804 = vdwg.mxu0
      %v805 = vpack.c.bf16 %v759, %v759
      %v806 = vpack.c.bf16 %v761, %v761
      %vm807 = vcmask 261120
      %v809 = vsel %vm807, %v805, 0
      %v812 = vsel %vm807, %v806, 0
      %814 = vmatprep.subr.bf16.mxu0 0
      %815 = vmatpush1.bf16.xpose.msra.mxu0 %v812
      %816 = vmatprep.subr.bf16.mxu0 0
      %817 = vmatpush1.bf16.xpose.msra.mxu0 0
      %818 = vmatprep.subr.bf16.mxu0 0
      %819 = vmatpush1.bf16.xpose.msra.mxu0 0
      %820 = vmatprep.subr.bf16.mxu0 0
      %821 = vmatpush1.bf16.xpose.msra.mxu0 0
      %822 = vmatprep.subr.bf16.mxu0 0
      %823 = vmatpush1.bf16.xpose.msra.mxu0 0
      %824 = vmatprep.subr.bf16.mxu0 0
      %825 = vmatpush1.bf16.xpose.msra.mxu0 0
      %826 = vmatprep.subr.bf16.mxu0 0
      %827 = vmatpush1.bf16.xpose.msra.mxu0 0
      %828 = vmatprep.subr.bf16.mxu0 0
      %829 = vmatpush1.bf16.xpose.msra.mxu0 0
      %830 = vmatprep.subr.bf16.mxu0 0
      %831 = vmatpush1.bf16.xpose.msra.mxu0 0
      %832 = vmatprep.subr.bf16.mxu0 0
      %833 = vmatpush1.bf16.xpose.msra.mxu0 0
      %834 = vmatprep.subr.bf16.mxu0 0
      %835 = vmatpush1.bf16.xpose.msra.mxu0 0
      %836 = vmatprep.subr.bf16.mxu0 0
      %837 = vmatpush1.bf16.xpose.msra.mxu0 0
      %838 = vmatprep.subr.bf16.mxu0 0
      %839 = vmatpush1.bf16.xpose.msra.mxu0 0
      %840 = vmatprep.subr.bf16.mxu0 0
      %841 = vmatpush1.bf16.xpose.msra.mxu0 0
      %842 = vmatprep.subr.bf16.mxu0 0
      %843 = vmatpush1.bf16.xpose.msra.mxu0 0
      %844 = vmatprep.subr.bf16.mxu0 0
      %845 = vmatpush1.bf16.xpose.msra.mxu0 0
      %846 = vmatprep.mubr.bf16.mxu0 0
      %847 = vmatmul.mubr.bf16.gmra.mrb[0].mxu0 %v809
      %v848 = vpop.f32.mrb[0].mxu0
      %v849 = vadd.f32 0.0, %v848
      %v850 = vpop.f32.mrb[0].mxu0
      %v851 = vpop.f32.mrb[0].mxu0
      %v852 = vpop.f32.mrb[0].mxu0
      %853 = vdwg.mxu0
      %v854 = vmul.f32 %v849, 0.17677669
      %vm855 = vcmask 64512
      %v856 = vsel %vm855, %v854, -inf
      %857 = vmax.xlane.f32.xlu0 %v856
      %v858 = vpop.xlane.xlu0 %857
      %v859 = vsub.f32 %v854, %v858
      %v860 = vmul.f32 %v859, 1.442695
      %v861 = vpow.pop %v860
      %v862 = vsel %vm855, %v861, 0.0
      %863 = vadd.xlane.f32.xlu0 %v862
      %v864 = vpop.xlane.xlu0 %863
      %v865 = vrcp.pop %v864
      %v866 = vmul.f32 %v861, %v865
      %v867 = vpack.c.bf16 %v866, %v866
      %v868 = vpack.c.bf16 %v800, %v800
      %v870 = vsel %vm855, %v867, 0
      %vm872 = vcmask 1043456
      %v874 = vsel %vm872, %v868, 0
      %876 = vmatprep.subr.bf16.mxu0 0
      %877 = vmatpush1.bf16.msra.mxu0 %v874
      %878 = vmatprep.subr.bf16.mxu0 0
      %879 = vmatpush1.bf16.msra.mxu0 0
      %880 = vmatprep.subr.bf16.mxu0 0
      %881 = vmatpush1.bf16.msra.mxu0 0
      %882 = vmatprep.subr.bf16.mxu0 0
      %883 = vmatpush1.bf16.msra.mxu0 0
      %884 = vmatprep.subr.bf16.mxu0 0
      %885 = vmatpush1.bf16.msra.mxu0 0
      %886 = vmatprep.subr.bf16.mxu0 0
      %887 = vmatpush1.bf16.msra.mxu0 0
      %888 = vmatprep.subr.bf16.mxu0 0
      %889 = vmatpush1.bf16.msra.mxu0 0
      %890 = vmatprep.subr.bf16.mxu0 0
      %891 = vmatpush1.bf16.msra.mxu0 0
      %892 = vmatprep.subr.bf16.mxu0 0
      %893 = vmatpush1.bf16.msra.mxu0 0
      %894 = vmatprep.subr.bf16.mxu0 0
      %895 = vmatpush1.bf16.msra.mxu0 0
      %896 = vmatprep.subr.bf16.mxu0 0
      %897 = vmatpush1.bf16.msra.mxu0 0
      %898 = vmatprep.subr.bf16.mxu0 0
      %899 = vmatpush1.bf16.msra.mxu0 0
      %900 = vmatprep.subr.bf16.mxu0 0
      %901 = vmatpush1.bf16.msra.mxu0 0
      %902 = vmatprep.subr.bf16.mxu0 0
      %903 = vmatpush1.bf16.msra.mxu0 0
      %904 = vmatprep.subr.bf16.mxu0 0
      %905 = vmatpush1.bf16.msra.mxu0 0
      %906 = vmatprep.subr.bf16.mxu0 0
      %907 = vmatpush1.bf16.msra.mxu0 0
      %908 = vmatprep.mubr.bf16.mxu0 0
      %909 = vmatmul.mubr.bf16.gmra.mrb[0].mxu0 %v870
      %v910 = vpop.f32.mrb[0].mxu0
      %v911 = vadd.f32 0.0, %v910
      %v912 = vpop.f32.mrb[0].mxu0
      %v913 = vpop.f32.mrb[0].mxu0
      %v914 = vpop.f32.mrb[0].mxu0
      %915 = vdwg.mxu0
      %917 = vrot.lane.b32.xlu0 %v805, 96
      %v918 = vpop.permute.xlu0 %917
      %920 = vrot.lane.b32.xlu0 %v806, 96
      %v921 = vpop.permute.xlu0 %920
      %v923 = vsel %vm807, %v918, 0
      %v926 = vsel %vm807, %v921, 0
      %928 = vmatprep.subr.bf16.mxu0 0
      %929 = vmatpush1.bf16.xpose.msra.mxu0 %v926
      %930 = vmatprep.subr.bf16.mxu0 0
      %931 = vmatpush1.bf16.xpose.msra.mxu0 0
      %932 = vmatprep.subr.bf16.mxu0 0
      %933 = vmatpush1.bf16.xpose.msra.mxu0 0
      %934 = vmatprep.subr.bf16.mxu0 0
      %935 = vmatpush1.bf16.xpose.msra.mxu0 0
      %936 = vmatprep.subr.bf16.mxu0 0
      %937 = vmatpush1.bf16.xpose.msra.mxu0 0
      %938 = vmatprep.subr.bf16.mxu0 0
      %939 = vmatpush1.bf16.xpose.msra.mxu0 0
      %940 = vmatprep.subr.bf16.mxu0 0
      %941 = vmatpush1.bf16.xpose.msra.mxu0 0
      %942 = vmatprep.subr.bf16.mxu0 0
      %943 = vmatpush1.bf16.xpose.msra.mxu0 0
      %944 = vmatprep.subr.bf16.mxu0 0
      %945 = vmatpush1.bf16.xpose.msra.mxu0 0
      %946 = vmatprep.subr.bf16.mxu0 0
      %947 = vmatpush1.bf16.xpose.msra.mxu0 0
      %948 = vmatprep.subr.bf16.mxu0 0
      %949 = vmatpush1.bf16.xpose.msra.mxu0 0
      %950 = vmatprep.subr.bf16.mxu0 0
      %951 = vmatpush1.bf16.xpose.msra.mxu0 0
      %952 = vmatprep.subr.bf16.mxu0 0
      %953 = vmatpush1.bf16.xpose.msra.mxu0 0
      %954 = vmatprep.subr.bf16.mxu0 0
      %955 = vmatpush1.bf16.xpose.msra.mxu0 0
      %956 = vmatprep.subr.bf16.mxu0 0
      %957 = vmatpush1.bf16.xpose.msra.mxu0 0
      %958 = vmatprep.subr.bf16.mxu0 0
      %959 = vmatpush1.bf16.xpose.msra.mxu0 0
      %960 = vmatprep.mubr.bf16.mxu0 0
      %961 = vmatmul.mubr.bf16.gmra.mrb[0].mxu0 %v923
      %v962 = vpop.f32.mrb[0].mxu0
      %v963 = vadd.f32 0.0, %v962
      %v964 = vpop.f32.mrb[0].mxu0
      %v965 = vpop.f32.mrb[0].mxu0
      %v966 = vpop.f32.mrb[0].mxu0
      %967 = vdwg.mxu0
      %v968 = vmul.f32 %v963, 0.17677669
      %v969 = vsel %vm855, %v968, -inf
      %970 = vmax.xlane.f32.xlu0 %v969
      %v971 = vpop.xlane.xlu0 %970
      %v972 = vsub.f32 %v968, %v971
      %v973 = vmul.f32 %v972, 1.442695
      %v974 = vpow.pop %v973
      %v975 = vsel %vm855, %v974, 0.0
      %976 = vadd.xlane.f32.xlu0 %v975
      %v977 = vpop.xlane.xlu0 %976
      %v978 = vrcp.pop %v977
      %v979 = vmul.f32 %v974, %v978
      %v980 = vpack.c.bf16 %v979, %v979
      %982 = vrot.lane.b32.xlu0 %v868, 96
      %v983 = vpop.permute.xlu0 %982
      %v985 = vsel %vm855, %v980, 0
      %v988 = vsel %vm872, %v983, 0
      %990 = vmatprep.subr.bf16.mxu0 0
      %991 = vmatpush1.bf16.msra.mxu0 %v988
      %992 = vmatprep.subr.bf16.mxu0 0
      %993 = vmatpush1.bf16.msra.mxu0 0
      %994 = vmatprep.subr.bf16.mxu0 0
      %995 = vmatpush1.bf16.msra.mxu0 0
      %996 = vmatprep.subr.bf16.mxu0 0
      %997 = vmatpush1.bf16.msra.mxu0 0
      %998 = vmatprep.subr.bf16.mxu0 0
      %999 = vmatpush1.bf16.msra.mxu0 0
      %1000 = vmatprep.subr.bf16.mxu0 0
      %1001 = vmatpush1.bf16.msra.mxu0 0
      %1002 = vmatprep.subr.bf16.mxu0 0
      %1003 = vmatpush1.bf16.msra.mxu0 0
      %1004 = vmatprep.subr.bf16.mxu0 0
      %1005 = vmatpush1.bf16.msra.mxu0 0
      %1006 = vmatprep.subr.bf16.mxu0 0
      %1007 = vmatpush1.bf16.msra.mxu0 0
      %1008 = vmatprep.subr.bf16.mxu0 0
      %1009 = vmatpush1.bf16.msra.mxu0 0
      %1010 = vmatprep.subr.bf16.mxu0 0
      %1011 = vmatpush1.bf16.msra.mxu0 0
      %1012 = vmatprep.subr.bf16.mxu0 0
      %1013 = vmatpush1.bf16.msra.mxu0 0
      %1014 = vmatprep.subr.bf16.mxu0 0
      %1015 = vmatpush1.bf16.msra.mxu0 0
      %1016 = vmatprep.subr.bf16.mxu0 0
      %1017 = vmatpush1.bf16.msra.mxu0 0
      %1018 = vmatprep.subr.bf16.mxu0 0
      %1019 = vmatpush1.bf16.msra.mxu0 0
      %1020 = vmatprep.subr.bf16.mxu0 0
      %1021 = vmatpush1.bf16.msra.mxu0 0
      %1022 = vmatprep.mubr.bf16.mxu0 0
      %1023 = vmatmul.mubr.bf16.gmra.mrb[0].mxu0 %v985
      %v1024 = vpop.f32.mrb[0].mxu0
      %v1025 = vadd.f32 0.0, %v1024
      %v1026 = vpop.f32.mrb[0].mxu0
      %v1027 = vpop.f32.mrb[0].mxu0
      %v1028 = vpop.f32.mrb[0].mxu0
      %1029 = vdwg.mxu0
      %1030 = vrot.lane.b32.xlu0 %v805, 64
      %v1031 = vpop.permute.xlu0 %1030
      %1032 = vrot.lane.b32.xlu0 %v806, 64
      %v1033 = vpop.permute.xlu0 %1032
      %v1035 = vsel %vm807, %v1031, 0
      %v1038 = vsel %vm807, %v1033, 0
      %1040 = vmatprep.subr.bf16.mxu0 0
      %1041 = vmatpush1.bf16.xpose.msra.mxu0 %v1038
      %1042 = vmatprep.subr.bf16.mxu0 0
      %1043 = vmatpush1.bf16.xpose.msra.mxu0 0
      %1044 = vmatprep.subr.bf16.mxu0 0
      %1045 = vmatpush1.bf16.xpose.msra.mxu0 0
      %1046 = vmatprep.subr.bf16.mxu0 0
      %1047 = vmatpush1.bf16.xpose.msra.mxu0 0
      %1048 = vmatprep.subr.bf16.mxu0 0
      %1049 = vmatpush1.bf16.xpose.msra.mxu0 0
      %1050 = vmatprep.subr.bf16.mxu0 0
      %1051 = vmatpush1.bf16.xpose.msra.mxu0 0
      %1052 = vmatprep.subr.bf16.mxu0 0
      %1053 = vmatpush1.bf16.xpose.msra.mxu0 0
      %1054 = vmatprep.subr.bf16.mxu0 0
      %1055 = vmatpush1.bf16.xpose.msra.mxu0 0
      %1056 = vmatprep.subr.bf16.mxu0 0
      %1057 = vmatpush1.bf16.xpose.msra.mxu0 0
      %1058 = vmatprep.subr.bf16.mxu0 0
      %1059 = vmatpush1.bf16.xpose.msra.mxu0 0
      %1060 = vmatprep.subr.bf16.mxu0 0
      %1061 = vmatpush1.bf16.xpose.msra.mxu0 0
      %1062 = vmatprep.subr.bf16.mxu0 0
      %1063 = vmatpush1.bf16.xpose.msra.mxu0 0
      %1064 = vmatprep.subr.bf16.mxu0 0
      %1065 = vmatpush1.bf16.xpose.msra.mxu0 0
      %1066 = vmatprep.subr.bf16.mxu0 0
      %1067 = vmatpush1.bf16.xpose.msra.mxu0 0
      %1068 = vmatprep.subr.bf16.mxu0 0
      %1069 = vmatpush1.bf16.xpose.msra.mxu0 0
      %1070 = vmatprep.subr.bf16.mxu0 0
      %1071 = vmatpush1.bf16.xpose.msra.mxu0 0
      %1072 = vmatprep.mubr.bf16.mxu0 0
      %1073 = vmatmul.mubr.bf16.gmra.mrb[0].mxu0 %v1035
      %v1074 = vpop.f32.mrb[0].mxu0
      %v1075 = vadd.f32 0.0, %v1074
      %v1076 = vpop.f32.mrb[0].mxu0
      %v1077 = vpop.f32.mrb[0].mxu0
      %v1078 = vpop.f32.mrb[0].mxu0
      %1079 = vdwg.mxu0
      %v1080 = vmul.f32 %v1075, 0.17677669
      %v1081 = vsel %vm855, %v1080, -inf
      %1082 = vmax.xlane.f32.xlu0 %v1081
      %v1083 = vpop.xlane.xlu0 %1082
      %v1084 = vsub.f32 %v1080, %v1083
      %v1085 = vmul.f32 %v1084, 1.442695
      %v1086 = vpow.pop %v1085
      %v1087 = vsel %vm855, %v1086, 0.0
      %1088 = vadd.xlane.f32.xlu0 %v1087
      %v1089 = vpop.xlane.xlu0 %1088
      %v1090 = vrcp.pop %v1089
      %v1091 = vmul.f32 %v1086, %v1090
      %v1092 = vpack.c.bf16 %v1091, %v1091
      %1093 = vrot.lane.b32.xlu0 %v868, 64
      %v1094 = vpop.permute.xlu0 %1093
      %v1096 = vsel %vm855, %v1092, 0
      %v1099 = vsel %vm872, %v1094, 0
      %1101 = vmatprep.subr.bf16.mxu0 0
      %1102 = vmatpush1.bf16.msra.mxu0 %v1099
      %1103 = vmatprep.subr.bf16.mxu0 0
      %1104 = vmatpush1.bf16.msra.mxu0 0
      %1105 = vmatprep.subr.bf16.mxu0 0
      %1106 = vmatpush1.bf16.msra.mxu0 0
      %1107 = vmatprep.subr.bf16.mxu0 0
      %1108 = vmatpush1.bf16.msra.mxu0 0
      %1109 = vmatprep.subr.bf16.mxu0 0
      %1110 = vmatpush1.bf16.msra.mxu0 0
      %1111 = vmatprep.subr.bf16.mxu0 0
      %1112 = vmatpush1.bf16.msra.mxu0 0
      %1113 = vmatprep.subr.bf16.mxu0 0
      %1114 = vmatpush1.bf16.msra.mxu0 0
      %1115 = vmatprep.subr.bf16.mxu0 0
      %1116 = vmatpush1.bf16.msra.mxu0 0
      %1117 = vmatprep.subr.bf16.mxu0 0
      %1118 = vmatpush1.bf16.msra.mxu0 0
      %1119 = vmatprep.subr.bf16.mxu0 0
      %1120 = vmatpush1.bf16.msra.mxu0 0
      %1121 = vmatprep.subr.bf16.mxu0 0
      %1122 = vmatpush1.bf16.msra.mxu0 0
      %1123 = vmatprep.subr.bf16.mxu0 0
      %1124 = vmatpush1.bf16.msra.mxu0 0
      %1125 = vmatprep.subr.bf16.mxu0 0
      %1126 = vmatpush1.bf16.msra.mxu0 0
      %1127 = vmatprep.subr.bf16.mxu0 0
      %1128 = vmatpush1.bf16.msra.mxu0 0
      %1129 = vmatprep.subr.bf16.mxu0 0
      %1130 = vmatpush1.bf16.msra.mxu0 0
      %1131 = vmatprep.subr.bf16.mxu0 0
      %1132 = vmatpush1.bf16.msra.mxu0 0
      %1133 = vmatprep.mubr.bf16.mxu0 0
      %1134 = vmatmul.mubr.bf16.gmra.mrb[0].mxu0 %v1096
      %v1135 = vpop.f32.mrb[0].mxu0
      %v1136 = vadd.f32 0.0, %v1135
      %v1137 = vpop.f32.mrb[0].mxu0
      %v1138 = vpop.f32.mrb[0].mxu0
      %v1139 = vpop.f32.mrb[0].mxu0
      %1140 = vdwg.mxu0
      %1141 = vrot.lane.b32.xlu0 %v805, 32
      %v1142 = vpop.permute.xlu0 %1141
      %1143 = vrot.lane.b32.xlu0 %v806, 32
      %v1144 = vpop.permute.xlu0 %1143
      %v1146 = vsel %vm807, %v1142, 0
      %v1149 = vsel %vm807, %v1144, 0
      %1151 = vmatprep.subr.bf16.mxu0 0
      %1152 = vmatpush1.bf16.xpose.msra.mxu0 %v1149
      %1153 = vmatprep.subr.bf16.mxu0 0
      %1154 = vmatpush1.bf16.xpose.msra.mxu0 0
      %1155 = vmatprep.subr.bf16.mxu0 0
      %1156 = vmatpush1.bf16.xpose.msra.mxu0 0
      %1157 = vmatprep.subr.bf16.mxu0 0
      %1158 = vmatpush1.bf16.xpose.msra.mxu0 0
      %1159 = vmatprep.subr.bf16.mxu0 0
      %1160 = vmatpush1.bf16.xpose.msra.mxu0 0
      %1161 = vmatprep.subr.bf16.mxu0 0
      %1162 = vmatpush1.bf16.xpose.msra.mxu0 0
      %1163 = vmatprep.subr.bf16.mxu0 0
      %1164 = vmatpush1.bf16.xpose.msra.mxu0 0
      %1165 = vmatprep.subr.bf16.mxu0 0
      %1166 = vmatpush1.bf16.xpose.msra.mxu0 0
      %1167 = vmatprep.subr.bf16.mxu0 0
      %1168 = vmatpush1.bf16.xpose.msra.mxu0 0
      %1169 = vmatprep.subr.bf16.mxu0 0
      %1170 = vmatpush1.bf16.xpose.msra.mxu0 0
      %1171 = vmatprep.subr.bf16.mxu0 0
      %1172 = vmatpush1.bf16.xpose.msra.mxu0 0
      %1173 = vmatprep.subr.bf16.mxu0 0
      %1174 = vmatpush1.bf16.xpose.msra.mxu0 0
      %1175 = vmatprep.subr.bf16.mxu0 0
      %1176 = vmatpush1.bf16.xpose.msra.mxu0 0
      %1177 = vmatprep.subr.bf16.mxu0 0
      %1178 = vmatpush1.bf16.xpose.msra.mxu0 0
      %1179 = vmatprep.subr.bf16.mxu0 0
      %1180 = vmatpush1.bf16.xpose.msra.mxu0 0
      %1181 = vmatprep.subr.bf16.mxu0 0
      %1182 = vmatpush1.bf16.xpose.msra.mxu0 0
      %1183 = vmatprep.mubr.bf16.mxu0 0
      %1184 = vmatmul.mubr.bf16.gmra.mrb[0].mxu0 %v1146
      %v1185 = vpop.f32.mrb[0].mxu0
      %v1186 = vadd.f32 0.0, %v1185
      %v1187 = vpop.f32.mrb[0].mxu0
      %v1188 = vpop.f32.mrb[0].mxu0
      %v1189 = vpop.f32.mrb[0].mxu0
      %1190 = vdwg.mxu0
      %v1191 = vmul.f32 %v1186, 0.17677669
      %v1192 = vsel %vm855, %v1191, -inf
      %1193 = vmax.xlane.f32.xlu0 %v1192
      %v1194 = vpop.xlane.xlu0 %1193
      %v1195 = vsub.f32 %v1191, %v1194
      %v1196 = vmul.f32 %v1195, 1.442695
      %v1197 = vpow.pop %v1196
      %v1198 = vsel %vm855, %v1197, 0.0
      %1199 = vadd.xlane.f32.xlu0 %v1198
      %v1200 = vpop.xlane.xlu0 %1199
      %v1201 = vrcp.pop %v1200
      %v1202 = vmul.f32 %v1197, %v1201
      %v1203 = vpack.c.bf16 %v1202, %v1202
      %1204 = vrot.lane.b32.xlu0 %v868, 32
      %v1205 = vpop.permute.xlu0 %1204
      %v1207 = vsel %vm855, %v1203, 0
      %v1210 = vsel %vm872, %v1205, 0
      %1212 = vmatprep.subr.bf16.mxu0 0
      %1213 = vmatpush1.bf16.msra.mxu0 %v1210
      %1214 = vmatprep.subr.bf16.mxu0 0
      %1215 = vmatpush1.bf16.msra.mxu0 0
      %1216 = vmatprep.subr.bf16.mxu0 0
      %1217 = vmatpush1.bf16.msra.mxu0 0
      %1218 = vmatprep.subr.bf16.mxu0 0
      %1219 = vmatpush1.bf16.msra.mxu0 0
      %1220 = vmatprep.subr.bf16.mxu0 0
      %1221 = vmatpush1.bf16.msra.mxu0 0
      %1222 = vmatprep.subr.bf16.mxu0 0
      %1223 = vmatpush1.bf16.msra.mxu0 0
      %1224 = vmatprep.subr.bf16.mxu0 0
      %1225 = vmatpush1.bf16.msra.mxu0 0
      %1226 = vmatprep.subr.bf16.mxu0 0
      %1227 = vmatpush1.bf16.msra.mxu0 0
      %1228 = vmatprep.subr.bf16.mxu0 0
      %1229 = vmatpush1.bf16.msra.mxu0 0
      %1230 = vmatprep.subr.bf16.mxu0 0
      %1231 = vmatpush1.bf16.msra.mxu0 0
      %1232 = vmatprep.subr.bf16.mxu0 0
      %1233 = vmatpush1.bf16.msra.mxu0 0
      %1234 = vmatprep.subr.bf16.mxu0 0
      %1235 = vmatpush1.bf16.msra.mxu0 0
      %1236 = vmatprep.subr.bf16.mxu0 0
      %1237 = vmatpush1.bf16.msra.mxu0 0
      %1238 = vmatprep.subr.bf16.mxu0 0
      %1239 = vmatpush1.bf16.msra.mxu0 0
      %1240 = vmatprep.subr.bf16.mxu0 0
      %1241 = vmatpush1.bf16.msra.mxu0 0
      %1242 = vmatprep.subr.bf16.mxu0 0
      %1243 = vmatpush1.bf16.msra.mxu0 0
      %1244 = vmatprep.mubr.bf16.mxu0 0
      %1245 = vmatmul.mubr.bf16.gmra.mrb[0].mxu0 %v1207
      %v1246 = vpop.f32.mrb[0].mxu0
      %v1247 = vadd.f32 0.0, %v1246
      %v1248 = vpop.f32.mrb[0].mxu0
      %v1249 = vpop.f32.mrb[0].mxu0
      %v1250 = vpop.f32.mrb[0].mxu0
      %1251 = vdwg.mxu0
      %1253 = vrot.lane.b32.xlu0 %v1025, 32
      %v1254 = vpop.permute.xlu0 %1253
      %1257 = vrot.lane.b32.xlu0 %v1136, 64
      %v1258 = vpop.permute.xlu0 %1257
      %1261 = vrot.lane.b32.xlu0 %v1247, 96
      %v1262 = vpop.permute.xlu0 %1261
      %v1264 = vsel %vm807, %v911, %v1254
      %vm1265 = vcmask 523264
      %v1266 = vsel %vm1265, %v1264, %v1258
      %vm1267 = vcmask 785408
      %v1268 = vsel %vm1267, %v1266, %v1262
      %v1269 = vld [vmem:[%s3] sm:$0xf]
      %v1270 = vld [vmem:[%s3 + $0x4] sm:$0xf]
      %v1271 = vld [vmem:[%s3 + $0x8] sm:$0xf]
      %v1272 = vld [vmem:[%s3 + $0xc] sm:$0xf]
      %v1273 = vld [vmem:[%s3 + $0x10] sm:$0xf]
      %v1274 = vld [vmem:[%s3 + $0x14] sm:$0xf]
      %v1275 = vld [vmem:[%s3 + $0x18] sm:$0xf]
      %v1276 = vld [vmem:[%s3 + $0x1c] sm:$0xf]
      %v1277 = vld [vmem:[%s3 + $0x20] sm:$0xf]
      %v1278 = vld [vmem:[%s3 + $0x24] sm:$0xf]
      %v1279 = vld [vmem:[%s3 + $0x28] sm:$0xf]
      %v1280 = vld [vmem:[%s3 + $0x2c] sm:$0xf]
      %v1281 = vld [vmem:[%s3 + $0x30] sm:$0xf]
      %v1282 = vld [vmem:[%s3 + $0x34] sm:$0xf]
      %v1283 = vld [vmem:[%s3 + $0x38] sm:$0xf]
      %v1284 = vld [vmem:[%s3 + $0x3c] sm:$0xf]
      %v1285 = vpack.c.bf16 %v1268, %v1268
      %v1286 = vld [vmem:[%s4] sm:$0x1]
      %v1288 = vlaneseq
      %v1289 = vshrl.u32 %v1288, 7
      %v1290 = vsub.s32 0, %v1289
      %v1291 = vrot.slane %v1286, %v1290
      %v1309 = vunpack.c.l.b16 %v1269
      %v1310 = vunpack.c.l.b16 %v1270
      %v1311 = vunpack.c.l.b16 %v1271
      %v1312 = vunpack.c.l.b16 %v1272
      %v1313 = vunpack.c.l.b16 %v1273
      %v1314 = vunpack.c.l.b16 %v1274
      %v1315 = vunpack.c.l.b16 %v1275
      %v1316 = vunpack.c.l.b16 %v1276
      %v1317 = vunpack.c.l.b16 %v1277
      %v1318 = vunpack.c.l.b16 %v1278
      %v1319 = vunpack.c.l.b16 %v1279
      %v1320 = vunpack.c.l.b16 %v1280
      %v1321 = vunpack.c.l.b16 %v1281
      %v1322 = vunpack.c.l.b16 %v1282
      %v1323 = vunpack.c.l.b16 %v1283
      %v1324 = vunpack.c.l.b16 %v1284
      %v1325 = vpack.c.b16 %v1310, %v1309
      %v1326 = vpack.c.b16 %v1312, %v1311
      %v1327 = vpack.c.b16 %v1314, %v1313
      %v1328 = vpack.c.b16 %v1316, %v1315
      %v1329 = vpack.c.b16 %v1318, %v1317
      %v1330 = vpack.c.b16 %v1320, %v1319
      %v1331 = vpack.c.b16 %v1322, %v1321
      %v1332 = vpack.c.b16 %v1324, %v1323
      %1341 = vmatprep.subr.bf16.mxu0 0
      %1342 = vmatpush1.bf16.msra.mxu0 %v1325
      %1343 = vmatprep.subr.bf16.mxu0 0
      %1344 = vmatpush1.bf16.msra.mxu0 %v1326
      %1345 = vmatprep.subr.bf16.mxu0 0
      %1346 = vmatpush1.bf16.msra.mxu0 %v1327
      %1347 = vmatprep.subr.bf16.mxu0 0
      %1348 = vmatpush1.bf16.msra.mxu0 %v1328
      %1349 = vmatprep.subr.bf16.mxu0 0
      %1350 = vmatpush1.bf16.msra.mxu0 %v1329
      %1351 = vmatprep.subr.bf16.mxu0 0
      %1352 = vmatpush1.bf16.msra.mxu0 %v1330
      %1353 = vmatprep.subr.bf16.mxu0 0
      %1354 = vmatpush1.bf16.msra.mxu0 %v1331
      %1355 = vmatprep.subr.bf16.mxu0 0
      %1356 = vmatpush1.bf16.msra.mxu0 %v1332
      %1357 = vmatprep.subr.bf16.mxu0 0
      %1358 = vmatpush1.bf16.msra.mxu0 0
      %1359 = vmatprep.subr.bf16.mxu0 0
      %1360 = vmatpush1.bf16.msra.mxu0 0
      %1361 = vmatprep.subr.bf16.mxu0 0
      %1362 = vmatpush1.bf16.msra.mxu0 0
      %1363 = vmatprep.subr.bf16.mxu0 0
      %1364 = vmatpush1.bf16.msra.mxu0 0
      %1365 = vmatprep.subr.bf16.mxu0 0
      %1366 = vmatpush1.bf16.msra.mxu0 0
      %1367 = vmatprep.subr.bf16.mxu0 0
      %1368 = vmatpush1.bf16.msra.mxu0 0
      %1369 = vmatprep.subr.bf16.mxu0 0
      %1370 = vmatpush1.bf16.msra.mxu0 0
      %1371 = vmatprep.subr.bf16.mxu0 0
      %1372 = vmatpush1.bf16.msra.mxu0 0
      %1373 = vmatprep.mubr.bf16.mxu0 0
      %1374 = vmatmul.mubr.bf16.gmra.mrb[0].mxu0 %v1285
      %v1375 = vpop.f32.mrb[0].mxu0
      %v1376 = vadd.f32 %v1291, %v1375
      %v1377 = vpop.f32.mrb[0].mxu0
      %v1378 = vpop.f32.mrb[0].mxu0
      %v1379 = vpop.f32.mrb[0].mxu0
      %1380 = vdwg.mxu0
      %v1381 = vadd.f32 %v545, %v1376
      %v1382 = vld [vmem:[%s5] sm:$0x1]
      %v1383 = vld [vmem:[%s6] sm:$0x1]
      %1384 = vadd.xlane.f32.xlu0 %v1381
      %v1385 = vpop.xlane.xlu0 %1384
      %v1386 = vrcp.pop 128.0
      %v1387 = vmul.f32 %v1385, %v1386
      %v1388 = vsub.f32 %v1381, %v1387
      %v1389 = vmul.f32 %v1388, %v1388
      %1390 = vadd.xlane.f32.xlu0 %v1389
      %v1391 = vpop.xlane.xlu0 %1390
      %v1392 = vmul.f32 %v1391, %v1386
      %v1393 = vadd.f32 %v1392, 1e-05
      %v1394 = vrsqrt.pop %v1393
      %v1395 = vmul.f32 %v1388, %v1394
      %v1397 = vlaneseq
      %v1398 = vshrl.u32 %v1397, 7
      %v1399 = vsub.s32 0, %v1398
      %v1400 = vrot.slane %v1382, %v1399
      %v1402 = vmul.f32 %v1395, %v1400
      %v1404 = vlaneseq
      %v1405 = vshrl.u32 %v1404, 7
      %v1406 = vsub.s32 0, %v1405
      %v1407 = vrot.slane %v1383, %v1406
      %v1409 = vadd.f32 %v1402, %v1407
      %v1410 = vld [vmem:[%s7] sm:$0xff]
      %v1411 = vld [vmem:[%s7 + $0x8] sm:$0xff]
      %v1412 = vld [vmem:[%s7 + $0x10] sm:$0xff]
      %v1413 = vld [vmem:[%s7 + $0x18] sm:$0xff]
      %v1414 = vld [vmem:[%s7 + $0x20] sm:$0xff]
      %v1415 = vld [vmem:[%s7 + $0x28] sm:$0xff]
      %v1416 = vld [vmem:[%s7 + $0x30] sm:$0xff]
      %v1417 = vld [vmem:[%s7 + $0x38] sm:$0xff]
      %v1418 = vld [vmem:[%s7 + $0x40] sm:$0xff]
      %v1419 = vld [vmem:[%s7 + $0x48] sm:$0xff]
      %v1420 = vld [vmem:[%s7 + $0x50] sm:$0xff]
      %v1421 = vld [vmem:[%s7 + $0x58] sm:$0xff]
      %v1422 = vld [vmem:[%s7 + $0x60] sm:$0xff]
      %v1423 = vld [vmem:[%s7 + $0x68] sm:$0xff]
      %v1424 = vld [vmem:[%s7 + $0x70] sm:$0xff]
      %v1425 = vld [vmem:[%s7 + $0x78] sm:$0xff]
      %v1426 = vpack.c.bf16 %v1409, %v1409
      %v1427 = vld [vmem:[%s8] sm:$0x3]
      %v1429 = vlaneseq
      %v1430 = vshrl.u32 %v1429, 7
      %v1431 = vsub.s32 0, %v1430
      %v1432 = vrot.slane %v1427, %v1431
      %v1433 = vlaneseq
      %v1434 = vshrl.u32 %v1433, 7
      %v1435 = vsub.s32 1, %v1434
      %v1436 = vrot.slane %v1427, %v1435
      %v1455 = vunpack.c.l.b16 %v1410
      %v1456 = vunpack.c.h.b16 %v1410
      %v1457 = vunpack.c.l.b16 %v1411
      %v1458 = vunpack.c.h.b16 %v1411
      %v1459 = vunpack.c.l.b16 %v1412
      %v1460 = vunpack.c.h.b16 %v1412
      %v1461 = vunpack.c.l.b16 %v1413
      %v1462 = vunpack.c.h.b16 %v1413
      %v1463 = vunpack.c.l.b16 %v1414
      %v1464 = vunpack.c.h.b16 %v1414
      %v1465 = vunpack.c.l.b16 %v1415
      %v1466 = vunpack.c.h.b16 %v1415
      %v1467 = vunpack.c.l.b16 %v1416
      %v1468 = vunpack.c.h.b16 %v1416
      %v1469 = vunpack.c.l.b16 %v1417
      %v1470 = vunpack.c.h.b16 %v1417
      %v1471 = vunpack.c.l.b16 %v1418
      %v1472 = vunpack.c.h.b16 %v1418
      %v1473 = vunpack.c.l.b16 %v1419
      %v1474 = vunpack.c.h.b16 %v1419
      %v1475 = vunpack.c.l.b16 %v1420
      %v1476 = vunpack.c.h.b16 %v1420
      %v1477 = vunpack.c.l.b16 %v1421
      %v1478 = vunpack.c.h.b16 %v1421
      %v1479 = vunpack.c.l.b16 %v1422
      %v1480 = vunpack.c.h.b16 %v1422
      %v1481 = vunpack.c.l.b16 %v1423
      %v1482 = vunpack.c.h.b16 %v1423
      %v1483 = vunpack.c.l.b16 %v1424
      %v1484 = vunpack.c.h.b16 %v1424
      %v1485 = vunpack.c.l.b16 %v1425
      %v1486 = vunpack.c.h.b16 %v1425
      %v1487 = vpack.c.b16 %v1457, %v1455
      %v1488 = vpack.c.b16 %v1458, %v1456
      %v1489 = vpack.c.b16 %v1461, %v1459
      %v1490 = vpack.c.b16 %v1462, %v1460
      %v1491 = vpack.c.b16 %v1465, %v1463
      %v1492 = vpack.c.b16 %v1466, %v1464
      %v1493 = vpack.c.b16 %v1469, %v1467
      %v1494 = vpack.c.b16 %v1470, %v1468
      %v1495 = vpack.c.b16 %v1473, %v1471
      %v1496 = vpack.c.b16 %v1474, %v1472
      %v1497 = vpack.c.b16 %v1477, %v1475
      %v1498 = vpack.c.b16 %v1478, %v1476
      %v1499 = vpack.c.b16 %v1481, %v1479
      %v1500 = vpack.c.b16 %v1482, %v1480
      %v1501 = vpack.c.b16 %v1485, %v1483
      %v1502 = vpack.c.b16 %v1486, %v1484
      %1519 = vmatprep.subr.bf16.mxu0 %v1488
      %1520 = vmatpush1.bf16.msra.mxu0 %v1487
      %1521 = vmatprep.subr.bf16.mxu0 %v1490
      %1522 = vmatpush1.bf16.msra.mxu0 %v1489
      %1523 = vmatprep.subr.bf16.mxu0 %v1492
      %1524 = vmatpush1.bf16.msra.mxu0 %v1491
      %1525 = vmatprep.subr.bf16.mxu0 %v1494
      %1526 = vmatpush1.bf16.msra.mxu0 %v1493
      %1527 = vmatprep.subr.bf16.mxu0 %v1496
      %1528 = vmatpush1.bf16.msra.mxu0 %v1495
      %1529 = vmatprep.subr.bf16.mxu0 %v1498
      %1530 = vmatpush1.bf16.msra.mxu0 %v1497
      %1531 = vmatprep.subr.bf16.mxu0 %v1500
      %1532 = vmatpush1.bf16.msra.mxu0 %v1499
      %1533 = vmatprep.subr.bf16.mxu0 %v1502
      %1534 = vmatpush1.bf16.msra.mxu0 %v1501
      %1535 = vmatprep.subr.bf16.mxu0 0
      %1536 = vmatpush1.bf16.msra.mxu0 0
      %1537 = vmatprep.subr.bf16.mxu0 0
      %1538 = vmatpush1.bf16.msra.mxu0 0
      %1539 = vmatprep.subr.bf16.mxu0 0
      %1540 = vmatpush1.bf16.msra.mxu0 0
      %1541 = vmatprep.subr.bf16.mxu0 0
      %1542 = vmatpush1.bf16.msra.mxu0 0
      %1543 = vmatprep.subr.bf16.mxu0 0
      %1544 = vmatpush1.bf16.msra.mxu0 0
      %1545 = vmatprep.subr.bf16.mxu0 0
      %1546 = vmatpush1.bf16.msra.mxu0 0
      %1547 = vmatprep.subr.bf16.mxu0 0
      %1548 = vmatpush1.bf16.msra.mxu0 0
      %1549 = vmatprep.subr.bf16.mxu0 0
      %1550 = vmatpush1.bf16.msra.mxu0 0
      %1551 = vmatprep.mubr.bf16.mxu0 0
      %1552 = vmatmul.mubr.bf16.gmra.mrb[0].mxu0 %v1426
      %v1553 = vpop.f32.mrb[0].mxu0
      %v1554 = vadd.f32 %v1432, %v1553
      %v1555 = vpop.f32.mrb[0].mxu0
      %v1556 = vadd.f32 %v1436, %v1555
      %v1557 = vpop.f32.mrb[0].mxu0
      %v1558 = vpop.f32.mrb[0].mxu0
      %1559 = vdwg.mxu0
      %v1560 = vmul.f32 %v1554, %v1554
      %v1561 = vmul.f32 %v1556, %v1556
      %v1562 = vmul.f32 %v1554, %v1560
      %v1563 = vmul.f32 %v1556, %v1561
      %v1564 = vmul.f32 %v1562, 0.044715
      %v1565 = vmul.f32 %v1563, 0.044715
      %v1566 = vadd.f32 %v1554, %v1564
      %v1567 = vadd.f32 %v1556, %v1565
      %v1568 = vmul.f32 %v1566, 0.7978846
      %v1569 = vmul.f32 %v1567, 0.7978846
      %v1570 = vtanh.pop %v1568
      %v1571 = vtanh.pop %v1569
      %v1572 = vadd.f32 %v1570, 1.0
      %v1573 = vadd.f32 %v1571, 1.0
      %v1574 = vmul.f32 %v1572, 0.5
      %v1575 = vmul.f32 %v1573, 0.5
      %v1576 = vmul.f32 %v1554, %v1574
      %v1577 = vmul.f32 %v1556, %v1575
      %v1578 = vld [vmem:[%s9] sm:$0xf]
      %v1579 = vld [vmem:[%s9 + $0x4] sm:$0xf]
      %v1580 = vld [vmem:[%s9 + $0x8] sm:$0xf]
      %v1581 = vld [vmem:[%s9 + $0xc] sm:$0xf]
      %v1582 = vld [vmem:[%s9 + $0x10] sm:$0xf]
      %v1583 = vld [vmem:[%s9 + $0x14] sm:$0xf]
      %v1584 = vld [vmem:[%s9 + $0x18] sm:$0xf]
      %v1585 = vld [vmem:[%s9 + $0x1c] sm:$0xf]
      %v1586 = vld [vmem:[%s9 + $0x20] sm:$0xf]
      %v1587 = vld [vmem:[%s9 + $0x24] sm:$0xf]
      %v1588 = vld [vmem:[%s9 + $0x28] sm:$0xf]
      %v1589 = vld [vmem:[%s9 + $0x2c] sm:$0xf]
      %v1590 = vld [vmem:[%s9 + $0x30] sm:$0xf]
      %v1591 = vld [vmem:[%s9 + $0x34] sm:$0xf]
      %v1592 = vld [vmem:[%s9 + $0x38] sm:$0xf]
      %v1593 = vld [vmem:[%s9 + $0x3c] sm:$0xf]
      %v1594 = vld [vmem:[%s9 + $0x40] sm:$0xf]
      %v1595 = vld [vmem:[%s9 + $0x44] sm:$0xf]
      %v1596 = vld [vmem:[%s9 + $0x48] sm:$0xf]
      %v1597 = vld [vmem:[%s9 + $0x4c] sm:$0xf]
      %v1598 = vld [vmem:[%s9 + $0x50] sm:$0xf]
      %v1599 = vld [vmem:[%s9 + $0x54] sm:$0xf]
      %v1600 = vld [vmem:[%s9 + $0x58] sm:$0xf]
      %v1601 = vld [vmem:[%s9 + $0x5c] sm:$0xf]
      %v1602 = vld [vmem:[%s9 + $0x60] sm:$0xf]
      %v1603 = vld [vmem:[%s9 + $0x64] sm:$0xf]
      %v1604 = vld [vmem:[%s9 + $0x68] sm:$0xf]
      %v1605 = vld [vmem:[%s9 + $0x6c] sm:$0xf]
      %v1606 = vld [vmem:[%s9 + $0x70] sm:$0xf]
      %v1607 = vld [vmem:[%s9 + $0x74] sm:$0xf]
      %v1608 = vld [vmem:[%s9 + $0x78] sm:$0xf]
      %v1609 = vld [vmem:[%s9 + $0x7c] sm:$0xf]
      %v1610 = vpack.c.bf16 %v1576, %v1576
      %v1611 = vpack.c.bf16 %v1577, %v1577
      %v1612 = vld [vmem:[%s10] sm:$0x1]
      %v1614 = vlaneseq
      %v1615 = vshrl.u32 %v1614, 7
      %v1616 = vsub.s32 0, %v1615
      %v1617 = vrot.slane %v1612, %v1616
      %v1651 = vunpack.c.l.b16 %v1578
      %v1652 = vunpack.c.l.b16 %v1579
      %v1653 = vunpack.c.l.b16 %v1580
      %v1654 = vunpack.c.l.b16 %v1581
      %v1655 = vunpack.c.l.b16 %v1582
      %v1656 = vunpack.c.l.b16 %v1583
      %v1657 = vunpack.c.l.b16 %v1584
      %v1658 = vunpack.c.l.b16 %v1585
      %v1659 = vunpack.c.l.b16 %v1586
      %v1660 = vunpack.c.l.b16 %v1587
      %v1661 = vunpack.c.l.b16 %v1588
      %v1662 = vunpack.c.l.b16 %v1589
      %v1663 = vunpack.c.l.b16 %v1590
      %v1664 = vunpack.c.l.b16 %v1591
      %v1665 = vunpack.c.l.b16 %v1592
      %v1666 = vunpack.c.l.b16 %v1593
      %v1667 = vunpack.c.l.b16 %v1594
      %v1668 = vunpack.c.l.b16 %v1595
      %v1669 = vunpack.c.l.b16 %v1596
      %v1670 = vunpack.c.l.b16 %v1597
      %v1671 = vunpack.c.l.b16 %v1598
      %v1672 = vunpack.c.l.b16 %v1599
      %v1673 = vunpack.c.l.b16 %v1600
      %v1674 = vunpack.c.l.b16 %v1601
      %v1675 = vunpack.c.l.b16 %v1602
      %v1676 = vunpack.c.l.b16 %v1603
      %v1677 = vunpack.c.l.b16 %v1604
      %v1678 = vunpack.c.l.b16 %v1605
      %v1679 = vunpack.c.l.b16 %v1606
      %v1680 = vunpack.c.l.b16 %v1607
      %v1681 = vunpack.c.l.b16 %v1608
      %v1682 = vunpack.c.l.b16 %v1609
      %v1683 = vpack.c.b16 %v1652, %v1651
      %v1684 = vpack.c.b16 %v1654, %v1653
      %v1685 = vpack.c.b16 %v1656, %v1655
      %v1686 = vpack.c.b16 %v1658, %v1657
      %v1687 = vpack.c.b16 %v1660, %v1659
      %v1688 = vpack.c.b16 %v1662, %v1661
      %v1689 = vpack.c.b16 %v1664, %v1663
      %v1690 = vpack.c.b16 %v1666, %v1665
      %v1691 = vpack.c.b16 %v1668, %v1667
      %v1692 = vpack.c.b16 %v1670, %v1669
      %v1693 = vpack.c.b16 %v1672, %v1671
      %v1694 = vpack.c.b16 %v1674, %v1673
      %v1695 = vpack.c.b16 %v1676, %v1675
      %v1696 = vpack.c.b16 %v1678, %v1677
      %v1697 = vpack.c.b16 %v1680, %v1679
      %v1698 = vpack.c.b16 %v1682, %v1681
      %1715 = vmatprep.subr.bf16.mxu0 0
      %1716 = vmatpush1.bf16.msra.mxu0 %v1683
      %1717 = vmatprep.subr.bf16.mxu0 0
      %1718 = vmatpush1.bf16.msra.mxu0 %v1684
      %1719 = vmatprep.subr.bf16.mxu0 0
      %1720 = vmatpush1.bf16.msra.mxu0 %v1685
      %1721 = vmatprep.subr.bf16.mxu0 0
      %1722 = vmatpush1.bf16.msra.mxu0 %v1686
      %1723 = vmatprep.subr.bf16.mxu0 0
      %1724 = vmatpush1.bf16.msra.mxu0 %v1687
      %1725 = vmatprep.subr.bf16.mxu0 0
      %1726 = vmatpush1.bf16.msra.mxu0 %v1688
      %1727 = vmatprep.subr.bf16.mxu0 0
      %1728 = vmatpush1.bf16.msra.mxu0 %v1689
      %1729 = vmatprep.subr.bf16.mxu0 0
      %1730 = vmatpush1.bf16.msra.mxu0 %v1690
      %1731 = vmatprep.subr.bf16.mxu0 0
      %1732 = vmatpush1.bf16.msra.mxu0 %v1691
      %1733 = vmatprep.subr.bf16.mxu0 0
      %1734 = vmatpush1.bf16.msra.mxu0 %v1692
      %1735 = vmatprep.subr.bf16.mxu0 0
      %1736 = vmatpush1.bf16.msra.mxu0 %v1693
      %1737 = vmatprep.subr.bf16.mxu0 0
      %1738 = vmatpush1.bf16.msra.mxu0 %v1694
      %1739 = vmatprep.subr.bf16.mxu0 0
      %1740 = vmatpush1.bf16.msra.mxu0 %v1695
      %1741 = vmatprep.subr.bf16.mxu0 0
      %1742 = vmatpush1.bf16.msra.mxu0 %v1696
      %1743 = vmatprep.subr.bf16.mxu0 0
      %1744 = vmatpush1.bf16.msra.mxu0 %v1697
      %1745 = vmatprep.subr.bf16.mxu0 0
      %1746 = vmatpush1.bf16.msra.mxu0 %v1698
      %1747 = vmatprep.mubr.bf16.mxu0 %v1611
      %1748 = vmatmul.mubr.bf16.gmra.mrb[0].mxu0 %v1610
      %v1749 = vpop.f32.mrb[0].mxu0
      %v1750 = vadd.f32 %v1617, %v1749
      %v1751 = vpop.f32.mrb[0].mxu0
      %v1752 = vpop.f32.mrb[0].mxu0
      %v1753 = vpop.f32.mrb[0].mxu0
      %1754 = vdwg.mxu0
      %v1755 = vadd.f32 %v1409, %v1750
      %v1756 = vld [vmem:[%s11] sm:$0x1]
      %v1757 = vld [vmem:[%s12] sm:$0x1]
      %1758 = vadd.xlane.f32.xlu0 %v1755
      %v1759 = vpop.xlane.xlu0 %1758
      %v1760 = vmul.f32 %v1759, %v1386
      %v1761 = vsub.f32 %v1755, %v1760
      %v1762 = vmul.f32 %v1761, %v1761
      %1763 = vadd.xlane.f32.xlu0 %v1762
      %v1764 = vpop.xlane.xlu0 %1763
      %v1765 = vmul.f32 %v1764, %v1386
      %v1766 = vadd.f32 %v1765, 1e-05
      %v1767 = vrsqrt.pop %v1766
      %v1768 = vmul.f32 %v1761, %v1767
      %v1770 = vlaneseq
      %v1771 = vshrl.u32 %v1770, 7
      %v1772 = vsub.s32 0, %v1771
      %v1773 = vrot.slane %v1756, %v1772
      %v1775 = vmul.f32 %v1768, %v1773
      %v1777 = vlaneseq
      %v1778 = vshrl.u32 %v1777, 7
      %v1779 = vsub.s32 0, %v1778
      %v1780 = vrot.slane %v1757, %v1779
      %v1782 = vadd.f32 %v1775, %v1780
      %s1783 = scalar_lea.vmem %s1, 192
      %v1784 = vld [vmem:[%s1783] sm:$0xff]
      %v1785 = vld [vmem:[%s1783 + $0x8] sm:$0xf]
      %v1786 = vld [vmem:[%s1783 + $0xc] sm:$0xff]
      %v1787 = vld [vmem:[%s1783 + $0x14] sm:$0xf]
      %v1788 = vld [vmem:[%s1783 + $0x18] sm:$0xff]
      %v1789 = vld [vmem:[%s1783 + $0x20] sm:$0xf]
      %v1790 = vld [vmem:[%s1783 + $0x24] sm:$0xff]
      %v1791 = vld [vmem:[%s1783 + $0x2c] sm:$0xf]
      %v1792 = vld [vmem:[%s1783 + $0x30] sm:$0xff]
      %v1793 = vld [vmem:[%s1783 + $0x38] sm:$0xf]
      %v1794 = vld [vmem:[%s1783 + $0x3c] sm:$0xff]
      %v1795 = vld [vmem:[%s1783 + $0x44] sm:$0xf]
      %v1796 = vld [vmem:[%s1783 + $0x48] sm:$0xff]
      %v1797 = vld [vmem:[%s1783 + $0x50] sm:$0xf]
      %v1798 = vld [vmem:[%s1783 + $0x54] sm:$0xff]
      %v1799 = vld [vmem:[%s1783 + $0x5c] sm:$0xf]
      %v1800 = vld [vmem:[%s1783 + $0x60] sm:$0xff]
      %v1801 = vld [vmem:[%s1783 + $0x68] sm:$0xf]
      %v1802 = vld [vmem:[%s1783 + $0x6c] sm:$0xff]
      %v1803 = vld [vmem:[%s1783 + $0x74] sm:$0xf]
      %v1804 = vld [vmem:[%s1783 + $0x78] sm:$0xff]
      %v1805 = vld [vmem:[%s1783 + $0x80] sm:$0xf]
      %v1806 = vld [vmem:[%s1783 + $0x84] sm:$0xff]
      %v1807 = vld [vmem:[%s1783 + $0x8c] sm:$0xf]
      %v1808 = vld [vmem:[%s1783 + $0x90] sm:$0xff]
      %v1809 = vld [vmem:[%s1783 + $0x98] sm:$0xf]
      %v1810 = vld [vmem:[%s1783 + $0x9c] sm:$0xff]
      %v1811 = vld [vmem:[%s1783 + $0xa4] sm:$0xf]
      %v1812 = vld [vmem:[%s1783 + $0xa8] sm:$0xff]
      %v1813 = vld [vmem:[%s1783 + $0xb0] sm:$0xf]
      %v1814 = vld [vmem:[%s1783 + $0xb4] sm:$0xff]
      %v1815 = vld [vmem:[%s1783 + $0xbc] sm:$0xf]
      %v1816 = vpack.c.bf16 %v1782, %v1782
      %s1817 = scalar_lea.vmem %s2, 3
      %v1818 = vld [vmem:[%s1817] sm:$0x7]
      %v1820 = vlaneseq
      %v1821 = vshrl.u32 %v1820, 7
      %v1822 = vsub.s32 0, %v1821
      %v1823 = vrot.slane %v1818, %v1822
      %v1824 = vlaneseq
      %v1825 = vshrl.u32 %v1824, 7
      %v1826 = vsub.s32 1, %v1825
      %v1827 = vrot.slane %v1818, %v1826
      %v1828 = vlaneseq
      %v1829 = vshrl.u32 %v1828, 7
      %v1830 = vsub.s32 2, %v1829
      %v1831 = vrot.slane %v1818, %v1830
      %v1867 = vunpack.c.l.b16 %v1784
      %v1868 = vunpack.c.h.b16 %v1784
      %v1869 = vunpack.c.l.b16 %v1785
      %v1870 = vunpack.c.l.b16 %v1786
      %v1871 = vunpack.c.h.b16 %v1786
      %v1872 = vunpack.c.l.b16 %v1787
      %v1873 = vunpack.c.l.b16 %v1788
      %v1874 = vunpack.c.h.b16 %v1788
      %v1875 = vunpack.c.l.b16 %v1789
      %v1876 = vunpack.c.l.b16 %v1790
      %v1877 = vunpack.c.h.b16 %v1790
      %v1878 = vunpack.c.l.b16 %v1791
      %v1879 = vunpack.c.l.b16 %v1792
      %v1880 = vunpack.c.h.b16 %v1792
      %v1881 = vunpack.c.l.b16 %v1793
      %v1882 = vunpack.c.l.b16 %v1794
      %v1883 = vunpack.c.h.b16 %v1794
      %v1884 = vunpack.c.l.b16 %v1795
      %v1885 = vunpack.c.l.b16 %v1796
      %v1886 = vunpack.c.h.b16 %v1796
      %v1887 = vunpack.c.l.b16 %v1797
      %v1888 = vunpack.c.l.b16 %v1798
      %v1889 = vunpack.c.h.b16 %v1798
      %v1890 = vunpack.c.l.b16 %v1799
      %v1891 = vunpack.c.l.b16 %v1800
      %v1892 = vunpack.c.h.b16 %v1800
      %v1893 = vunpack.c.l.b16 %v1801
      %v1894 = vunpack.c.l.b16 %v1802
      %v1895 = vunpack.c.h.b16 %v1802
      %v1896 = vunpack.c.l.b16 %v1803
      %v1897 = vunpack.c.l.b16 %v1804
      %v1898 = vunpack.c.h.b16 %v1804
      %v1899 = vunpack.c.l.b16 %v1805
      %v1900 = vunpack.c.l.b16 %v1806
      %v1901 = vunpack.c.h.b16 %v1806
      %v1902 = vunpack.c.l.b16 %v1807
      %v1903 = vunpack.c.l.b16 %v1808
      %v1904 = vunpack.c.h.b16 %v1808
      %v1905 = vunpack.c.l.b16 %v1809
      %v1906 = vunpack.c.l.b16 %v1810
      %v1907 = vunpack.c.h.b16 %v1810
      %v1908 = vunpack.c.l.b16 %v1811
      %v1909 = vunpack.c.l.b16 %v1812
      %v1910 = vunpack.c.h.b16 %v1812
      %v1911 = vunpack.c.l.b16 %v1813
      %v1912 = vunpack.c.l.b16 %v1814
      %v1913 = vunpack.c.h.b16 %v1814
      %v1914 = vunpack.c.l.b16 %v1815
      %v1915 = vpack.c.b16 %v1870, %v1867
      %v1916 = vpack.c.b16 %v1871, %v1868
      %v1917 = vpack.c.b16 %v1872, %v1869
      %v1918 = vpack.c.b16 %v1876, %v1873
      %v1919 = vpack.c.b16 %v1877, %v1874
      %v1920 = vpack.c.b16 %v1878, %v1875
      %v1921 = vpack.c.b16 %v1882, %v1879
      %v1922 = vpack.c.b16 %v1883, %v1880
      %v1923 = vpack.c.b16 %v1884, %v1881
      %v1924 = vpack.c.b16 %v1888, %v1885
      %v1925 = vpack.c.b16 %v1889, %v1886
      %v1926 = vpack.c.b16 %v1890, %v1887
      %v1927 = vpack.c.b16 %v1894, %v1891
      %v1928 = vpack.c.b16 %v1895, %v1892
      %v1929 = vpack.c.b16 %v1896, %v1893
      %v1930 = vpack.c.b16 %v1900, %v1897
      %v1931 = vpack.c.b16 %v1901, %v1898
      %v1932 = vpack.c.b16 %v1902, %v1899
      %v1933 = vpack.c.b16 %v1906, %v1903
      %v1934 = vpack.c.b16 %v1907, %v1904
      %v1935 = vpack.c.b16 %v1908, %v1905
      %v1936 = vpack.c.b16 %v1912, %v1909
      %v1937 = vpack.c.b16 %v1913, %v1910
      %v1938 = vpack.c.b16 %v1914, %v1911
      %1963 = vmatprep.subr.bf16.mxu0 %v1916
      %1964 = vmatpush1.bf16.msra.mxu0 %v1915
      %1965 = vmatprep.subr.bf16.mxu0 %v1919
      %1966 = vmatpush1.bf16.msra.mxu0 %v1918
      %1967 = vmatprep.subr.bf16.mxu0 %v1922
      %1968 = vmatpush1.bf16.msra.mxu0 %v1921
      %1969 = vmatprep.subr.bf16.mxu0 %v1925
      %1970 = vmatpush1.bf16.msra.mxu0 %v1924
      %1971 = vmatprep.subr.bf16.mxu0 %v1928
      %1972 = vmatpush1.bf16.msra.mxu0 %v1927
      %1973 = vmatprep.subr.bf16.mxu0 %v1931
      %1974 = vmatpush1.bf16.msra.mxu0 %v1930
      %1975 = vmatprep.subr.bf16.mxu0 %v1934
      %1976 = vmatpush1.bf16.msra.mxu0 %v1933
      %1977 = vmatprep.subr.bf16.mxu0 %v1937
      %1978 = vmatpush1.bf16.msra.mxu0 %v1936
      %1979 = vmatprep.subr.bf16.mxu0 0
      %1980 = vmatpush1.bf16.msra.mxu0 0
      %1981 = vmatprep.subr.bf16.mxu0 0
      %1982 = vmatpush1.bf16.msra.mxu0 0
      %1983 = vmatprep.subr.bf16.mxu0 0
      %1984 = vmatpush1.bf16.msra.mxu0 0
      %1985 = vmatprep.subr.bf16.mxu0 0
      %1986 = vmatpush1.bf16.msra.mxu0 0
      %1987 = vmatprep.subr.bf16.mxu0 0
      %1988 = vmatpush1.bf16.msra.mxu0 0
      %1989 = vmatprep.subr.bf16.mxu0 0
      %1990 = vmatpush1.bf16.msra.mxu0 0
      %1991 = vmatprep.subr.bf16.mxu0 0
      %1992 = vmatpush1.bf16.msra.mxu0 0
      %1993 = vmatprep.subr.bf16.mxu0 0
      %1994 = vmatpush1.bf16.msra.mxu0 0
      %1995 = vmatprep.mubr.bf16.mxu0 0
      %1996 = vmatmul.mubr.bf16.gmra.mrb[0].mxu0 %v1816
      %v1997 = vpop.f32.mrb[0].mxu0
      %v1998 = vadd.f32 %v1823, %v1997
      %v1999 = vpop.f32.mrb[0].mxu0
      %v2000 = vadd.f32 %v1827, %v1999
      %v2001 = vpop.f32.mrb[0].mxu0
      %v2002 = vpop.f32.mrb[0].mxu0
      %2003 = vdwg.mxu0
      %2004 = vmatprep.subr.bf16.mxu0 0
      %2005 = vmatpush1.bf16.msra.mxu0 %v1917
      %2006 = vmatprep.subr.bf16.mxu0 0
      %2007 = vmatpush1.bf16.msra.mxu0 %v1920
      %2008 = vmatprep.subr.bf16.mxu0 0
      %2009 = vmatpush1.bf16.msra.mxu0 %v1923
      %2010 = vmatprep.subr.bf16.mxu0 0
      %2011 = vmatpush1.bf16.msra.mxu0 %v1926
      %2012 = vmatprep.subr.bf16.mxu0 0
      %2013 = vmatpush1.bf16.msra.mxu0 %v1929
      %2014 = vmatprep.subr.bf16.mxu0 0
      %2015 = vmatpush1.bf16.msra.mxu0 %v1932
      %2016 = vmatprep.subr.bf16.mxu0 0
      %2017 = vmatpush1.bf16.msra.mxu0 %v1935
      %2018 = vmatprep.subr.bf16.mxu0 0
      %2019 = vmatpush1.bf16.msra.mxu0 %v1938
      %2020 = vmatprep.subr.bf16.mxu0 0
      %2021 = vmatpush1.bf16.msra.mxu0 0
      %2022 = vmatprep.subr.bf16.mxu0 0
      %2023 = vmatpush1.bf16.msra.mxu0 0
      %2024 = vmatprep.subr.bf16.mxu0 0
      %2025 = vmatpush1.bf16.msra.mxu0 0
      %2026 = vmatprep.subr.bf16.mxu0 0
      %2027 = vmatpush1.bf16.msra.mxu0 0
      %2028 = vmatprep.subr.bf16.mxu0 0
      %2029 = vmatpush1.bf16.msra.mxu0 0
      %2030 = vmatprep.subr.bf16.mxu0 0
      %2031 = vmatpush1.bf16.msra.mxu0 0
      %2032 = vmatprep.subr.bf16.mxu0 0
      %2033 = vmatpush1.bf16.msra.mxu0 0
      %2034 = vmatprep.subr.bf16.mxu0 0
      %2035 = vmatpush1.bf16.msra.mxu0 0
      %2036 = vmatprep.mubr.bf16.mxu0 0
      %2037 = vmatmul.mubr.bf16.gmra.mrb[0].mxu0 %v1816
      %v2038 = vpop.f32.mrb[0].mxu0
      %v2039 = vadd.f32 %v1831, %v2038
      %v2040 = vpop.f32.mrb[0].mxu0
      %v2041 = vpop.f32.mrb[0].mxu0
      %v2042 = vpop.f32.mrb[0].mxu0
      %2043 = vdwg.mxu0
      %v2044 = vpack.c.bf16 %v1998, %v1998
      %v2045 = vpack.c.bf16 %v2000, %v2000
      %v2047 = vsel %vm807, %v2044, 0
      %v2050 = vsel %vm807, %v2045, 0
      %2052 = vmatprep.subr.bf16.mxu0 0
      %2053 = vmatpush1.bf16.xpose.msra.mxu0 %v2050
      %2054 = vmatprep.subr.bf16.mxu0 0
      %2055 = vmatpush1.bf16.xpose.msra.mxu0 0
      %2056 = vmatprep.subr.bf16.mxu0 0
      %2057 = vmatpush1.bf16.xpose.msra.mxu0 0
      %2058 = vmatprep.subr.bf16.mxu0 0
      %2059 = vmatpush1.bf16.xpose.msra.mxu0 0
      %2060 = vmatprep.subr.bf16.mxu0 0
      %2061 = vmatpush1.bf16.xpose.msra.mxu0 0
      %2062 = vmatprep.subr.bf16.mxu0 0
      %2063 = vmatpush1.bf16.xpose.msra.mxu0 0
      %2064 = vmatprep.subr.bf16.mxu0 0
      %2065 = vmatpush1.bf16.xpose.msra.mxu0 0
      %2066 = vmatprep.subr.bf16.mxu0 0
      %2067 = vmatpush1.bf16.xpose.msra.mxu0 0
      %2068 = vmatprep.subr.bf16.mxu0 0
      %2069 = vmatpush1.bf16.xpose.msra.mxu0 0
      %2070 = vmatprep.subr.bf16.mxu0 0
      %2071 = vmatpush1.bf16.xpose.msra.mxu0 0
      %2072 = vmatprep.subr.bf16.mxu0 0
      %2073 = vmatpush1.bf16.xpose.msra.mxu0 0
      %2074 = vmatprep.subr.bf16.mxu0 0
      %2075 = vmatpush1.bf16.xpose.msra.mxu0 0
      %2076 = vmatprep.subr.bf16.mxu0 0
      %2077 = vmatpush1.bf16.xpose.msra.mxu0 0
      %2078 = vmatprep.subr.bf16.mxu0 0
      %2079 = vmatpush1.bf16.xpose.msra.mxu0 0
      %2080 = vmatprep.subr.bf16.mxu0 0
      %2081 = vmatpush1.bf16.xpose.msra.mxu0 0
      %2082 = vmatprep.subr.bf16.mxu0 0
      %2083 = vmatpush1.bf16.xpose.msra.mxu0 0
      %2084 = vmatprep.mubr.bf16.mxu0 0
      %2085 = vmatmul.mubr.bf16.gmra.mrb[0].mxu0 %v2047
      %v2086 = vpop.f32.mrb[0].mxu0
      %v2087 = vadd.f32 0.0, %v2086
      %v2088 = vpop.f32.mrb[0].mxu0
      %v2089 = vpop.f32.mrb[0].mxu0
      %v2090 = vpop.f32.mrb[0].mxu0
      %2091 = vdwg.mxu0
      %v2092 = vmul.f32 %v2087, 0.17677669
      %v2093 = vsel %vm855, %v2092, -inf
      %2094 = vmax.xlane.f32.xlu0 %v2093
      %v2095 = vpop.xlane.xlu0 %2094
      %v2096 = vsub.f32 %v2092, %v2095
      %v2097 = vmul.f32 %v2096, 1.442695
      %v2098 = vpow.pop %v2097
      %v2099 = vsel %vm855, %v2098, 0.0
      %2100 = vadd.xlane.f32.xlu0 %v2099
      %v2101 = vpop.xlane.xlu0 %2100
      %v2102 = vrcp.pop %v2101
      %v2103 = vmul.f32 %v2098, %v2102
      %v2104 = vpack.c.bf16 %v2103, %v2103
      %v2105 = vpack.c.bf16 %v2039, %v2039
      %v2107 = vsel %vm855, %v2104, 0
      %v2110 = vsel %vm872, %v2105, 0
      %2112 = vmatprep.subr.bf16.mxu0 0
      %2113 = vmatpush1.bf16.msra.mxu0 %v2110
      %2114 = vmatprep.subr.bf16.mxu0 0
      %2115 = vmatpush1.bf16.msra.mxu0 0
      %2116 = vmatprep.subr.bf16.mxu0 0
      %2117 = vmatpush1.bf16.msra.mxu0 0
      %2118 = vmatprep.subr.bf16.mxu0 0
      %2119 = vmatpush1.bf16.msra.mxu0 0
      %2120 = vmatprep.subr.bf16.mxu0 0
      %2121 = vmatpush1.bf16.msra.mxu0 0
      %2122 = vmatprep.subr.bf16.mxu0 0
      %2123 = vmatpush1.bf16.msra.mxu0 0
      %2124 = vmatprep.subr.bf16.mxu0 0
      %2125 = vmatpush1.bf16.msra.mxu0 0
      %2126 = vmatprep.subr.bf16.mxu0 0
      %2127 = vmatpush1.bf16.msra.mxu0 0
      %2128 = vmatprep.subr.bf16.mxu0 0
      %2129 = vmatpush1.bf16.msra.mxu0 0
      %2130 = vmatprep.subr.bf16.mxu0 0
      %2131 = vmatpush1.bf16.msra.mxu0 0
      %2132 = vmatprep.subr.bf16.mxu0 0
      %2133 = vmatpush1.bf16.msra.mxu0 0
      %2134 = vmatprep.subr.bf16.mxu0 0
      %2135 = vmatpush1.bf16.msra.mxu0 0
      %2136 = vmatprep.subr.bf16.mxu0 0
      %2137 = vmatpush1.bf16.msra.mxu0 0
      %2138 = vmatprep.subr.bf16.mxu0 0
      %2139 = vmatpush1.bf16.msra.mxu0 0
      %2140 = vmatprep.subr.bf16.mxu0 0
      %2141 = vmatpush1.bf16.msra.mxu0 0
      %2142 = vmatprep.subr.bf16.mxu0 0
      %2143 = vmatpush1.bf16.msra.mxu0 0
      %2144 = vmatprep.mubr.bf16.mxu0 0
      %2145 = vmatmul.mubr.bf16.gmra.mrb[0].mxu0 %v2107
      %v2146 = vpop.f32.mrb[0].mxu0
      %v2147 = vadd.f32 0.0, %v2146
      %v2148 = vpop.f32.mrb[0].mxu0
      %v2149 = vpop.f32.mrb[0].mxu0
      %v2150 = vpop.f32.mrb[0].mxu0
      %2151 = vdwg.mxu0
      %2153 = vrot.lane.b32.xlu0 %v2044, 96
      %v2154 = vpop.permute.xlu0 %2153
      %2156 = vrot.lane.b32.xlu0 %v2045, 96
      %v2157 = vpop.permute.xlu0 %2156
      %v2159 = vsel %vm807, %v2154, 0
      %v2162 = vsel %vm807, %v2157, 0
      %2164 = vmatprep.subr.bf16.mxu0 0
      %2165 = vmatpush1.bf16.xpose.msra.mxu0 %v2162
      %2166 = vmatprep.subr.bf16.mxu0 0
      %2167 = vmatpush1.bf16.xpose.msra.mxu0 0
      %2168 = vmatprep.subr.bf16.mxu0 0
      %2169 = vmatpush1.bf16.xpose.msra.mxu0 0
      %2170 = vmatprep.subr.bf16.mxu0 0
      %2171 = vmatpush1.bf16.xpose.msra.mxu0 0
      %2172 = vmatprep.subr.bf16.mxu0 0
      %2173 = vmatpush1.bf16.xpose.msra.mxu0 0
      %2174 = vmatprep.subr.bf16.mxu0 0
      %2175 = vmatpush1.bf16.xpose.msra.mxu0 0
      %2176 = vmatprep.subr.bf16.mxu0 0
      %2177 = vmatpush1.bf16.xpose.msra.mxu0 0
      %2178 = vmatprep.subr.bf16.mxu0 0
      %2179 = vmatpush1.bf16.xpose.msra.mxu0 0
      %2180 = vmatprep.subr.bf16.mxu0 0
      %2181 = vmatpush1.bf16.xpose.msra.mxu0 0
      %2182 = vmatprep.subr.bf16.mxu0 0
      %2183 = vmatpush1.bf16.xpose.msra.mxu0 0
      %2184 = vmatprep.subr.bf16.mxu0 0
      %2185 = vmatpush1.bf16.xpose.msra.mxu0 0
      %2186 = vmatprep.subr.bf16.mxu0 0
      %2187 = vmatpush1.bf16.xpose.msra.mxu0 0
      %2188 = vmatprep.subr.bf16.mxu0 0
      %2189 = vmatpush1.bf16.xpose.msra.mxu0 0
      %2190 = vmatprep.subr.bf16.mxu0 0
      %2191 = vmatpush1.bf16.xpose.msra.mxu0 0
      %2192 = vmatprep.subr.bf16.mxu0 0
      %2193 = vmatpush1.bf16.xpose.msra.mxu0 0
      %2194 = vmatprep.subr.bf16.mxu0 0
      %2195 = vmatpush1.bf16.xpose.msra.mxu0 0
      %2196 = vmatprep.mubr.bf16.mxu0 0
      %2197 = vmatmul.mubr.bf16.gmra.mrb[0].mxu0 %v2159
      %v2198 = vpop.f32.mrb[0].mxu0
      %v2199 = vadd.f32 0.0, %v2198
      %v2200 = vpop.f32.mrb[0].mxu0
      %v2201 = vpop.f32.mrb[0].mxu0
      %v2202 = vpop.f32.mrb[0].mxu0
      %2203 = vdwg.mxu0
      %v2204 = vmul.f32 %v2199, 0.17677669
      %v2205 = vsel %vm855, %v2204, -inf
      %2206 = vmax.xlane.f32.xlu0 %v2205
      %v2207 = vpop.xlane.xlu0 %2206
      %v2208 = vsub.f32 %v2204, %v2207
      %v2209 = vmul.f32 %v2208, 1.442695
      %v2210 = vpow.pop %v2209
      %v2211 = vsel %vm855, %v2210, 0.0
      %2212 = vadd.xlane.f32.xlu0 %v2211
      %v2213 = vpop.xlane.xlu0 %2212
      %v2214 = vrcp.pop %v2213
      %v2215 = vmul.f32 %v2210, %v2214
      %v2216 = vpack.c.bf16 %v2215, %v2215
      %2218 = vrot.lane.b32.xlu0 %v2105, 96
      %v2219 = vpop.permute.xlu0 %2218
      %v2221 = vsel %vm855, %v2216, 0
      %v2224 = vsel %vm872, %v2219, 0
      %2226 = vmatprep.subr.bf16.mxu0 0
      %2227 = vmatpush1.bf16.msra.mxu0 %v2224
      %2228 = vmatprep.subr.bf16.mxu0 0
      %2229 = vmatpush1.bf16.msra.mxu0 0
      %2230 = vmatprep.subr.bf16.mxu0 0
      %2231 = vmatpush1.bf16.msra.mxu0 0
      %2232 = vmatprep.subr.bf16.mxu0 0
      %2233 = vmatpush1.bf16.msra.mxu0 0
      %2234 = vmatprep.subr.bf16.mxu0 0
      %2235 = vmatpush1.bf16.msra.mxu0 0
      %2236 = vmatprep.subr.bf16.mxu0 0
      %2237 = vmatpush1.bf16.msra.mxu0 0
      %2238 = vmatprep.subr.bf16.mxu0 0
      %2239 = vmatpush1.bf16.msra.mxu0 0
      %2240 = vmatprep.subr.bf16.mxu0 0
      %2241 = vmatpush1.bf16.msra.mxu0 0
      %2242 = vmatprep.subr.bf16.mxu0 0
      %2243 = vmatpush1.bf16.msra.mxu0 0
      %2244 = vmatprep.subr.bf16.mxu0 0
      %2245 = vmatpush1.bf16.msra.mxu0 0
      %2246 = vmatprep.subr.bf16.mxu0 0
      %2247 = vmatpush1.bf16.msra.mxu0 0
      %2248 = vmatprep.subr.bf16.mxu0 0
      %2249 = vmatpush1.bf16.msra.mxu0 0
      %2250 = vmatprep.subr.bf16.mxu0 0
      %2251 = vmatpush1.bf16.msra.mxu0 0
      %2252 = vmatprep.subr.bf16.mxu0 0
      %2253 = vmatpush1.bf16.msra.mxu0 0
      %2254 = vmatprep.subr.bf16.mxu0 0
      %2255 = vmatpush1.bf16.msra.mxu0 0
      %2256 = vmatprep.subr.bf16.mxu0 0
      %2257 = vmatpush1.bf16.msra.mxu0 0
      %2258 = vmatprep.mubr.bf16.mxu0 0
      %2259 = vmatmul.mubr.bf16.gmra.mrb[0].mxu0 %v2221
      %v2260 = vpop.f32.mrb[0].mxu0
      %v2261 = vadd.f32 0.0, %v2260
      %v2262 = vpop.f32.mrb[0].mxu0
      %v2263 = vpop.f32.mrb[0].mxu0
      %v2264 = vpop.f32.mrb[0].mxu0
      %2265 = vdwg.mxu0
      %2266 = vrot.lane.b32.xlu0 %v2044, 64
      %v2267 = vpop.permute.xlu0 %2266
      %2268 = vrot.lane.b32.xlu0 %v2045, 64
      %v2269 = vpop.permute.xlu0 %2268
      %v2271 = vsel %vm807, %v2267, 0
      %v2274 = vsel %vm807, %v2269, 0
      %2276 = vmatprep.subr.bf16.mxu0 0
      %2277 = vmatpush1.bf16.xpose.msra.mxu0 %v2274
      %2278 = vmatprep.subr.bf16.mxu0 0
      %2279 = vmatpush1.bf16.xpose.msra.mxu0 0
      %2280 = vmatprep.subr.bf16.mxu0 0
      %2281 = vmatpush1.bf16.xpose.msra.mxu0 0
      %2282 = vmatprep.subr.bf16.mxu0 0
      %2283 = vmatpush1.bf16.xpose.msra.mxu0 0
      %2284 = vmatprep.subr.bf16.mxu0 0
      %2285 = vmatpush1.bf16.xpose.msra.mxu0 0
      %2286 = vmatprep.subr.bf16.mxu0 0
      %2287 = vmatpush1.bf16.xpose.msra.mxu0 0
      %2288 = vmatprep.subr.bf16.mxu0 0
      %2289 = vmatpush1.bf16.xpose.msra.mxu0 0
      %2290 = vmatprep.subr.bf16.mxu0 0
      %2291 = vmatpush1.bf16.xpose.msra.mxu0 0
      %2292 = vmatprep.subr.bf16.mxu0 0
      %2293 = vmatpush1.bf16.xpose.msra.mxu0 0
      %2294 = vmatprep.subr.bf16.mxu0 0
      %2295 = vmatpush1.bf16.xpose.msra.mxu0 0
      %2296 = vmatprep.subr.bf16.mxu0 0
      %2297 = vmatpush1.bf16.xpose.msra.mxu0 0
      %2298 = vmatprep.subr.bf16.mxu0 0
      %2299 = vmatpush1.bf16.xpose.msra.mxu0 0
      %2300 = vmatprep.subr.bf16.mxu0 0
      %2301 = vmatpush1.bf16.xpose.msra.mxu0 0
      %2302 = vmatprep.subr.bf16.mxu0 0
      %2303 = vmatpush1.bf16.xpose.msra.mxu0 0
      %2304 = vmatprep.subr.bf16.mxu0 0
      %2305 = vmatpush1.bf16.xpose.msra.mxu0 0
      %2306 = vmatprep.subr.bf16.mxu0 0
      %2307 = vmatpush1.bf16.xpose.msra.mxu0 0
      %2308 = vmatprep.mubr.bf16.mxu0 0
      %2309 = vmatmul.mubr.bf16.gmra.mrb[0].mxu0 %v2271
      %v2310 = vpop.f32.mrb[0].mxu0
      %v2311 = vadd.f32 0.0, %v2310
      %v2312 = vpop.f32.mrb[0].mxu0
      %v2313 = vpop.f32.mrb[0].mxu0
      %v2314 = vpop.f32.mrb[0].mxu0
      %2315 = vdwg.mxu0
      %v2316 = vmul.f32 %v2311, 0.17677669
      %v2317 = vsel %vm855, %v2316, -inf
      %2318 = vmax.xlane.f32.xlu0 %v2317
      %v2319 = vpop.xlane.xlu0 %2318
      %v2320 = vsub.f32 %v2316, %v2319
      %v2321 = vmul.f32 %v2320, 1.442695
      %v2322 = vpow.pop %v2321
      %v2323 = vsel %vm855, %v2322, 0.0
      %2324 = vadd.xlane.f32.xlu0 %v2323
      %v2325 = vpop.xlane.xlu0 %2324
      %v2326 = vrcp.pop %v2325
      %v2327 = vmul.f32 %v2322, %v2326
      %v2328 = vpack.c.bf16 %v2327, %v2327
      %2329 = vrot.lane.b32.xlu0 %v2105, 64
      %v2330 = vpop.permute.xlu0 %2329
      %v2332 = vsel %vm855, %v2328, 0
      %v2335 = vsel %vm872, %v2330, 0
      %2337 = vmatprep.subr.bf16.mxu0 0
      %2338 = vmatpush1.bf16.msra.mxu0 %v2335
      %2339 = vmatprep.subr.bf16.mxu0 0
      %2340 = vmatpush1.bf16.msra.mxu0 0
      %2341 = vmatprep.subr.bf16.mxu0 0
      %2342 = vmatpush1.bf16.msra.mxu0 0
      %2343 = vmatprep.subr.bf16.mxu0 0
      %2344 = vmatpush1.bf16.msra.mxu0 0
      %2345 = vmatprep.subr.bf16.mxu0 0
      %2346 = vmatpush1.bf16.msra.mxu0 0
      %2347 = vmatprep.subr.bf16.mxu0 0
      %2348 = vmatpush1.bf16.msra.mxu0 0
      %2349 = vmatprep.subr.bf16.mxu0 0
      %2350 = vmatpush1.bf16.msra.mxu0 0
      %2351 = vmatprep.subr.bf16.mxu0 0
      %2352 = vmatpush1.bf16.msra.mxu0 0
      %2353 = vmatprep.subr.bf16.mxu0 0
      %2354 = vmatpush1.bf16.msra.mxu0 0
      %2355 = vmatprep.subr.bf16.mxu0 0
      %2356 = vmatpush1.bf16.msra.mxu0 0
      %2357 = vmatprep.subr.bf16.mxu0 0
      %2358 = vmatpush1.bf16.msra.mxu0 0
      %2359 = vmatprep.subr.bf16.mxu0 0
      %2360 = vmatpush1.bf16.msra.mxu0 0
      %2361 = vmatprep.subr.bf16.mxu0 0
      %2362 = vmatpush1.bf16.msra.mxu0 0
      %2363 = vmatprep.subr.bf16.mxu0 0
      %2364 = vmatpush1.bf16.msra.mxu0 0
      %2365 = vmatprep.subr.bf16.mxu0 0
      %2366 = vmatpush1.bf16.msra.mxu0 0
      %2367 = vmatprep.subr.bf16.mxu0 0
      %2368 = vmatpush1.bf16.msra.mxu0 0
      %2369 = vmatprep.mubr.bf16.mxu0 0
      %2370 = vmatmul.mubr.bf16.gmra.mrb[0].mxu0 %v2332
      %v2371 = vpop.f32.mrb[0].mxu0
      %v2372 = vadd.f32 0.0, %v2371
      %v2373 = vpop.f32.mrb[0].mxu0
      %v2374 = vpop.f32.mrb[0].mxu0
      %v2375 = vpop.f32.mrb[0].mxu0
      %2376 = vdwg.mxu0
      %2377 = vrot.lane.b32.xlu0 %v2044, 32
      %v2378 = vpop.permute.xlu0 %2377
      %2379 = vrot.lane.b32.xlu0 %v2045, 32
      %v2380 = vpop.permute.xlu0 %2379
      %v2382 = vsel %vm807, %v2378, 0
      %v2385 = vsel %vm807, %v2380, 0
      %2387 = vmatprep.subr.bf16.mxu0 0
      %2388 = vmatpush1.bf16.xpose.msra.mxu0 %v2385
      %2389 = vmatprep.subr.bf16.mxu0 0
      %2390 = vmatpush1.bf16.xpose.msra.mxu0 0
      %2391 = vmatprep.subr.bf16.mxu0 0
      %2392 = vmatpush1.bf16.xpose.msra.mxu0 0
      %2393 = vmatprep.subr.bf16.mxu0 0
      %2394 = vmatpush1.bf16.xpose.msra.mxu0 0
      %2395 = vmatprep.subr.bf16.mxu0 0
      %2396 = vmatpush1.bf16.xpose.msra.mxu0 0
      %2397 = vmatprep.subr.bf16.mxu0 0
      %2398 = vmatpush1.bf16.xpose.msra.mxu0 0
      %2399 = vmatprep.subr.bf16.mxu0 0
      %2400 = vmatpush1.bf16.xpose.msra.mxu0 0
      %2401 = vmatprep.subr.bf16.mxu0 0
      %2402 = vmatpush1.bf16.xpose.msra.mxu0 0
      %2403 = vmatprep.subr.bf16.mxu0 0
      %2404 = vmatpush1.bf16.xpose.msra.mxu0 0
      %2405 = vmatprep.subr.bf16.mxu0 0
      %2406 = vmatpush1.bf16.xpose.msra.mxu0 0
      %2407 = vmatprep.subr.bf16.mxu0 0
      %2408 = vmatpush1.bf16.xpose.msra.mxu0 0
      %2409 = vmatprep.subr.bf16.mxu0 0
      %2410 = vmatpush1.bf16.xpose.msra.mxu0 0
      %2411 = vmatprep.subr.bf16.mxu0 0
      %2412 = vmatpush1.bf16.xpose.msra.mxu0 0
      %2413 = vmatprep.subr.bf16.mxu0 0
      %2414 = vmatpush1.bf16.xpose.msra.mxu0 0
      %2415 = vmatprep.subr.bf16.mxu0 0
      %2416 = vmatpush1.bf16.xpose.msra.mxu0 0
      %2417 = vmatprep.subr.bf16.mxu0 0
      %2418 = vmatpush1.bf16.xpose.msra.mxu0 0
      %2419 = vmatprep.mubr.bf16.mxu0 0
      %2420 = vmatmul.mubr.bf16.gmra.mrb[0].mxu0 %v2382
      %v2421 = vpop.f32.mrb[0].mxu0
      %v2422 = vadd.f32 0.0, %v2421
      %v2423 = vpop.f32.mrb[0].mxu0
      %v2424 = vpop.f32.mrb[0].mxu0
      %v2425 = vpop.f32.mrb[0].mxu0
      %2426 = vdwg.mxu0
      %v2427 = vmul.f32 %v2422, 0.17677669
      %v2428 = vsel %vm855, %v2427, -inf
      %2429 = vmax.xlane.f32.xlu0 %v2428
      %v2430 = vpop.xlane.xlu0 %2429
      %v2431 = vsub.f32 %v2427, %v2430
      %v2432 = vmul.f32 %v2431, 1.442695
      %v2433 = vpow.pop %v2432
      %v2434 = vsel %vm855, %v2433, 0.0
      %2435 = vadd.xlane.f32.xlu0 %v2434
      %v2436 = vpop.xlane.xlu0 %2435
      %v2437 = vrcp.pop %v2436
      %v2438 = vmul.f32 %v2433, %v2437
      %v2439 = vpack.c.bf16 %v2438, %v2438
      %2440 = vrot.lane.b32.xlu0 %v2105, 32
      %v2441 = vpop.permute.xlu0 %2440
      %v2443 = vsel %vm855, %v2439, 0
      %v2446 = vsel %vm872, %v2441, 0
      %2448 = vmatprep.subr.bf16.mxu0 0
      %2449 = vmatpush1.bf16.msra.mxu0 %v2446
      %2450 = vmatprep.subr.bf16.mxu0 0
      %2451 = vmatpush1.bf16.msra.mxu0 0
      %2452 = vmatprep.subr.bf16.mxu0 0
      %2453 = vmatpush1.bf16.msra.mxu0 0
      %2454 = vmatprep.subr.bf16.mxu0 0
      %2455 = vmatpush1.bf16.msra.mxu0 0
      %2456 = vmatprep.subr.bf16.mxu0 0
      %2457 = vmatpush1.bf16.msra.mxu0 0
      %2458 = vmatprep.subr.bf16.mxu0 0
      %2459 = vmatpush1.bf16.msra.mxu0 0
      %2460 = vmatprep.subr.bf16.mxu0 0
      %2461 = vmatpush1.bf16.msra.mxu0 0
      %2462 = vmatprep.subr.bf16.mxu0 0
      %2463 = vmatpush1.bf16.msra.mxu0 0
      %2464 = vmatprep.subr.bf16.mxu0 0
      %2465 = vmatpush1.bf16.msra.mxu0 0
      %2466 = vmatprep.subr.bf16.mxu0 0
      %2467 = vmatpush1.bf16.msra.mxu0 0
      %2468 = vmatprep.subr.bf16.mxu0 0
      %2469 = vmatpush1.bf16.msra.mxu0 0
      %2470 = vmatprep.subr.bf16.mxu0 0
      %2471 = vmatpush1.bf16.msra.mxu0 0
      %2472 = vmatprep.subr.bf16.mxu0 0
      %2473 = vmatpush1.bf16.msra.mxu0 0
      %2474 = vmatprep.subr.bf16.mxu0 0
      %2475 = vmatpush1.bf16.msra.mxu0 0
      %2476 = vmatprep.subr.bf16.mxu0 0
      %2477 = vmatpush1.bf16.msra.mxu0 0
      %2478 = vmatprep.subr.bf16.mxu0 0
      %2479 = vmatpush1.bf16.msra.mxu0 0
      %2480 = vmatprep.mubr.bf16.mxu0 0
      %2481 = vmatmul.mubr.bf16.gmra.mrb[0].mxu0 %v2443
      %v2482 = vpop.f32.mrb[0].mxu0
      %v2483 = vadd.f32 0.0, %v2482
      %v2484 = vpop.f32.mrb[0].mxu0
      %v2485 = vpop.f32.mrb[0].mxu0
      %v2486 = vpop.f32.mrb[0].mxu0
      %2487 = vdwg.mxu0
      %2489 = vrot.lane.b32.xlu0 %v2261, 32
      %v2490 = vpop.permute.xlu0 %2489
      %2493 = vrot.lane.b32.xlu0 %v2372, 64
      %v2494 = vpop.permute.xlu0 %2493
      %2497 = vrot.lane.b32.xlu0 %v2483, 96
      %v2498 = vpop.permute.xlu0 %2497
      %v2500 = vsel %vm807, %v2147, %v2490
      %v2501 = vsel %vm1265, %v2500, %v2494
      %v2502 = vsel %vm1267, %v2501, %v2498
      %s2503 = scalar_lea.vmem %s3, 64
      %v2504 = vld [vmem:[%s2503] sm:$0xf]
      %v2505 = vld [vmem:[%s2503 + $0x4] sm:$0xf]
      %v2506 = vld [vmem:[%s2503 + $0x8] sm:$0xf]
      %v2507 = vld [vmem:[%s2503 + $0xc] sm:$0xf]
      %v2508 = vld [vmem:[%s2503 + $0x10] sm:$0xf]
      %v2509 = vld [vmem:[%s2503 + $0x14] sm:$0xf]
      %v2510 = vld [vmem:[%s2503 + $0x18] sm:$0xf]
      %v2511 = vld [vmem:[%s2503 + $0x1c] sm:$0xf]
      %v2512 = vld [vmem:[%s2503 + $0x20] sm:$0xf]
      %v2513 = vld [vmem:[%s2503 + $0x24] sm:$0xf]
      %v2514 = vld [vmem:[%s2503 + $0x28] sm:$0xf]
      %v2515 = vld [vmem:[%s2503 + $0x2c] sm:$0xf]
      %v2516 = vld [vmem:[%s2503 + $0x30] sm:$0xf]
      %v2517 = vld [vmem:[%s2503 + $0x34] sm:$0xf]
      %v2518 = vld [vmem:[%s2503 + $0x38] sm:$0xf]
      %v2519 = vld [vmem:[%s2503 + $0x3c] sm:$0xf]
      %v2520 = vpack.c.bf16 %v2502, %v2502
      %s2521 = scalar_lea.vmem %s4, 1
      %v2522 = vld [vmem:[%s2521] sm:$0x1]
      %v2524 = vlaneseq
      %v2525 = vshrl.u32 %v2524, 7
      %v2526 = vsub.s32 0, %v2525
      %v2527 = vrot.slane %v2522, %v2526
      %v2545 = vunpack.c.l.b16 %v2504
      %v2546 = vunpack.c.l.b16 %v2505
      %v2547 = vunpack.c.l.b16 %v2506
      %v2548 = vunpack.c.l.b16 %v2507
      %v2549 = vunpack.c.l.b16 %v2508
      %v2550 = vunpack.c.l.b16 %v2509
      %v2551 = vunpack.c.l.b16 %v2510
      %v2552 = vunpack.c.l.b16 %v2511
      %v2553 = vunpack.c.l.b16 %v2512
      %v2554 = vunpack.c.l.b16 %v2513
      %v2555 = vunpack.c.l.b16 %v2514
      %v2556 = vunpack.c.l.b16 %v2515
      %v2557 = vunpack.c.l.b16 %v2516
      %v2558 = vunpack.c.l.b16 %v2517
      %v2559 = vunpack.c.l.b16 %v2518
      %v2560 = vunpack.c.l.b16 %v2519
      %v2561 = vpack.c.b16 %v2546, %v2545
      %v2562 = vpack.c.b16 %v2548, %v2547
      %v2563 = vpack.c.b16 %v2550, %v2549
      %v2564 = vpack.c.b16 %v2552, %v2551
      %v2565 = vpack.c.b16 %v2554, %v2553
      %v2566 = vpack.c.b16 %v2556, %v2555
      %v2567 = vpack.c.b16 %v2558, %v2557
      %v2568 = vpack.c.b16 %v2560, %v2559
      %2577 = vmatprep.subr.bf16.mxu0 0
      %2578 = vmatpush1.bf16.msra.mxu0 %v2561
      %2579 = vmatprep.subr.bf16.mxu0 0
      %2580 = vmatpush1.bf16.msra.mxu0 %v2562
      %2581 = vmatprep.subr.bf16.mxu0 0
      %2582 = vmatpush1.bf16.msra.mxu0 %v2563
      %2583 = vmatprep.subr.bf16.mxu0 0
      %2584 = vmatpush1.bf16.msra.mxu0 %v2564
      %2585 = vmatprep.subr.bf16.mxu0 0
      %2586 = vmatpush1.bf16.msra.mxu0 %v2565
      %2587 = vmatprep.subr.bf16.mxu0 0
      %2588 = vmatpush1.bf16.msra.mxu0 %v2566
      %2589 = vmatprep.subr.bf16.mxu0 0
      %2590 = vmatpush1.bf16.msra.mxu0 %v2567
      %2591 = vmatprep.subr.bf16.mxu0 0
      %2592 = vmatpush1.bf16.msra.mxu0 %v2568
      %2593 = vmatprep.subr.bf16.mxu0 0
      %2594 = vmatpush1.bf16.msra.mxu0 0
      %2595 = vmatprep.subr.bf16.mxu0 0
      %2596 = vmatpush1.bf16.msra.mxu0 0
      %2597 = vmatprep.subr.bf16.mxu0 0
      %2598 = vmatpush1.bf16.msra.mxu0 0
      %2599 = vmatprep.subr.bf16.mxu0 0
      %2600 = vmatpush1.bf16.msra.mxu0 0
      %2601 = vmatprep.subr.bf16.mxu0 0
      %2602 = vmatpush1.bf16.msra.mxu0 0
      %2603 = vmatprep.subr.bf16.mxu0 0
      %2604 = vmatpush1.bf16.msra.mxu0 0
      %2605 = vmatprep.subr.bf16.mxu0 0
      %2606 = vmatpush1.bf16.msra.mxu0 0
      %2607 = vmatprep.subr.bf16.mxu0 0
      %2608 = vmatpush1.bf16.msra.mxu0 0
      %2609 = vmatprep.mubr.bf16.mxu0 0
      %2610 = vmatmul.mubr.bf16.gmra.mrb[0].mxu0 %v2520
      %v2611 = vpop.f32.mrb[0].mxu0
      %v2612 = vadd.f32 %v2527, %v2611
      %v2613 = vpop.f32.mrb[0].mxu0
      %v2614 = vpop.f32.mrb[0].mxu0
      %v2615 = vpop.f32.mrb[0].mxu0
      %2616 = vdwg.mxu0
      %v2617 = vadd.f32 %v1782, %v2612
      %s2618 = scalar_lea.vmem %s5, 1
      %v2619 = vld [vmem:[%s2618] sm:$0x1]
      %s2620 = scalar_lea.vmem %s6, 1
      %v2621 = vld [vmem:[%s2620] sm:$0x1]
      %2622 = vadd.xlane.f32.xlu0 %v2617
      %v2623 = vpop.xlane.xlu0 %2622
      %v2624 = vmul.f32 %v2623, %v1386
      %v2625 = vsub.f32 %v2617, %v2624
      %v2626 = vmul.f32 %v2625, %v2625
      %2627 = vadd.xlane.f32.xlu0 %v2626
      %v2628 = vpop.xlane.xlu0 %2627
      %v2629 = vmul.f32 %v2628, %v1386
      %v2630 = vadd.f32 %v2629, 1e-05
      %v2631 = vrsqrt.pop %v2630
      %v2632 = vmul.f32 %v2625, %v2631
      %v2634 = vlaneseq
      %v2635 = vshrl.u32 %v2634, 7
      %v2636 = vsub.s32 0, %v2635
      %v2637 = vrot.slane %v2619, %v2636
      %v2639 = vmul.f32 %v2632, %v2637
      %v2641 = vlaneseq
      %v2642 = vshrl.u32 %v2641, 7
      %v2643 = vsub.s32 0, %v2642
      %v2644 = vrot.slane %v2621, %v2643
      %v2646 = vadd.f32 %v2639, %v2644
      %s2647 = scalar_lea.vmem %s7, 128
      %v2648 = vld [vmem:[%s2647] sm:$0xff]
      %v2649 = vld [vmem:[%s2647 + $0x8] sm:$0xff]
      %v2650 = vld [vmem:[%s2647 + $0x10] sm:$0xff]
      %v2651 = vld [vmem:[%s2647 + $0x18] sm:$0xff]
      %v2652 = vld [vmem:[%s2647 + $0x20] sm:$0xff]
      %v2653 = vld [vmem:[%s2647 + $0x28] sm:$0xff]
      %v2654 = vld [vmem:[%s2647 + $0x30] sm:$0xff]
      %v2655 = vld [vmem:[%s2647 + $0x38] sm:$0xff]
      %v2656 = vld [vmem:[%s2647 + $0x40] sm:$0xff]
      %v2657 = vld [vmem:[%s2647 + $0x48] sm:$0xff]
      %v2658 = vld [vmem:[%s2647 + $0x50] sm:$0xff]
      %v2659 = vld [vmem:[%s2647 + $0x58] sm:$0xff]
      %v2660 = vld [vmem:[%s2647 + $0x60] sm:$0xff]
      %v2661 = vld [vmem:[%s2647 + $0x68] sm:$0xff]
      %v2662 = vld [vmem:[%s2647 + $0x70] sm:$0xff]
      %v2663 = vld [vmem:[%s2647 + $0x78] sm:$0xff]
      %v2664 = vpack.c.bf16 %v2646, %v2646
      %s2665 = scalar_lea.vmem %s8, 2
      %v2666 = vld [vmem:[%s2665] sm:$0x3]
      %v2668 = vlaneseq
      %v2669 = vshrl.u32 %v2668, 7
      %v2670 = vsub.s32 0, %v2669
      %v2671 = vrot.slane %v2666, %v2670
      %v2672 = vlaneseq
      %v2673 = vshrl.u32 %v2672, 7
      %v2674 = vsub.s32 1, %v2673
      %v2675 = vrot.slane %v2666, %v2674
      %v2694 = vunpack.c.l.b16 %v2648
      %v2695 = vunpack.c.h.b16 %v2648
      %v2696 = vunpack.c.l.b16 %v2649
      %v2697 = vunpack.c.h.b16 %v2649
      %v2698 = vunpack.c.l.b16 %v2650
      %v2699 = vunpack.c.h.b16 %v2650
      %v2700 = vunpack.c.l.b16 %v2651
      %v2701 = vunpack.c.h.b16 %v2651
      %v2702 = vunpack.c.l.b16 %v2652
      %v2703 = vunpack.c.h.b16 %v2652
      %v2704 = vunpack.c.l.b16 %v2653
      %v2705 = vunpack.c.h.b16 %v2653
      %v2706 = vunpack.c.l.b16 %v2654
      %v2707 = vunpack.c.h.b16 %v2654
      %v2708 = vunpack.c.l.b16 %v2655
      %v2709 = vunpack.c.h.b16 %v2655
      %v2710 = vunpack.c.l.b16 %v2656
      %v2711 = vunpack.c.h.b16 %v2656
      %v2712 = vunpack.c.l.b16 %v2657
      %v2713 = vunpack.c.h.b16 %v2657
      %v2714 = vunpack.c.l.b16 %v2658
      %v2715 = vunpack.c.h.b16 %v2658
      %v2716 = vunpack.c.l.b16 %v2659
      %v2717 = vunpack.c.h.b16 %v2659
      %v2718 = vunpack.c.l.b16 %v2660
      %v2719 = vunpack.c.h.b16 %v2660
      %v2720 = vunpack.c.l.b16 %v2661
      %v2721 = vunpack.c.h.b16 %v2661
      %v2722 = vunpack.c.l.b16 %v2662
      %v2723 = vunpack.c.h.b16 %v2662
      %v2724 = vunpack.c.l.b16 %v2663
      %v2725 = vunpack.c.h.b16 %v2663
      %v2726 = vpack.c.b16 %v2696, %v2694
      %v2727 = vpack.c.b16 %v2697, %v2695
      %v2728 = vpack.c.b16 %v2700, %v2698
      %v2729 = vpack.c.b16 %v2701, %v2699
      %v2730 = vpack.c.b16 %v2704, %v2702
      %v2731 = vpack.c.b16 %v2705, %v2703
      %v2732 = vpack.c.b16 %v2708, %v2706
      %v2733 = vpack.c.b16 %v2709, %v2707
      %v2734 = vpack.c.b16 %v2712, %v2710
      %v2735 = vpack.c.b16 %v2713, %v2711
      %v2736 = vpack.c.b16 %v2716, %v2714
      %v2737 = vpack.c.b16 %v2717, %v2715
      %v2738 = vpack.c.b16 %v2720, %v2718
      %v2739 = vpack.c.b16 %v2721, %v2719
      %v2740 = vpack.c.b16 %v2724, %v2722
      %v2741 = vpack.c.b16 %v2725, %v2723
      %2758 = vmatprep.subr.bf16.mxu0 %v2727
      %2759 = vmatpush1.bf16.msra.mxu0 %v2726
      %2760 = vmatprep.subr.bf16.mxu0 %v2729
      %2761 = vmatpush1.bf16.msra.mxu0 %v2728
      %2762 = vmatprep.subr.bf16.mxu0 %v2731
      %2763 = vmatpush1.bf16.msra.mxu0 %v2730
      %2764 = vmatprep.subr.bf16.mxu0 %v2733
      %2765 = vmatpush1.bf16.msra.mxu0 %v2732
      %2766 = vmatprep.subr.bf16.mxu0 %v2735
      %2767 = vmatpush1.bf16.msra.mxu0 %v2734
      %2768 = vmatprep.subr.bf16.mxu0 %v2737
      %2769 = vmatpush1.bf16.msra.mxu0 %v2736
      %2770 = vmatprep.subr.bf16.mxu0 %v2739
      %2771 = vmatpush1.bf16.msra.mxu0 %v2738
      %2772 = vmatprep.subr.bf16.mxu0 %v2741
      %2773 = vmatpush1.bf16.msra.mxu0 %v2740
      %2774 = vmatprep.subr.bf16.mxu0 0
      %2775 = vmatpush1.bf16.msra.mxu0 0
      %2776 = vmatprep.subr.bf16.mxu0 0
      %2777 = vmatpush1.bf16.msra.mxu0 0
      %2778 = vmatprep.subr.bf16.mxu0 0
      %2779 = vmatpush1.bf16.msra.mxu0 0
      %2780 = vmatprep.subr.bf16.mxu0 0
      %2781 = vmatpush1.bf16.msra.mxu0 0
      %2782 = vmatprep.subr.bf16.mxu0 0
      %2783 = vmatpush1.bf16.msra.mxu0 0
      %2784 = vmatprep.subr.bf16.mxu0 0
      %2785 = vmatpush1.bf16.msra.mxu0 0
      %2786 = vmatprep.subr.bf16.mxu0 0
      %2787 = vmatpush1.bf16.msra.mxu0 0
      %2788 = vmatprep.subr.bf16.mxu0 0
      %2789 = vmatpush1.bf16.msra.mxu0 0
      %2790 = vmatprep.mubr.bf16.mxu0 0
      %2791 = vmatmul.mubr.bf16.gmra.mrb[0].mxu0 %v2664
      %v2792 = vpop.f32.mrb[0].mxu0
      %v2793 = vadd.f32 %v2671, %v2792
      %v2794 = vpop.f32.mrb[0].mxu0
      %v2795 = vadd.f32 %v2675, %v2794
      %v2796 = vpop.f32.mrb[0].mxu0
      %v2797 = vpop.f32.mrb[0].mxu0
      %2798 = vdwg.mxu0
      %v2799 = vmul.f32 %v2793, %v2793
      %v2800 = vmul.f32 %v2795, %v2795
      %v2801 = vmul.f32 %v2793, %v2799
      %v2802 = vmul.f32 %v2795, %v2800
      %v2803 = vmul.f32 %v2801, 0.044715
      %v2804 = vmul.f32 %v2802, 0.044715
      %v2805 = vadd.f32 %v2793, %v2803
      %v2806 = vadd.f32 %v2795, %v2804
      %v2807 = vmul.f32 %v2805, 0.7978846
      %v2808 = vmul.f32 %v2806, 0.7978846
      %v2809 = vtanh.pop %v2807
      %v2810 = vtanh.pop %v2808
      %v2811 = vadd.f32 %v2809, 1.0
      %v2812 = vadd.f32 %v2810, 1.0
      %v2813 = vmul.f32 %v2811, 0.5
      %v2814 = vmul.f32 %v2812, 0.5
      %v2815 = vmul.f32 %v2793, %v2813
      %v2816 = vmul.f32 %v2795, %v2814
      %s2817 = scalar_lea.vmem %s9, 128
      %v2818 = vld [vmem:[%s2817] sm:$0xf]
      %v2819 = vld [vmem:[%s2817 + $0x4] sm:$0xf]
      %v2820 = vld [vmem:[%s2817 + $0x8] sm:$0xf]
      %v2821 = vld [vmem:[%s2817 + $0xc] sm:$0xf]
      %v2822 = vld [vmem:[%s2817 + $0x10] sm:$0xf]
      %v2823 = vld [vmem:[%s2817 + $0x14] sm:$0xf]
      %v2824 = vld [vmem:[%s2817 + $0x18] sm:$0xf]
      %v2825 = vld [vmem:[%s2817 + $0x1c] sm:$0xf]
      %v2826 = vld [vmem:[%s2817 + $0x20] sm:$0xf]
      %v2827 = vld [vmem:[%s2817 + $0x24] sm:$0xf]
      %v2828 = vld [vmem:[%s2817 + $0x28] sm:$0xf]
      %v2829 = vld [vmem:[%s2817 + $0x2c] sm:$0xf]
      %v2830 = vld [vmem:[%s2817 + $0x30] sm:$0xf]
      %v2831 = vld [vmem:[%s2817 + $0x34] sm:$0xf]
      %v2832 = vld [vmem:[%s2817 + $0x38] sm:$0xf]
      %v2833 = vld [vmem:[%s2817 + $0x3c] sm:$0xf]
      %v2834 = vld [vmem:[%s2817 + $0x40] sm:$0xf]
      %v2835 = vld [vmem:[%s2817 + $0x44] sm:$0xf]
      %v2836 = vld [vmem:[%s2817 + $0x48] sm:$0xf]
      %v2837 = vld [vmem:[%s2817 + $0x4c] sm:$0xf]
      %v2838 = vld [vmem:[%s2817 + $0x50] sm:$0xf]
      %v2839 = vld [vmem:[%s2817 + $0x54] sm:$0xf]
      %v2840 = vld [vmem:[%s2817 + $0x58] sm:$0xf]
      %v2841 = vld [vmem:[%s2817 + $0x5c] sm:$0xf]
      %v2842 = vld [vmem:[%s2817 + $0x60] sm:$0xf]
      %v2843 = vld [vmem:[%s2817 + $0x64] sm:$0xf]
      %v2844 = vld [vmem:[%s2817 + $0x68] sm:$0xf]
      %v2845 = vld [vmem:[%s2817 + $0x6c] sm:$0xf]
      %v2846 = vld [vmem:[%s2817 + $0x70] sm:$0xf]
      %v2847 = vld [vmem:[%s2817 + $0x74] sm:$0xf]
      %v2848 = vld [vmem:[%s2817 + $0x78] sm:$0xf]
      %v2849 = vld [vmem:[%s2817 + $0x7c] sm:$0xf]
      %v2850 = vpack.c.bf16 %v2815, %v2815
      %v2851 = vpack.c.bf16 %v2816, %v2816
      %s2852 = scalar_lea.vmem %s10, 1
      %v2853 = vld [vmem:[%s2852] sm:$0x1]
      %v2855 = vlaneseq
      %v2856 = vshrl.u32 %v2855, 7
      %v2857 = vsub.s32 0, %v2856
      %v2858 = vrot.slane %v2853, %v2857
      %v2892 = vunpack.c.l.b16 %v2818
      %v2893 = vunpack.c.l.b16 %v2819
      %v2894 = vunpack.c.l.b16 %v2820
      %v2895 = vunpack.c.l.b16 %v2821
      %v2896 = vunpack.c.l.b16 %v2822
      %v2897 = vunpack.c.l.b16 %v2823
      %v2898 = vunpack.c.l.b16 %v2824
      %v2899 = vunpack.c.l.b16 %v2825
      %v2900 = vunpack.c.l.b16 %v2826
      %v2901 = vunpack.c.l.b16 %v2827
      %v2902 = vunpack.c.l.b16 %v2828
      %v2903 = vunpack.c.l.b16 %v2829
      %v2904 = vunpack.c.l.b16 %v2830
      %v2905 = vunpack.c.l.b16 %v2831
      %v2906 = vunpack.c.l.b16 %v2832
      %v2907 = vunpack.c.l.b16 %v2833
      %v2908 = vunpack.c.l.b16 %v2834
      %v2909 = vunpack.c.l.b16 %v2835
      %v2910 = vunpack.c.l.b16 %v2836
      %v2911 = vunpack.c.l.b16 %v2837
      %v2912 = vunpack.c.l.b16 %v2838
      %v2913 = vunpack.c.l.b16 %v2839
      %v2914 = vunpack.c.l.b16 %v2840
      %v2915 = vunpack.c.l.b16 %v2841
      %v2916 = vunpack.c.l.b16 %v2842
      %v2917 = vunpack.c.l.b16 %v2843
      %v2918 = vunpack.c.l.b16 %v2844
      %v2919 = vunpack.c.l.b16 %v2845
      %v2920 = vunpack.c.l.b16 %v2846
      %v2921 = vunpack.c.l.b16 %v2847
      %v2922 = vunpack.c.l.b16 %v2848
      %v2923 = vunpack.c.l.b16 %v2849
      %v2924 = vpack.c.b16 %v2893, %v2892
      %v2925 = vpack.c.b16 %v2895, %v2894
      %v2926 = vpack.c.b16 %v2897, %v2896
      %v2927 = vpack.c.b16 %v2899, %v2898
      %v2928 = vpack.c.b16 %v2901, %v2900
      %v2929 = vpack.c.b16 %v2903, %v2902
      %v2930 = vpack.c.b16 %v2905, %v2904
      %v2931 = vpack.c.b16 %v2907, %v2906
      %v2932 = vpack.c.b16 %v2909, %v2908
      %v2933 = vpack.c.b16 %v2911, %v2910
      %v2934 = vpack.c.b16 %v2913, %v2912
      %v2935 = vpack.c.b16 %v2915, %v2914
      %v2936 = vpack.c.b16 %v2917, %v2916
      %v2937 = vpack.c.b16 %v2919, %v2918
      %v2938 = vpack.c.b16 %v2921, %v2920
      %v2939 = vpack.c.b16 %v2923, %v2922
      %2956 = vmatprep.subr.bf16.mxu0 0
      %2957 = vmatpush1.bf16.msra.mxu0 %v2924
      %2958 = vmatprep.subr.bf16.mxu0 0
      %2959 = vmatpush1.bf16.msra.mxu0 %v2925
      %2960 = vmatprep.subr.bf16.mxu0 0
      %2961 = vmatpush1.bf16.msra.mxu0 %v2926
      %2962 = vmatprep.subr.bf16.mxu0 0
      %2963 = vmatpush1.bf16.msra.mxu0 %v2927
      %2964 = vmatprep.subr.bf16.mxu0 0
      %2965 = vmatpush1.bf16.msra.mxu0 %v2928
      %2966 = vmatprep.subr.bf16.mxu0 0
      %2967 = vmatpush1.bf16.msra.mxu0 %v2929
      %2968 = vmatprep.subr.bf16.mxu0 0
      %2969 = vmatpush1.bf16.msra.mxu0 %v2930
      %2970 = vmatprep.subr.bf16.mxu0 0
      %2971 = vmatpush1.bf16.msra.mxu0 %v2931
      %2972 = vmatprep.subr.bf16.mxu0 0
      %2973 = vmatpush1.bf16.msra.mxu0 %v2932
      %2974 = vmatprep.subr.bf16.mxu0 0
      %2975 = vmatpush1.bf16.msra.mxu0 %v2933
      %2976 = vmatprep.subr.bf16.mxu0 0
      %2977 = vmatpush1.bf16.msra.mxu0 %v2934
      %2978 = vmatprep.subr.bf16.mxu0 0
      %2979 = vmatpush1.bf16.msra.mxu0 %v2935
      %2980 = vmatprep.subr.bf16.mxu0 0
      %2981 = vmatpush1.bf16.msra.mxu0 %v2936
      %2982 = vmatprep.subr.bf16.mxu0 0
      %2983 = vmatpush1.bf16.msra.mxu0 %v2937
      %2984 = vmatprep.subr.bf16.mxu0 0
      %2985 = vmatpush1.bf16.msra.mxu0 %v2938
      %2986 = vmatprep.subr.bf16.mxu0 0
      %2987 = vmatpush1.bf16.msra.mxu0 %v2939
      %2988 = vmatprep.mubr.bf16.mxu0 %v2851
      %2989 = vmatmul.mubr.bf16.gmra.mrb[0].mxu0 %v2850
      %v2990 = vpop.f32.mrb[0].mxu0
      %v2991 = vadd.f32 %v2858, %v2990
      %v2992 = vpop.f32.mrb[0].mxu0
      %v2993 = vpop.f32.mrb[0].mxu0
      %v2994 = vpop.f32.mrb[0].mxu0
      %2995 = vdwg.mxu0
      %v2996 = vadd.f32 %v2646, %v2991
      %s2997 = scalar_lea.vmem %s11, 1
      %v2998 = vld [vmem:[%s2997] sm:$0x1]
      %s2999 = scalar_lea.vmem %s12, 1
      %v3000 = vld [vmem:[%s2999] sm:$0x1]
      %3001 = vadd.xlane.f32.xlu0 %v2996
      %v3002 = vpop.xlane.xlu0 %3001
      %v3003 = vmul.f32 %v3002, %v1386
      %v3004 = vsub.f32 %v2996, %v3003
      %v3005 = vmul.f32 %v3004, %v3004
      %3006 = vadd.xlane.f32.xlu0 %v3005
      %v3007 = vpop.xlane.xlu0 %3006
      %v3008 = vmul.f32 %v3007, %v1386
      %v3009 = vadd.f32 %v3008, 1e-05
      %v3010 = vrsqrt.pop %v3009
      %v3011 = vmul.f32 %v3004, %v3010
      %v3013 = vlaneseq
      %v3014 = vshrl.u32 %v3013, 7
      %v3015 = vsub.s32 0, %v3014
      %v3016 = vrot.slane %v2998, %v3015
      %v3018 = vmul.f32 %v3011, %v3016
      %v3020 = vlaneseq
      %v3021 = vshrl.u32 %v3020, 7
      %v3022 = vsub.s32 0, %v3021
      %v3023 = vrot.slane %v3000, %v3022
      %v3025 = vadd.f32 %v3018, %v3023
      %v3026 = vrot.slane %v3025, 4
      %v3027 = vadd.f32 %v3025, %v3026
      %v3028 = vrot.slane %v3027, 2
      %v3029 = vadd.f32 %v3027, %v3028
      %v3030 = vrot.slane %v3029, 1
      %v3031 = vadd.f32 %v3029, %v3030
      %v3032 = vmul.f32 %v3031, 0.125
      %v3033 = vld [vmem:[%s13] sm:$0xff]
      %v3034 = vld [vmem:[%s13 + $0x8] sm:$0xff]
      %v3035 = vld [vmem:[%s13 + $0x10] sm:$0xff]
      %v3036 = vld [vmem:[%s13 + $0x18] sm:$0xff]
      %v3037 = vld [vmem:[%s13 + $0x20] sm:$0xff]
      %v3038 = vld [vmem:[%s13 + $0x28] sm:$0xff]
      %v3039 = vld [vmem:[%s13 + $0x30] sm:$0xff]
      %v3040 = vld [vmem:[%s13 + $0x38] sm:$0xff]
      %v3041 = vld [vmem:[%s13 + $0x40] sm:$0xff]
      %v3042 = vld [vmem:[%s13 + $0x48] sm:$0xff]
      %v3043 = vld [vmem:[%s13 + $0x50] sm:$0xff]
      %v3044 = vld [vmem:[%s13 + $0x58] sm:$0xff]
      %v3045 = vld [vmem:[%s13 + $0x60] sm:$0xff]
      %v3046 = vld [vmem:[%s13 + $0x68] sm:$0xff]
      %v3047 = vld [vmem:[%s13 + $0x70] sm:$0xff]
      %v3048 = vld [vmem:[%s13 + $0x78] sm:$0xff]
      %v3049 = vpack.c.bf16 %v3032, %v3032
      %v3050 = vld [vmem:[%s14] sm:$0x3]
      %v3067 = vunpack.c.l.b16 %v3033
      %v3068 = vunpack.c.h.b16 %v3033
      %v3069 = vunpack.c.l.b16 %v3034
      %v3070 = vunpack.c.h.b16 %v3034
      %v3071 = vunpack.c.l.b16 %v3035
      %v3072 = vunpack.c.h.b16 %v3035
      %v3073 = vunpack.c.l.b16 %v3036
      %v3074 = vunpack.c.h.b16 %v3036
      %v3075 = vunpack.c.l.b16 %v3037
      %v3076 = vunpack.c.h.b16 %v3037
      %v3077 = vunpack.c.l.b16 %v3038
      %v3078 = vunpack.c.h.b16 %v3038
      %v3079 = vunpack.c.l.b16 %v3039
      %v3080 = vunpack.c.h.b16 %v3039
      %v3081 = vunpack.c.l.b16 %v3040
      %v3082 = vunpack.c.h.b16 %v3040
      %v3083 = vunpack.c.l.b16 %v3041
      %v3084 = vunpack.c.h.b16 %v3041
      %v3085 = vunpack.c.l.b16 %v3042
      %v3086 = vunpack.c.h.b16 %v3042
      %v3087 = vunpack.c.l.b16 %v3043
      %v3088 = vunpack.c.h.b16 %v3043
      %v3089 = vunpack.c.l.b16 %v3044
      %v3090 = vunpack.c.h.b16 %v3044
      %v3091 = vunpack.c.l.b16 %v3045
      %v3092 = vunpack.c.h.b16 %v3045
      %v3093 = vunpack.c.l.b16 %v3046
      %v3094 = vunpack.c.h.b16 %v3046
      %v3095 = vunpack.c.l.b16 %v3047
      %v3096 = vunpack.c.h.b16 %v3047
      %v3097 = vunpack.c.l.b16 %v3048
      %v3098 = vunpack.c.h.b16 %v3048
      %v3099 = vpack.c.b16 %v3069, %v3067
      %v3100 = vpack.c.b16 %v3070, %v3068
      %v3101 = vpack.c.b16 %v3073, %v3071
      %v3102 = vpack.c.b16 %v3074, %v3072
      %v3103 = vpack.c.b16 %v3077, %v3075
      %v3104 = vpack.c.b16 %v3078, %v3076
      %v3105 = vpack.c.b16 %v3081, %v3079
      %v3106 = vpack.c.b16 %v3082, %v3080
      %v3107 = vpack.c.b16 %v3085, %v3083
      %v3108 = vpack.c.b16 %v3086, %v3084
      %v3109 = vpack.c.b16 %v3089, %v3087
      %v3110 = vpack.c.b16 %v3090, %v3088
      %v3111 = vpack.c.b16 %v3093, %v3091
      %v3112 = vpack.c.b16 %v3094, %v3092
      %v3113 = vpack.c.b16 %v3097, %v3095
      %v3114 = vpack.c.b16 %v3098, %v3096
      %v3132 = vlaneseq
      %v3133 = vshrl.u32 %v3132, 7
      %v3134 = vsub.s32 0, %v3133
      %v3135 = vrot.slane %v3050, %v3134
      %v3136 = vlaneseq
      %v3137 = vshrl.u32 %v3136, 7
      %v3138 = vsub.s32 1, %v3137
      %v3139 = vrot.slane %v3050, %v3138
      %3142 = vmatprep.subr.bf16.mxu0 %v3100
      %3143 = vmatpush1.bf16.msra.mxu0 %v3099
      %3144 = vmatprep.subr.bf16.mxu0 %v3102
      %3145 = vmatpush1.bf16.msra.mxu0 %v3101
      %3146 = vmatprep.subr.bf16.mxu0 %v3104
      %3147 = vmatpush1.bf16.msra.mxu0 %v3103
      %3148 = vmatprep.subr.bf16.mxu0 %v3106
      %3149 = vmatpush1.bf16.msra.mxu0 %v3105
      %3150 = vmatprep.subr.bf16.mxu0 %v3108
      %3151 = vmatpush1.bf16.msra.mxu0 %v3107
      %3152 = vmatprep.subr.bf16.mxu0 %v3110
      %3153 = vmatpush1.bf16.msra.mxu0 %v3109
      %3154 = vmatprep.subr.bf16.mxu0 %v3112
      %3155 = vmatpush1.bf16.msra.mxu0 %v3111
      %3156 = vmatprep.subr.bf16.mxu0 %v3114
      %3157 = vmatpush1.bf16.msra.mxu0 %v3113
      %3158 = vmatprep.subr.bf16.mxu0 0
      %3159 = vmatpush1.bf16.msra.mxu0 0
      %3160 = vmatprep.subr.bf16.mxu0 0
      %3161 = vmatpush1.bf16.msra.mxu0 0
      %3162 = vmatprep.subr.bf16.mxu0 0
      %3163 = vmatpush1.bf16.msra.mxu0 0
      %3164 = vmatprep.subr.bf16.mxu0 0
      %3165 = vmatpush1.bf16.msra.mxu0 0
      %3166 = vmatprep.subr.bf16.mxu0 0
      %3167 = vmatpush1.bf16.msra.mxu0 0
      %3168 = vmatprep.subr.bf16.mxu0 0
      %3169 = vmatpush1.bf16.msra.mxu0 0
      %3170 = vmatprep.subr.bf16.mxu0 0
      %3171 = vmatpush1.bf16.msra.mxu0 0
      %3172 = vmatprep.subr.bf16.mxu0 0
      %3173 = vmatpush1.bf16.msra.mxu0 0
      %3174 = vmatprep.mubr.bf16.mxu0 0
      %3175 = vmatmul.mubr.bf16.gmra.mrb[0].mxu0 %v3049
      %v3176 = vpop.f32.mrb[0].mxu0
      %v3177 = vadd.f32 %v3135, %v3176
      %v3178 = vpop.f32.mrb[0].mxu0
      %v3179 = vadd.f32 %v3139, %v3178
      %v3180 = vpop.f32.mrb[0].mxu0
      %v3181 = vpop.f32.mrb[0].mxu0
      %3182 = vdwg.mxu0
      %v3183 = vmax.f32 %v3177, 0.0
      %v3184 = vmax.f32 %v3179, 0.0
      %v3185 = vld [vmem:[%s15] sm:$0xf]
      %v3186 = vld [vmem:[%s15 + $0x4] sm:$0xf]
      %v3187 = vld [vmem:[%s15 + $0x8] sm:$0xf]
      %v3188 = vld [vmem:[%s15 + $0xc] sm:$0xf]
      %v3189 = vld [vmem:[%s15 + $0x10] sm:$0xf]
      %v3190 = vld [vmem:[%s15 + $0x14] sm:$0xf]
      %v3191 = vld [vmem:[%s15 + $0x18] sm:$0xf]
      %v3192 = vld [vmem:[%s15 + $0x1c] sm:$0xf]
      %v3193 = vld [vmem:[%s15 + $0x20] sm:$0xf]
      %v3194 = vld [vmem:[%s15 + $0x24] sm:$0xf]
      %v3195 = vld [vmem:[%s15 + $0x28] sm:$0xf]
      %v3196 = vld [vmem:[%s15 + $0x2c] sm:$0xf]
      %v3197 = vld [vmem:[%s15 + $0x30] sm:$0xf]
      %v3198 = vld [vmem:[%s15 + $0x34] sm:$0xf]
      %v3199 = vld [vmem:[%s15 + $0x38] sm:$0xf]
      %v3200 = vld [vmem:[%s15 + $0x3c] sm:$0xf]
      %v3201 = vld [vmem:[%s15 + $0x40] sm:$0xf]
      %v3202 = vld [vmem:[%s15 + $0x44] sm:$0xf]
      %v3203 = vld [vmem:[%s15 + $0x48] sm:$0xf]
      %v3204 = vld [vmem:[%s15 + $0x4c] sm:$0xf]
      %v3205 = vld [vmem:[%s15 + $0x50] sm:$0xf]
      %v3206 = vld [vmem:[%s15 + $0x54] sm:$0xf]
      %v3207 = vld [vmem:[%s15 + $0x58] sm:$0xf]
      %v3208 = vld [vmem:[%s15 + $0x5c] sm:$0xf]
      %v3209 = vld [vmem:[%s15 + $0x60] sm:$0xf]
      %v3210 = vld [vmem:[%s15 + $0x64] sm:$0xf]
      %v3211 = vld [vmem:[%s15 + $0x68] sm:$0xf]
      %v3212 = vld [vmem:[%s15 + $0x6c] sm:$0xf]
      %v3213 = vld [vmem:[%s15 + $0x70] sm:$0xf]
      %v3214 = vld [vmem:[%s15 + $0x74] sm:$0xf]
      %v3215 = vld [vmem:[%s15 + $0x78] sm:$0xf]
      %v3216 = vld [vmem:[%s15 + $0x7c] sm:$0xf]
      %v3217 = vpack.c.bf16 %v3183, %v3183
      %v3218 = vpack.c.bf16 %v3184, %v3184
      %v3219 = vld [vmem:[%s16] sm:$0x1]
      %v3252 = vunpack.c.l.b16 %v3185
      %v3253 = vunpack.c.l.b16 %v3186
      %v3254 = vunpack.c.l.b16 %v3187
      %v3255 = vunpack.c.l.b16 %v3188
      %v3256 = vunpack.c.l.b16 %v3189
      %v3257 = vunpack.c.l.b16 %v3190
      %v3258 = vunpack.c.l.b16 %v3191
      %v3259 = vunpack.c.l.b16 %v3192
      %v3260 = vunpack.c.l.b16 %v3193
      %v3261 = vunpack.c.l.b16 %v3194
      %v3262 = vunpack.c.l.b16 %v3195
      %v3263 = vunpack.c.l.b16 %v3196
      %v3264 = vunpack.c.l.b16 %v3197
      %v3265 = vunpack.c.l.b16 %v3198
      %v3266 = vunpack.c.l.b16 %v3199
      %v3267 = vunpack.c.l.b16 %v3200
      %v3268 = vunpack.c.l.b16 %v3201
      %v3269 = vunpack.c.l.b16 %v3202
      %v3270 = vunpack.c.l.b16 %v3203
      %v3271 = vunpack.c.l.b16 %v3204
      %v3272 = vunpack.c.l.b16 %v3205
      %v3273 = vunpack.c.l.b16 %v3206
      %v3274 = vunpack.c.l.b16 %v3207
      %v3275 = vunpack.c.l.b16 %v3208
      %v3276 = vunpack.c.l.b16 %v3209
      %v3277 = vunpack.c.l.b16 %v3210
      %v3278 = vunpack.c.l.b16 %v3211
      %v3279 = vunpack.c.l.b16 %v3212
      %v3280 = vunpack.c.l.b16 %v3213
      %v3281 = vunpack.c.l.b16 %v3214
      %v3282 = vunpack.c.l.b16 %v3215
      %v3283 = vunpack.c.l.b16 %v3216
      %v3284 = vpack.c.b16 %v3253, %v3252
      %v3285 = vpack.c.b16 %v3255, %v3254
      %v3286 = vpack.c.b16 %v3257, %v3256
      %v3287 = vpack.c.b16 %v3259, %v3258
      %v3288 = vpack.c.b16 %v3261, %v3260
      %v3289 = vpack.c.b16 %v3263, %v3262
      %v3290 = vpack.c.b16 %v3265, %v3264
      %v3291 = vpack.c.b16 %v3267, %v3266
      %v3292 = vpack.c.b16 %v3269, %v3268
      %v3293 = vpack.c.b16 %v3271, %v3270
      %v3294 = vpack.c.b16 %v3273, %v3272
      %v3295 = vpack.c.b16 %v3275, %v3274
      %v3296 = vpack.c.b16 %v3277, %v3276
      %v3297 = vpack.c.b16 %v3279, %v3278
      %v3298 = vpack.c.b16 %v3281, %v3280
      %v3299 = vpack.c.b16 %v3283, %v3282
      %3316 = vmatprep.subr.bf16.mxu0 0
      %3317 = vmatpush1.bf16.msra.mxu0 %v3284
      %3318 = vmatprep.subr.bf16.mxu0 0
      %3319 = vmatpush1.bf16.msra.mxu0 %v3285
      %3320 = vmatprep.subr.bf16.mxu0 0
      %3321 = vmatpush1.bf16.msra.mxu0 %v3286
      %3322 = vmatprep.subr.bf16.mxu0 0
      %3323 = vmatpush1.bf16.msra.mxu0 %v3287
      %3324 = vmatprep.subr.bf16.mxu0 0
      %3325 = vmatpush1.bf16.msra.mxu0 %v3288
      %3326 = vmatprep.subr.bf16.mxu0 0
      %3327 = vmatpush1.bf16.msra.mxu0 %v3289
      %3328 = vmatprep.subr.bf16.mxu0 0
      %3329 = vmatpush1.bf16.msra.mxu0 %v3290
      %3330 = vmatprep.subr.bf16.mxu0 0
      %3331 = vmatpush1.bf16.msra.mxu0 %v3291
      %3332 = vmatprep.subr.bf16.mxu0 0
      %3333 = vmatpush1.bf16.msra.mxu0 %v3292
      %3334 = vmatprep.subr.bf16.mxu0 0
      %3335 = vmatpush1.bf16.msra.mxu0 %v3293
      %3336 = vmatprep.subr.bf16.mxu0 0
      %3337 = vmatpush1.bf16.msra.mxu0 %v3294
      %3338 = vmatprep.subr.bf16.mxu0 0
      %3339 = vmatpush1.bf16.msra.mxu0 %v3295
      %3340 = vmatprep.subr.bf16.mxu0 0
      %3341 = vmatpush1.bf16.msra.mxu0 %v3296
      %3342 = vmatprep.subr.bf16.mxu0 0
      %3343 = vmatpush1.bf16.msra.mxu0 %v3297
      %3344 = vmatprep.subr.bf16.mxu0 0
      %3345 = vmatpush1.bf16.msra.mxu0 %v3298
      %3346 = vmatprep.subr.bf16.mxu0 0
      %3347 = vmatpush1.bf16.msra.mxu0 %v3299
      %3348 = vmatprep.mubr.bf16.mxu0 %v3218
      %3349 = vmatmul.mubr.bf16.gmra.mrb[0].mxu0 %v3217
      %v3350 = vpop.f32.mrb[0].mxu0
      %v3351 = vadd.f32 %v3219, %v3350
      %v3352 = vpop.f32.mrb[0].mxu0
      %v3353 = vpop.f32.mrb[0].mxu0
      %v3354 = vpop.f32.mrb[0].mxu0
      %3355 = vdwg.mxu0
      %v3356 = vlaneseq
      %v3357 = vshrl.u32 %v3356, 7
      %v3358 = vsub.s32 0, %v3357
      %v3359 = vrot.slane %v3351, %v3358
      %3360 = vst [vmem:[%s543] sm:$0xff] %v3359
      %p3361 = scmp.lt.s32.totalorder %s28, 1
      %s3362 = scalar_select %p3361, %s28, 1
      %s3363 = smul.addr %s3362, 8
      %s3364 = scalar_lea.vmem %s17, %s3363
      // Predicated region
      $region89: #{wav2vec2_classifier_forward.5} parent=87 // pred_check
        %p3365 = pneg %p408
      $region90: #{wav2vec2_classifier_forward.5} parent=87 // pred_check_branch
        %3367 = sbr.rel (%p3365) target = $region92
      $region91: #{wav2vec2_classifier_forward.5} parent=87 // pred_region
        _
      $region92: #{wav2vec2_classifier_forward.5} parent=87 // pred_fallthru
        _
    $region88: #{wav2vec2_classifier_forward.5} parent=5 // pred_fallthru
      _
    %p3368 = scmp.le.s32.totalorder 2, %s23
    // Predicated region
    $region93: #{wav2vec2_classifier_forward.5} parent=5 // pred_check
      %p3369 = pneg %p3368
    $region94: #{wav2vec2_classifier_forward.5} parent=5 // pred_check_branch
      %3371 = sbr.rel (%p3369) target = $region96
    $region95: #{wav2vec2_classifier_forward.5} parent=5 // pred_region
      %s3372 = ssub.s32 %s23, 2
      // Predicated region
      $region97: #{wav2vec2_classifier_forward.5} parent=95 // pred_check
        %p3373 = pneg %p414
      $region98: #{wav2vec2_classifier_forward.5} parent=95 // pred_check_branch
        %3375 = sbr.rel (%p3373) target = $region100
      $region99: #{wav2vec2_classifier_forward.5} parent=95 // pred_region
        %p3376 = scmp.lt.s32.totalorder %s29, 1
        %s3377 = scalar_select %p3376, %s29, 1
        %s3378 = smul.addr %s3377, 8
        %s3379 = scalar_lea.vmem %s17, %s3378
      $region100: #{wav2vec2_classifier_forward.5} parent=95 // pred_fallthru
        _
    $region96: #{wav2vec2_classifier_forward.5} parent=5 // pred_fallthru
      _
  $region6: #{wav2vec2_classifier_forward.5} parent=0 // loop_footer
    %s27 = sadd.s32 1, %s23
  $region7: #{wav2vec2_classifier_forward.5} parent=0 // loop_footer_branch
    %22 = sbr.rel target = $region3
  $region8: #{wav2vec2_classifier_forward.5} parent=0 // loop_exit
    _

</llo_original>
